<compile_context>
chip_gen: v7x
topology: tpu7x:2x2x1
jax: 0.10.0
libtpu: 0.0.40
codegen_flags: <defaults>
</compile_context>

<pallas_src>
import functools

import jax
import jax.numpy as jnp
from jax.experimental import pallas as pl
from jax.experimental.pallas import tpu as pltpu

LEAKY_SLOPE = 0.2
MAX_BATCH_TILE = 8          # batch tile for the fused conv2+pool kernel
MATMUL_BLOCK_M = 512        # default row tile for the generic fused matmul


def _round_up(x, m):
    return (x + m - 1) // m * m


# ----------------------------- Pallas kernels ------------------------------ #

def _matmul_bias_act_kernel(x_ref, w_ref, b_ref, o_ref, *, slope):
    """One (TM, K) x (K, N) tile: o = act(x @ w + b); weights/bias stay VMEM-resident."""
    acc = jnp.dot(x_ref[...], w_ref[...], preferred_element_type=jnp.float32)
    acc = acc + b_ref[...]                           # (1, N) broadcasts over rows
    if slope is not None:
        acc = jnp.where(acc >= 0, acc, slope * acc)
    o_ref[...] = acc.astype(o_ref.dtype)


def _conv2_lrelu_pool_kernel(p00_ref, p01_ref, p10_ref, p11_ref, w_ref, b_ref,
                             o_ref, hp_ref, *, slope):
    """Fused 3x3/stride-2 conv (64->128) + LeakyReLU(0.2) + 2x2 max-pool.

    Inputs are the 4 parity phases of the zero-padded (18x18) activation:
      phase[a][b][n, r, s, c] = h1_pad[n, 2r + a, 2s + b, c],  shape (TB, 9, 9, 64)
    Tap (ki, kj) needs h1_pad[n, 2*oh + ki, 2*ow + kj, :], i.e. the contiguous window
      phase[ki % 2][kj % 2][:, ki//2 : ki//2 + 8, kj//2 : kj//2 + 8, :]
    so the conv is 9 small matmuls accumulated in f32 — no im2col in HBM.
    Pooling first and applying (bias + LeakyReLU) after is exact: per-channel bias add
    and the monotone LeakyReLU commute with max.
    Output: (TB, 4, 4, 128) ordered (batch, w_out, h_out, channel); the classifier weight
    rows are permuted at init to match this flatten order.
    """
    tb, _, _, cout = o_ref.shape
    cin = w_ref.shape[1]
    oh = ow = 8
    phases = ((p00_ref, p01_ref), (p10_ref, p11_ref))

    acc = jnp.zeros((tb * oh * ow, cout), jnp.float32)
    for ki in range(3):
        for kj in range(3):
            ph = phases[ki % 2][kj % 2]
            ro, co = ki // 2, kj // 2
            slab = ph[:, ro:ro + oh, co:co + ow, :]                 # (TB, 8, 8, cin)
            acc = acc + jnp.dot(slab.reshape(tb * oh * ow, cin),
                                w_ref[ki * 3 + kj],
                                preferred_element_type=jnp.float32)

    # H-direction pool pairs: pure leading-dim split, layout-free.
    a4 = acc.reshape(tb, oh // 2, 2, ow, cout)
    hp_ref[...] = jnp.maximum(a4[:, :, 0], a4[:, :, 1])            # (TB, 4, 8, cout)

    # W-direction pool pairs via cheap VMEM re-reads, then bias + LeakyReLU + store.
    bias = b_ref[...]                                               # (1, cout)
    for j in range(ow // 2):
        col = jnp.maximum(hp_ref[:, :, 2 * j, :], hp_ref[:, :, 2 * j + 1, :])
        col = col + bias                                            # (TB, 4, cout)
        col = jnp.where(col >= 0, col, slope * col)
        o_ref[:, j, :, :] = col.astype(o_ref.dtype)


# ------------------------------ Pallas wrappers ----------------------------- #

def fused_matmul(x, w, b, *, slope=None, block_m=MATMUL_BLOCK_M):
    """act((M,K) @ (K,N) + (1,N)), tiled over M, weights/bias resident in VMEM."""
    m, k = x.shape
    _, n = w.shape
    if m <= block_m:
        tm, mp = m, m
    else:
        tm = block_m                    # multiple of 8
        mp = _round_up(m, tm)
        if mp != m:
            x = jnp.pad(x, ((0, mp - m), (0, 0)))
    out = pl.pallas_call(
        functools.partial(_matmul_bias_act_kernel, slope=slope),
        out_shape=jax.ShapeDtypeStruct((mp, n), jnp.float32),
        grid=(mp // tm,),
        in_specs=[
            pl.BlockSpec((tm, k), lambda i: (i, 0)),
            pl.BlockSpec((k, n), lambda i: (0, 0)),
            pl.BlockSpec((1, n), lambda i: (0, 0)),
        ],
        out_specs=pl.BlockSpec((tm, n), lambda i: (i, 0)),
        compiler_params=pltpu.CompilerParams(dimension_semantics=("parallel",)),
    )(x, w, b)
    return out[:m] if mp != m else out


def conv2_lrelu_pool(phases, w2, b2, *, slope=LEAKY_SLOPE):
    """phases: 4 arrays (Bp, 9, 9, 64); w2: (9, 64, 128); b2: (1, 128) -> (Bp, 4, 4, 128)."""
    bp, ph_h, ph_w, cin = phases[0].shape
    cout = w2.shape[-1]
    tb = bp if bp <= MAX_BATCH_TILE else MAX_BATCH_TILE
    phase_spec = pl.BlockSpec((tb, ph_h, ph_w, cin), lambda i: (i, 0, 0, 0))
    return pl.pallas_call(
        functools.partial(_conv2_lrelu_pool_kernel, slope=slope),
        out_shape=jax.ShapeDtypeStruct((bp, 4, 4, cout), jnp.float32),
        grid=(bp // tb,),
        in_specs=[phase_spec] * 4 + [
            pl.BlockSpec((9, cin, cout), lambda i: (0, 0, 0)),
            pl.BlockSpec((1, cout), lambda i: (0, 0)),
        ],
        out_specs=pl.BlockSpec((tb, 4, 4, cout), lambda i: (i, 0, 0, 0)),
        scratch_shapes=[pltpu.VMEM((tb, 4, 8, cout), jnp.float32)],
        compiler_params=pltpu.CompilerParams(dimension_semantics=("parallel",)),
    )(*phases, w2, b2)


# ------------------------------ glue (im2col, conv1 only) ------------------- #

def _im2col_s2_p1_k3(x_nhwc):
    """3x3 / stride-2 / pad-1 patches in (kh, kw, cin) feature order (matches w1 rows)."""
    b, h, w, c = x_nhwc.shape
    oh, ow = h // 2, w // 2
    xp = jnp.pad(x_nhwc, ((0, 0), (1, 1), (1, 1), (0, 0)))
    slabs = [xp[:, ki:ki + 2 * oh:2, kj:kj + 2 * ow:2, :]
             for ki in range(3) for kj in range(3)]
    patches = jnp.concatenate(slabs, axis=-1)            # (b, oh, ow, 9*c)
    return patches.reshape(b * oh * ow, 9 * c), oh, ow


# -------------------------------- the model --------------------------------- #

def init_params(key, n_classes=10):
    k1, k2, k3, k4, k5, k6 = jax.random.split(key, 6)
    p = {}
    # conv1: torch weight (64, 3, 3, 3) -> rows ordered (kh, kw, cin)  (no runtime reorder)
    w1_t = jax.random.normal(k1, (64, 3, 3, 3), jnp.float32) * 0.1
    p["w1"] = jnp.transpose(w1_t, (2, 3, 1, 0)).reshape(27, 64)
    p["b1"] = jax.random.normal(k2, (1, 64), jnp.float32) * 0.01
    # conv2: torch weight (128, 64, 3, 3) -> (tap=kh*3+kw, cin, cout)
    w2_t = jax.random.normal(k3, (128, 64, 3, 3), jnp.float32) * 0.05
    p["w2"] = jnp.transpose(w2_t, (2, 3, 1, 0)).reshape(9, 64, 128)
    p["b2"] = jax.random.normal(k4, (1, 128), jnp.float32) * 0.01
    # classifier: torch Linear weight (n_classes, 2048); rows re-permuted to the pooled
    # activation's (w_out, h_out, channel) flatten order, output zero-padded to 128 lanes.
    wc_t = jax.random.normal(k5, (n_classes, 128 * 4 * 4), jnp.float32) * 0.02
    wc_r = wc_t.reshape(n_classes, 128, 4, 4)            # [o, c, i, j]
    wc_p = jnp.transpose(wc_r, (3, 2, 1, 0)).reshape(128 * 4 * 4, n_classes)
    p["wc"] = jnp.pad(wc_p, ((0, 0), (0, 128 - n_classes)))
    bc = jax.random.normal(k6, (1, n_classes), jnp.float32) * 0.01
    p["bc"] = jnp.pad(bc, ((0, 0), (0, 128 - n_classes)))
    return p


@functools.partial(jax.jit, static_argnames=("n_classes",))
def simple_cnn_forward(params, x_nchw, n_classes=10):
    """x_nchw: (B, 3, 32, 32) float32 -> [logits (B, n_classes)]"""
    b = x_nchw.shape[0]
    bp = b if b <= MAX_BATCH_TILE else _round_up(b, MAX_BATCH_TILE)
    x = x_nchw
    if bp != b:
        x = jnp.pad(x, ((0, bp - b), (0, 0), (0, 0), (0, 0)))
    x = jnp.transpose(x, (0, 2, 3, 1))                    # NHWC (bp, 32, 32, 3)

    # conv1 + LeakyReLU(0.2): small im2col (weight order folded at init) + tiled matmul
    patches1, oh1, ow1 = _im2col_s2_p1_k3(x)              # (bp*256, 27)
    h1 = fused_matmul(patches1, params["w1"], params["b1"], slope=LEAKY_SLOPE)
    h1 = h1.reshape(bp, oh1, ow1, 64)                     # (bp, 16, 16, 64)

    # conv2 + LeakyReLU(0.2) + MaxPool2d(2,2): one fused kernel over parity phases
    h1p = jnp.pad(h1, ((0, 0), (1, 1), (1, 1), (0, 0)))   # (bp, 18, 18, 64)
    phases = [h1p[:, a::2, c::2, :] for a in (0, 1) for c in (0, 1)]   # 4 x (bp, 9, 9, 64)
    pooled = conv2_lrelu_pool(phases, params["w2"], params["b2"])      # (bp, 4, 4, 128)

    # classifier: weights already permuted to pooled flatten order, lane-padded output
    feat = pooled.reshape(bp, 128 * 4 * 4)
    logits = fused_matmul(feat, params["wc"], params["bc"], slope=None, block_m=256)
    return [logits[:b, :n_classes]]


if __name__ == "__main__":
    key = jax.random.PRNGKey(0)
    pkey, xkey = jax.random.split(key)
    params = init_params(pkey, n_classes=10)
    # batch=2, CIFAR-like 3x32x32 input (required so feat_dim == 128*4*4)
    x = jax.random.normal(xkey, (2, 3, 32, 32), jnp.float32)

    out = simple_cnn_forward(params, x)
    jax.block_until_ready(out[0])
    assert out[0].shape == (2, 10) and out[0].dtype == jnp.float32
    print("KERNEL_OK")
</pallas_src>

<mosaic_0001>
module attributes {stable_mosaic.version = 11 : i64} {
  func.func @_matmul_bias_act_kernel(%arg0: i32, %arg1: memref<512x27xf32, #tpu.memory_space<vmem>>, %arg2: memref<27x64xf32, #tpu.memory_space<vmem>>, %arg3: memref<1x64xf32, #tpu.memory_space<vmem>>, %arg4: memref<512x64xf32, #tpu.memory_space<vmem>>) attributes {dimension_semantics = [#tpu.dimension_semantics<parallel>], iteration_bounds = array<i64: 1>, scalar_prefetch = 0 : i64, scratch_operands = 0 : i64, tpu.core_type = #tpu.core_type<tc>, window_params = [{transform_indices = @transform_0, window_bounds = array<i64: 512, 27>}, {pipeline_mode = #tpu.pipeline_mode<synchronous>, transform_indices = @transform_1, window_bounds = array<i64: 27, 64>}, {pipeline_mode = #tpu.pipeline_mode<synchronous>, transform_indices = @transform_2, window_bounds = array<i64: 1, 64>}, {transform_indices = @transform_3, window_bounds = array<i64: 512, 64>}]} {
    %c0 = arith.constant 0 : index
    %c0_0 = arith.constant 0 : index
    %0 = vector.load %arg1[%c0, %c0_0] : memref<512x27xf32, #tpu.memory_space<vmem>>, vector<512x27xf32>
    %c0_1 = arith.constant 0 : index
    %c0_2 = arith.constant 0 : index
    %1 = vector.load %arg2[%c0_1, %c0_2] : memref<27x64xf32, #tpu.memory_space<vmem>>, vector<27x64xf32>
    %cst = arith.constant dense<0.000000e+00> : vector<512x64xf32>
    %2 = tpu.matmul %0, %1, %cst {dimension_numbers = #tpu.dot_dimension_numbers<[1], [0], [0], [1], [0, 0, 1, 1], [], []>} : vector<512x27xf32>, vector<27x64xf32>, vector<512x64xf32> -> vector<512x64xf32>
    %c0_3 = arith.constant 0 : index
    %c0_4 = arith.constant 0 : index
    %3 = vector.load %arg3[%c0_3, %c0_4] : memref<1x64xf32, #tpu.memory_space<vmem>>, vector<1x64xf32>
    %4 = vector.broadcast %3 : vector<1x64xf32> to vector<512x64xf32>
    %5 = arith.addf %2, %4 : vector<512x64xf32>
    %cst_5 = arith.constant 0.000000e+00 : f32
    %6 = vector.broadcast %cst_5 : f32 to vector<512x64xf32>
    %7 = arith.cmpf oge, %5, %6 : vector<512x64xf32>
    %cst_6 = arith.constant 2.000000e-01 : f32
    %8 = vector.broadcast %cst_6 : f32 to vector<512x64xf32>
    %9 = arith.mulf %8, %5 : vector<512x64xf32>
    %10 = arith.select %7, %5, %9 : vector<512x64xi1>, vector<512x64xf32>
    %c0_7 = arith.constant 0 : index
    %c0_8 = arith.constant 0 : index
    %11 = vector.load %arg4[%c0_7, %c0_8] : memref<512x64xf32, #tpu.memory_space<vmem>>, vector<512x64xf32>
    tpu.vector_store %arg4[%c0_7, %c0_8], %10 {strides = array<i32>} : memref<512x64xf32, #tpu.memory_space<vmem>>, vector<512x64xf32>,
    return
  }
  func.func @transform_0(%arg0: i32) -> (i32, i32) {
    %c0_i32 = arith.constant 0 : i32
    %c0_i32_0 = arith.constant 0 : i32
    return %arg0, %c0_i32 : i32, i32
  }
  func.func @transform_1(%arg0: i32) -> (i32, i32) {
    %c0_i32 = arith.constant 0 : i32
    %c0_i32_0 = arith.constant 0 : i32
    %c0_i32_1 = arith.constant 0 : i32
    return %c0_i32, %c0_i32_0 : i32, i32
  }
  func.func @transform_2(%arg0: i32) -> (i32, i32) {
    %c0_i32 = arith.constant 0 : i32
    %c0_i32_0 = arith.constant 0 : i32
    %c0_i32_1 = arith.constant 0 : i32
    return %c0_i32, %c0_i32_0 : i32, i32
  }
  func.func @transform_3(%arg0: i32) -> (i32, i32) {
    %c0_i32 = arith.constant 0 : i32
    %c0_i32_0 = arith.constant 0 : i32
    return %arg0, %c0_i32 : i32, i32
  }
}

module attributes {stable_mosaic.version = 11 : i64} {
  func.func @_conv2_lrelu_pool_kernel(%arg0: i32, %arg1: memref<2x9x9x64xf32, #tpu.memory_space<vmem>>, %arg2: memref<2x9x9x64xf32, #tpu.memory_space<vmem>>, %arg3: memref<2x9x9x64xf32, #tpu.memory_space<vmem>>, %arg4: memref<2x9x9x64xf32, #tpu.memory_space<vmem>>, %arg5: memref<9x64x128xf32, #tpu.memory_space<vmem>>, %arg6: memref<1x128xf32, #tpu.memory_space<vmem>>, %arg7: memref<2x4x4x128xf32, #tpu.memory_space<vmem>>, %arg8: memref<2x4x8x128xf32, #tpu.memory_space<vmem>>) attributes {dimension_semantics = [#tpu.dimension_semantics<parallel>], iteration_bounds = array<i64: 1>, scalar_prefetch = 0 : i64, scratch_operands = 1 : i64, tpu.core_type = #tpu.core_type<tc>, window_params = [{transform_indices = @transform_0, window_bounds = array<i64: 2, 9, 9, 64>}, {transform_indices = @transform_1, window_bounds = array<i64: 2, 9, 9, 64>}, {transform_indices = @transform_2, window_bounds = array<i64: 2, 9, 9, 64>}, {transform_indices = @transform_3, window_bounds = array<i64: 2, 9, 9, 64>}, {pipeline_mode = #tpu.pipeline_mode<synchronous>, transform_indices = @transform_4, window_bounds = array<i64: 9, 64, 128>}, {pipeline_mode = #tpu.pipeline_mode<synchronous>, transform_indices = @transform_5, window_bounds = array<i64: 1, 128>}, {transform_indices = @transform_6, window_bounds = array<i64: 2, 4, 4, 128>}]} {
    %cst = arith.constant 0.000000e+00 : f32
    %0 = vector.broadcast %cst : f32 to vector<128x128xf32>
    %c0 = arith.constant 0 : index
    %c0_0 = arith.constant 0 : index
    %c0_1 = arith.constant 0 : index
    %c0_2 = arith.constant 0 : index
    %1 = vector.load %arg1[%c0, %c0_0, %c0_1, %c0_2] : memref<2x9x9x64xf32, #tpu.memory_space<vmem>>, vector<2x8x8x64xf32>
    %2 = vector.shape_cast %1 : vector<2x8x8x64xf32> to vector<128x64xf32>
    %c0_3 = arith.constant 0 : index
    %c0_4 = arith.constant 0 : index
    %c0_5 = arith.constant 0 : index
    %3 = vector.load %arg5[%c0_3, %c0_4, %c0_5] : memref<9x64x128xf32, #tpu.memory_space<vmem>>, vector<1x64x128xf32>
    %4 = vector.shape_cast %3 : vector<1x64x128xf32> to vector<64x128xf32>
    %cst_6 = arith.constant dense<0.000000e+00> : vector<128x128xf32>
    %5 = tpu.matmul %2, %4, %cst_6 {dimension_numbers = #tpu.dot_dimension_numbers<[1], [0], [0], [1], [0, 0, 1, 1], [], []>} : vector<128x64xf32>, vector<64x128xf32>, vector<128x128xf32> -> vector<128x128xf32>
    %6 = arith.addf %0, %5 : vector<128x128xf32>
    %c0_7 = arith.constant 0 : index
    %c0_8 = arith.constant 0 : index
    %c0_9 = arith.constant 0 : index
    %c0_10 = arith.constant 0 : index
    %7 = vector.load %arg2[%c0_7, %c0_8, %c0_9, %c0_10] : memref<2x9x9x64xf32, #tpu.memory_space<vmem>>, vector<2x8x8x64xf32>
    %8 = vector.shape_cast %7 : vector<2x8x8x64xf32> to vector<128x64xf32>
    %c1 = arith.constant 1 : index
    %c0_11 = arith.constant 0 : index
    %c0_12 = arith.constant 0 : index
    %9 = vector.load %arg5[%c1, %c0_11, %c0_12] : memref<9x64x128xf32, #tpu.memory_space<vmem>>, vector<1x64x128xf32>
    %10 = vector.shape_cast %9 : vector<1x64x128xf32> to vector<64x128xf32>
    %cst_13 = arith.constant dense<0.000000e+00> : vector<128x128xf32>
    %11 = tpu.matmul %8, %10, %cst_13 {dimension_numbers = #tpu.dot_dimension_numbers<[1], [0], [0], [1], [0, 0, 1, 1], [], []>} : vector<128x64xf32>, vector<64x128xf32>, vector<128x128xf32> -> vector<128x128xf32>
    %12 = arith.addf %6, %11 : vector<128x128xf32>
    %c0_14 = arith.constant 0 : index
    %c0_15 = arith.constant 0 : index
    %c1_16 = arith.constant 1 : index
    %c0_17 = arith.constant 0 : index
    %13 = vector.load %arg1[%c0_14, %c0_15, %c1_16, %c0_17] : memref<2x9x9x64xf32, #tpu.memory_space<vmem>>, vector<2x8x8x64xf32>
    %14 = vector.shape_cast %13 : vector<2x8x8x64xf32> to vector<128x64xf32>
    %c2 = arith.constant 2 : index
    %c0_18 = arith.constant 0 : index
    %c0_19 = arith.constant 0 : index
    %15 = vector.load %arg5[%c2, %c0_18, %c0_19] : memref<9x64x128xf32, #tpu.memory_space<vmem>>, vector<1x64x128xf32>
    %16 = vector.shape_cast %15 : vector<1x64x128xf32> to vector<64x128xf32>
    %cst_20 = arith.constant dense<0.000000e+00> : vector<128x128xf32>
    %17 = tpu.matmul %14, %16, %cst_20 {dimension_numbers = #tpu.dot_dimension_numbers<[1], [0], [0], [1], [0, 0, 1, 1], [], []>} : vector<128x64xf32>, vector<64x128xf32>, vector<128x128xf32> -> vector<128x128xf32>
    %18 = arith.addf %12, %17 : vector<128x128xf32>
    %c0_21 = arith.constant 0 : index
    %c0_22 = arith.constant 0 : index
    %c0_23 = arith.constant 0 : index
    %c0_24 = arith.constant 0 : index
    %19 = vector.load %arg3[%c0_21, %c0_22, %c0_23, %c0_24] : memref<2x9x9x64xf32, #tpu.memory_space<vmem>>, vector<2x8x8x64xf32>
    %20 = vector.shape_cast %19 : vector<2x8x8x64xf32> to vector<128x64xf32>
    %c3 = arith.constant 3 : index
    %c0_25 = arith.constant 0 : index
    %c0_26 = arith.constant 0 : index
    %21 = vector.load %arg5[%c3, %c0_25, %c0_26] : memref<9x64x128xf32, #tpu.memory_space<vmem>>, vector<1x64x128xf32>
    %22 = vector.shape_cast %21 : vector<1x64x128xf32> to vector<64x128xf32>
    %cst_27 = arith.constant dense<0.000000e+00> : vector<128x128xf32>
    %23 = tpu.matmul %20, %22, %cst_27 {dimension_numbers = #tpu.dot_dimension_numbers<[1], [0], [0], [1], [0, 0, 1, 1], [], []>} : vector<128x64xf32>, vector<64x128xf32>, vector<128x128xf32> -> vector<128x128xf32>
    %24 = arith.addf %18, %23 : vector<128x128xf32>
    %c0_28 = arith.constant 0 : index
    %c0_29 = arith.constant 0 : index
    %c0_30 = arith.constant 0 : index
    %c0_31 = arith.constant 0 : index
    %25 = vector.load %arg4[%c0_28, %c0_29, %c0_30, %c0_31] : memref<2x9x9x64xf32, #tpu.memory_space<vmem>>, vector<2x8x8x64xf32>
    %26 = vector.shape_cast %25 : vector<2x8x8x64xf32> to vector<128x64xf32>
    %c4 = arith.constant 4 : index
    %c0_32 = arith.constant 0 : index
    %c0_33 = arith.constant 0 : index
    %27 = vector.load %arg5[%c4, %c0_32, %c0_33] : memref<9x64x128xf32, #tpu.memory_space<vmem>>, vector<1x64x128xf32>
    %28 = vector.shape_cast %27 : vector<1x64x128xf32> to vector<64x128xf32>
    %cst_34 = arith.constant dense<0.000000e+00> : vector<128x128xf32>
    %29 = tpu.matmul %26, %28, %cst_34 {dimension_numbers = #tpu.dot_dimension_numbers<[1], [0], [0], [1], [0, 0, 1, 1], [], []>} : vector<128x64xf32>, vector<64x128xf32>, vector<128x128xf32> -> vector<128x128xf32>
    %30 = arith.addf %24, %29 : vector<128x128xf32>
    %c0_35 = arith.constant 0 : index
    %c0_36 = arith.constant 0 : index
    %c1_37 = arith.constant 1 : index
    %c0_38 = arith.constant 0 : index
    %31 = vector.load %arg3[%c0_35, %c0_36, %c1_37, %c0_38] : memref<2x9x9x64xf32, #tpu.memory_space<vmem>>, vector<2x8x8x64xf32>
    %32 = vector.shape_cast %31 : vector<2x8x8x64xf32> to vector<128x64xf32>
    %c5 = arith.constant 5 : index
    %c0_39 = arith.constant 0 : index
    %c0_40 = arith.constant 0 : index
    %33 = vector.load %arg5[%c5, %c0_39, %c0_40] : memref<9x64x128xf32, #tpu.memory_space<vmem>>, vector<1x64x128xf32>
    %34 = vector.shape_cast %33 : vector<1x64x128xf32> to vector<64x128xf32>
    %cst_41 = arith.constant dense<0.000000e+00> : vector<128x128xf32>
    %35 = tpu.matmul %32, %34, %cst_41 {dimension_numbers = #tpu.dot_dimension_numbers<[1], [0], [0], [1], [0, 0, 1, 1], [], []>} : vector<128x64xf32>, vector<64x128xf32>, vector<128x128xf32> -> vector<128x128xf32>
    %36 = arith.addf %30, %35 : vector<128x128xf32>
    %c0_42 = arith.constant 0 : index
    %c1_43 = arith.constant 1 : index
    %c0_44 = arith.constant 0 : index
    %c0_45 = arith.constant 0 : index
    %37 = vector.load %arg1[%c0_42, %c1_43, %c0_44, %c0_45] : memref<2x9x9x64xf32, #tpu.memory_space<vmem>>, vector<2x8x8x64xf32>
    %38 = vector.shape_cast %37 : vector<2x8x8x64xf32> to vector<128x64xf32>
    %c6 = arith.constant 6 : index
    %c0_46 = arith.constant 0 : index
    %c0_47 = arith.constant 0 : index
    %39 = vector.load %arg5[%c6, %c0_46, %c0_47] : memref<9x64x128xf32, #tpu.memory_space<vmem>>, vector<1x64x128xf32>
    %40 = vector.shape_cast %39 : vector<1x64x128xf32> to vector<64x128xf32>
    %cst_48 = arith.constant dense<0.000000e+00> : vector<128x128xf32>
    %41 = tpu.matmul %38, %40, %cst_48 {dimension_numbers = #tpu.dot_dimension_numbers<[1], [0], [0], [1], [0, 0, 1, 1], [], []>} : vector<128x64xf32>, vector<64x128xf32>, vector<128x128xf32> -> vector<128x128xf32>
    %42 = arith.addf %36, %41 : vector<128x128xf32>
    %c0_49 = arith.constant 0 : index
    %c1_50 = arith.constant 1 : index
    %c0_51 = arith.constant 0 : index
    %c0_52 = arith.constant 0 : index
    %43 = vector.load %arg2[%c0_49, %c1_50, %c0_51, %c0_52] : memref<2x9x9x64xf32, #tpu.memory_space<vmem>>, vector<2x8x8x64xf32>
    %44 = vector.shape_cast %43 : vector<2x8x8x64xf32> to vector<128x64xf32>
    %c7 = arith.constant 7 : index
    %c0_53 = arith.constant 0 : index
    %c0_54 = arith.constant 0 : index
    %45 = vector.load %arg5[%c7, %c0_53, %c0_54] : memref<9x64x128xf32, #tpu.memory_space<vmem>>, vector<1x64x128xf32>
    %46 = vector.shape_cast %45 : vector<1x64x128xf32> to vector<64x128xf32>
    %cst_55 = arith.constant dense<0.000000e+00> : vector<128x128xf32>
    %47 = tpu.matmul %44, %46, %cst_55 {dimension_numbers = #tpu.dot_dimension_numbers<[1], [0], [0], [1], [0, 0, 1, 1], [], []>} : vector<128x64xf32>, vector<64x128xf32>, vector<128x128xf32> -> vector<128x128xf32>
    %48 = arith.addf %42, %47 : vector<128x128xf32>
    %c0_56 = arith.constant 0 : index
    %c1_57 = arith.constant 1 : index
    %c1_58 = arith.constant 1 : index
    %c0_59 = arith.constant 0 : index
    %49 = vector.load %arg1[%c0_56, %c1_57, %c1_58, %c0_59] : memref<2x9x9x64xf32, #tpu.memory_space<vmem>>, vector<2x8x8x64xf32>
    %50 = vector.shape_cast %49 : vector<2x8x8x64xf32> to vector<128x64xf32>
    %c8 = arith.constant 8 : index
    %c0_60 = arith.constant 0 : index
    %c0_61 = arith.constant 0 : index
    %51 = vector.load %arg5[%c8, %c0_60, %c0_61] : memref<9x64x128xf32, #tpu.memory_space<vmem>>, vector<1x64x128xf32>
    %52 = vector.shape_cast %51 : vector<1x64x128xf32> to vector<64x128xf32>
    %cst_62 = arith.constant dense<0.000000e+00> : vector<128x128xf32>
    %53 = tpu.matmul %50, %52, %cst_62 {dimension_numbers = #tpu.dot_dimension_numbers<[1], [0], [0], [1], [0, 0, 1, 1], [], []>} : vector<128x64xf32>, vector<64x128xf32>, vector<128x128xf32> -> vector<128x128xf32>
    %54 = arith.addf %48, %53 : vector<128x128xf32>
    %55 = vector.shape_cast %54 : vector<128x128xf32> to vector<2x4x2x8x128xf32>
    %56 = vector.extract_strided_slice %55 {offsets = [0, 0, 0, 0, 0], sizes = [2, 4, 1, 8, 128], strides = [1, 1, 1, 1, 1]} : vector<2x4x2x8x128xf32> to vector<2x4x1x8x128xf32>
    %57 = vector.shape_cast %56 : vector<2x4x1x8x128xf32> to vector<2x4x8x128xf32>
    %58 = vector.extract_strided_slice %55 {offsets = [0, 0, 1, 0, 0], sizes = [2, 4, 1, 8, 128], strides = [1, 1, 1, 1, 1]} : vector<2x4x2x8x128xf32> to vector<2x4x1x8x128xf32>
    %59 = vector.shape_cast %58 : vector<2x4x1x8x128xf32> to vector<2x4x8x128xf32>
    %60 = arith.maximumf %57, %59 : vector<2x4x8x128xf32>
    %c0_63 = arith.constant 0 : index
    %c0_64 = arith.constant 0 : index
    %c0_65 = arith.constant 0 : index
    %c0_66 = arith.constant 0 : index
    %61 = vector.load %arg8[%c0_63, %c0_64, %c0_65, %c0_66] : memref<2x4x8x128xf32, #tpu.memory_space<vmem>>, vector<2x4x8x128xf32>
    tpu.vector_store %arg8[%c0_63, %c0_64, %c0_65, %c0_66], %60 {strides = array<i32>} : memref<2x4x8x128xf32, #tpu.memory_space<vmem>>, vector<2x4x8x128xf32>,
    %c0_67 = arith.constant 0 : index
    %c0_68 = arith.constant 0 : index
    %62 = vector.load %arg6[%c0_67, %c0_68] : memref<1x128xf32, #tpu.memory_space<vmem>>, vector<1x128xf32>
    %c0_69 = arith.constant 0 : index
    %c0_70 = arith.constant 0 : index
    %c0_71 = arith.constant 0 : index
    %c0_72 = arith.constant 0 : index
    %63 = vector.load %arg8[%c0_69, %c0_70, %c0_71, %c0_72] : memref<2x4x8x128xf32, #tpu.memory_space<vmem>>, vector<2x4x1x128xf32>
    %64 = vector.shape_cast %63 : vector<2x4x1x128xf32> to vector<2x4x128xf32>
    %c0_73 = arith.constant 0 : index
    %c0_74 = arith.constant 0 : index
    %c1_75 = arith.constant 1 : index
    %c0_76 = arith.constant 0 : index
    %65 = vector.load %arg8[%c0_73, %c0_74, %c1_75, %c0_76] : memref<2x4x8x128xf32, #tpu.memory_space<vmem>>, vector<2x4x1x128xf32>
    %66 = vector.shape_cast %65 : vector<2x4x1x128xf32> to vector<2x4x128xf32>
    %67 = arith.maximumf %64, %66 : vector<2x4x128xf32>
    %68 = vector.shape_cast %62 : vector<1x128xf32> to vector<1x1x128xf32>
    %69 = vector.broadcast %68 : vector<1x1x128xf32> to vector<2x4x128xf32>
    %70 = arith.addf %67, %69 : vector<2x4x128xf32>
    %cst_77 = arith.constant 0.000000e+00 : f32
    %71 = vector.broadcast %cst_77 : f32 to vector<2x4x128xf32>
    %72 = arith.cmpf oge, %70, %71 : vector<2x4x128xf32>
    %cst_78 = arith.constant 2.000000e-01 : f32
    %73 = vector.broadcast %cst_78 : f32 to vector<2x4x128xf32>
    %74 = arith.mulf %73, %70 : vector<2x4x128xf32>
    %75 = arith.select %72, %70, %74 : vector<2x4x128xi1>, vector<2x4x128xf32>
    %c0_79 = arith.constant 0 : index
    %c0_80 = arith.constant 0 : index
    %c0_81 = arith.constant 0 : index
    %c0_82 = arith.constant 0 : index
    %76 = vector.load %arg7[%c0_79, %c0_80, %c0_81, %c0_82] : memref<2x4x4x128xf32, #tpu.memory_space<vmem>>, vector<2x1x4x128xf32>
    %77 = vector.shape_cast %76 : vector<2x1x4x128xf32> to vector<2x4x128xf32>
    %78 = vector.shape_cast %75 : vector<2x4x128xf32> to vector<2x1x4x128xf32>
    tpu.vector_store %arg7[%c0_79, %c0_80, %c0_81, %c0_82], %78 {strides = array<i32>} : memref<2x4x4x128xf32, #tpu.memory_space<vmem>>, vector<2x1x4x128xf32>,
    %c0_83 = arith.constant 0 : index
    %c0_84 = arith.constant 0 : index
    %c2_85 = arith.constant 2 : index
    %c0_86 = arith.constant 0 : index
    %79 = vector.load %arg8[%c0_83, %c0_84, %c2_85, %c0_86] : memref<2x4x8x128xf32, #tpu.memory_space<vmem>>, vector<2x4x1x128xf32>
    %80 = vector.shape_cast %79 : vector<2x4x1x128xf32> to vector<2x4x128xf32>
    %c0_87 = arith.constant 0 : index
    %c0_88 = arith.constant 0 : index
    %c3_89 = arith.constant 3 : index
    %c0_90 = arith.constant 0 : index
    %81 = vector.load %arg8[%c0_87, %c0_88, %c3_89, %c0_90] : memref<2x4x8x128xf32, #tpu.memory_space<vmem>>, vector<2x4x1x128xf32>
    %82 = vector.shape_cast %81 : vector<2x4x1x128xf32> to vector<2x4x128xf32>
    %83 = arith.maximumf %80, %82 : vector<2x4x128xf32>
    %84 = vector.shape_cast %62 : vector<1x128xf32> to vector<1x1x128xf32>
    %85 = vector.broadcast %84 : vector<1x1x128xf32> to vector<2x4x128xf32>
    %86 = arith.addf %83, %85 : vector<2x4x128xf32>
    %cst_91 = arith.constant 0.000000e+00 : f32
    %87 = vector.broadcast %cst_91 : f32 to vector<2x4x128xf32>
    %88 = arith.cmpf oge, %86, %87 : vector<2x4x128xf32>
    %cst_92 = arith.constant 2.000000e-01 : f32
    %89 = vector.broadcast %cst_92 : f32 to vector<2x4x128xf32>
    %90 = arith.mulf %89, %86 : vector<2x4x128xf32>
    %91 = arith.select %88, %86, %90 : vector<2x4x128xi1>, vector<2x4x128xf32>
    %c0_93 = arith.constant 0 : index
    %c1_94 = arith.constant 1 : index
    %c0_95 = arith.constant 0 : index
    %c0_96 = arith.constant 0 : index
    %92 = vector.load %arg7[%c0_93, %c1_94, %c0_95, %c0_96] : memref<2x4x4x128xf32, #tpu.memory_space<vmem>>, vector<2x1x4x128xf32>
    %93 = vector.shape_cast %92 : vector<2x1x4x128xf32> to vector<2x4x128xf32>
    %94 = vector.shape_cast %91 : vector<2x4x128xf32> to vector<2x1x4x128xf32>
    tpu.vector_store %arg7[%c0_93, %c1_94, %c0_95, %c0_96], %94 {strides = array<i32>} : memref<2x4x4x128xf32, #tpu.memory_space<vmem>>, vector<2x1x4x128xf32>,
    %c0_97 = arith.constant 0 : index
    %c0_98 = arith.constant 0 : index
    %c4_99 = arith.constant 4 : index
    %c0_100 = arith.constant 0 : index
    %95 = vector.load %arg8[%c0_97, %c0_98, %c4_99, %c0_100] : memref<2x4x8x128xf32, #tpu.memory_space<vmem>>, vector<2x4x1x128xf32>
    %96 = vector.shape_cast %95 : vector<2x4x1x128xf32> to vector<2x4x128xf32>
    %c0_101 = arith.constant 0 : index
    %c0_102 = arith.constant 0 : index
    %c5_103 = arith.constant 5 : index
    %c0_104 = arith.constant 0 : index
    %97 = vector.load %arg8[%c0_101, %c0_102, %c5_103, %c0_104] : memref<2x4x8x128xf32, #tpu.memory_space<vmem>>, vector<2x4x1x128xf32>
    %98 = vector.shape_cast %97 : vector<2x4x1x128xf32> to vector<2x4x128xf32>
    %99 = arith.maximumf %96, %98 : vector<2x4x128xf32>
    %100 = vector.shape_cast %62 : vector<1x128xf32> to vector<1x1x128xf32>
    %101 = vector.broadcast %100 : vector<1x1x128xf32> to vector<2x4x128xf32>
    %102 = arith.addf %99, %101 : vector<2x4x128xf32>
    %cst_105 = arith.constant 0.000000e+00 : f32
    %103 = vector.broadcast %cst_105 : f32 to vector<2x4x128xf32>
    %104 = arith.cmpf oge, %102, %103 : vector<2x4x128xf32>
    %cst_106 = arith.constant 2.000000e-01 : f32
    %105 = vector.broadcast %cst_106 : f32 to vector<2x4x128xf32>
    %106 = arith.mulf %105, %102 : vector<2x4x128xf32>
    %107 = arith.select %104, %102, %106 : vector<2x4x128xi1>, vector<2x4x128xf32>
    %c0_107 = arith.constant 0 : index
    %c2_108 = arith.constant 2 : index
    %c0_109 = arith.constant 0 : index
    %c0_110 = arith.constant 0 : index
    %108 = vector.load %arg7[%c0_107, %c2_108, %c0_109, %c0_110] : memref<2x4x4x128xf32, #tpu.memory_space<vmem>>, vector<2x1x4x128xf32>
    %109 = vector.shape_cast %108 : vector<2x1x4x128xf32> to vector<2x4x128xf32>
    %110 = vector.shape_cast %107 : vector<2x4x128xf32> to vector<2x1x4x128xf32>
    tpu.vector_store %arg7[%c0_107, %c2_108, %c0_109, %c0_110], %110 {strides = array<i32>} : memref<2x4x4x128xf32, #tpu.memory_space<vmem>>, vector<2x1x4x128xf32>,
    %c0_111 = arith.constant 0 : index
    %c0_112 = arith.constant 0 : index
    %c6_113 = arith.constant 6 : index
    %c0_114 = arith.constant 0 : index
    %111 = vector.load %arg8[%c0_111, %c0_112, %c6_113, %c0_114] : memref<2x4x8x128xf32, #tpu.memory_space<vmem>>, vector<2x4x1x128xf32>
    %112 = vector.shape_cast %111 : vector<2x4x1x128xf32> to vector<2x4x128xf32>
    %c0_115 = arith.constant 0 : index
    %c0_116 = arith.constant 0 : index
    %c7_117 = arith.constant 7 : index
    %c0_118 = arith.constant 0 : index
    %113 = vector.load %arg8[%c0_115, %c0_116, %c7_117, %c0_118] : memref<2x4x8x128xf32, #tpu.memory_space<vmem>>, vector<2x4x1x128xf32>
    %114 = vector.shape_cast %113 : vector<2x4x1x128xf32> to vector<2x4x128xf32>
    %115 = arith.maximumf %112, %114 : vector<2x4x128xf32>
    %116 = vector.shape_cast %62 : vector<1x128xf32> to vector<1x1x128xf32>
    %117 = vector.broadcast %116 : vector<1x1x128xf32> to vector<2x4x128xf32>
    %118 = arith.addf %115, %117 : vector<2x4x128xf32>
    %cst_119 = arith.constant 0.000000e+00 : f32
    %119 = vector.broadcast %cst_119 : f32 to vector<2x4x128xf32>
    %120 = arith.cmpf oge, %118, %119 : vector<2x4x128xf32>
    %cst_120 = arith.constant 2.000000e-01 : f32
    %121 = vector.broadcast %cst_120 : f32 to vector<2x4x128xf32>
    %122 = arith.mulf %121, %118 : vector<2x4x128xf32>
    %123 = arith.select %120, %118, %122 : vector<2x4x128xi1>, vector<2x4x128xf32>
    %c0_121 = arith.constant 0 : index
    %c3_122 = arith.constant 3 : index
    %c0_123 = arith.constant 0 : index
    %c0_124 = arith.constant 0 : index
    %124 = vector.load %arg7[%c0_121, %c3_122, %c0_123, %c0_124] : memref<2x4x4x128xf32, #tpu.memory_space<vmem>>, vector<2x1x4x128xf32>
    %125 = vector.shape_cast %124 : vector<2x1x4x128xf32> to vector<2x4x128xf32>
    %126 = vector.shape_cast %123 : vector<2x4x128xf32> to vector<2x1x4x128xf32>
    tpu.vector_store %arg7[%c0_121, %c3_122, %c0_123, %c0_124], %126 {strides = array<i32>} : memref<2x4x4x128xf32, #tpu.memory_space<vmem>>, vector<2x1x4x128xf32>,
    return
  }
  func.func @transform_0(%arg0: i32) -> (i32, i32, i32, i32) {
    %c0_i32 = arith.constant 0 : i32
    %c0_i32_0 = arith.constant 0 : i32
    %c0_i32_1 = arith.constant 0 : i32
    %c0_i32_2 = arith.constant 0 : i32
    return %arg0, %c0_i32, %c0_i32_0, %c0_i32_1 : i32, i32, i32, i32
  }
  func.func @transform_1(%arg0: i32) -> (i32, i32, i32, i32) {
    %c0_i32 = arith.constant 0 : i32
    %c0_i32_0 = arith.constant 0 : i32
    %c0_i32_1 = arith.constant 0 : i32
    %c0_i32_2 = arith.constant 0 : i32
    return %arg0, %c0_i32, %c0_i32_0, %c0_i32_1 : i32, i32, i32, i32
  }
  func.func @transform_2(%arg0: i32) -> (i32, i32, i32, i32) {
    %c0_i32 = arith.constant 0 : i32
    %c0_i32_0 = arith.constant 0 : i32
    %c0_i32_1 = arith.constant 0 : i32
    %c0_i32_2 = arith.constant 0 : i32
    return %arg0, %c0_i32, %c0_i32_0, %c0_i32_1 : i32, i32, i32, i32
  }
  func.func @transform_3(%arg0: i32) -> (i32, i32, i32, i32) {
    %c0_i32 = arith.constant 0 : i32
    %c0_i32_0 = arith.constant 0 : i32
    %c0_i32_1 = arith.constant 0 : i32
    %c0_i32_2 = arith.constant 0 : i32
    return %arg0, %c0_i32, %c0_i32_0, %c0_i32_1 : i32, i32, i32, i32
  }
  func.func @transform_4(%arg0: i32) -> (i32, i32, i32) {
    %c0_i32 = arith.constant 0 : i32
    %c0_i32_0 = arith.constant 0 : i32
    %c0_i32_1 = arith.constant 0 : i32
    %c0_i32_2 = arith.constant 0 : i32
    return %c0_i32, %c0_i32_0, %c0_i32_1 : i32, i32, i32
  }
  func.func @transform_5(%arg0: i32) -> (i32, i32) {
    %c0_i32 = arith.constant 0 : i32
    %c0_i32_0 = arith.constant 0 : i32
    %c0_i32_1 = arith.constant 0 : i32
    return %c0_i32, %c0_i32_0 : i32, i32
  }
  func.func @transform_6(%arg0: i32) -> (i32, i32, i32, i32) {
    %c0_i32 = arith.constant 0 : i32
    %c0_i32_0 = arith.constant 0 : i32
    %c0_i32_1 = arith.constant 0 : i32
    %c0_i32_2 = arith.constant 0 : i32
    return %arg0, %c0_i32, %c0_i32_0, %c0_i32_1 : i32, i32, i32, i32
  }
}

module attributes {stable_mosaic.version = 11 : i64} {
  func.func @_matmul_bias_act_kernel(%arg0: i32, %arg1: memref<2x2048xf32, #tpu.memory_space<vmem>>, %arg2: memref<2048x128xf32, #tpu.memory_space<vmem>>, %arg3: memref<1x128xf32, #tpu.memory_space<vmem>>, %arg4: memref<2x128xf32, #tpu.memory_space<vmem>>) attributes {dimension_semantics = [#tpu.dimension_semantics<parallel>], iteration_bounds = array<i64: 1>, scalar_prefetch = 0 : i64, scratch_operands = 0 : i64, tpu.core_type = #tpu.core_type<tc>, window_params = [{transform_indices = @transform_0, window_bounds = array<i64: 2, 2048>}, {pipeline_mode = #tpu.pipeline_mode<synchronous>, transform_indices = @transform_1, window_bounds = array<i64: 2048, 128>}, {pipeline_mode = #tpu.pipeline_mode<synchronous>, transform_indices = @transform_2, window_bounds = array<i64: 1, 128>}, {transform_indices = @transform_3, window_bounds = array<i64: 2, 128>}]} {
    %c0 = arith.constant 0 : index
    %c0_0 = arith.constant 0 : index
    %0 = vector.load %arg1[%c0, %c0_0] : memref<2x2048xf32, #tpu.memory_space<vmem>>, vector<2x2048xf32>
    %c0_1 = arith.constant 0 : index
    %c0_2 = arith.constant 0 : index
    %1 = vector.load %arg2[%c0_1, %c0_2] : memref<2048x128xf32, #tpu.memory_space<vmem>>, vector<2048x128xf32>
    %cst = arith.constant dense<0.000000e+00> : vector<2x128xf32>
    %2 = tpu.matmul %0, %1, %cst {dimension_numbers = #tpu.dot_dimension_numbers<[1], [0], [0], [1], [0, 0, 1, 1], [], []>} : vector<2x2048xf32>, vector<2048x128xf32>, vector<2x128xf32> -> vector<2x128xf32>
    %c0_3 = arith.constant 0 : index
    %c0_4 = arith.constant 0 : index
    %3 = vector.load %arg3[%c0_3, %c0_4] : memref<1x128xf32, #tpu.memory_space<vmem>>, vector<1x128xf32>
    %4 = vector.broadcast %3 : vector<1x128xf32> to vector<2x128xf32>
    %5 = arith.addf %2, %4 : vector<2x128xf32>
    %c0_5 = arith.constant 0 : index
    %c0_6 = arith.constant 0 : index
    %6 = vector.load %arg4[%c0_5, %c0_6] : memref<2x128xf32, #tpu.memory_space<vmem>>, vector<2x128xf32>
    tpu.vector_store %arg4[%c0_5, %c0_6], %5 {strides = array<i32>} : memref<2x128xf32, #tpu.memory_space<vmem>>, vector<2x128xf32>,
    return
  }
  func.func @transform_0(%arg0: i32) -> (i32, i32) {
    %c0_i32 = arith.constant 0 : i32
    %c0_i32_0 = arith.constant 0 : i32
    return %arg0, %c0_i32 : i32, i32
  }
  func.func @transform_1(%arg0: i32) -> (i32, i32) {
    %c0_i32 = arith.constant 0 : i32
    %c0_i32_0 = arith.constant 0 : i32
    %c0_i32_1 = arith.constant 0 : i32
    return %c0_i32, %c0_i32_0 : i32, i32
  }
  func.func @transform_2(%arg0: i32) -> (i32, i32) {
    %c0_i32 = arith.constant 0 : i32
    %c0_i32_0 = arith.constant 0 : i32
    %c0_i32_1 = arith.constant 0 : i32
    return %c0_i32, %c0_i32_0 : i32, i32
  }
  func.func @transform_3(%arg0: i32) -> (i32, i32) {
    %c0_i32 = arith.constant 0 : i32
    %c0_i32_0 = arith.constant 0 : i32
    return %arg0, %c0_i32 : i32, i32
  }
}

</mosaic_0001>

<llo_original>
// kernel: simple_cnn_forward.3
$region0: #{simple_cnn_forward.3}
  #allocation0 [shape = 'u32[]', space=smem, size = 0x4, offset = 0x4, fixed_abs, tag = 'smem constant byte address 0x4 - core index']
  #allocation1 [shape = 'u32[144,128]{1,0:T(1,128)}', space=vmem, size = 0x12000, scoped, tag = 'internal scratch']
  %s0 = inlined_call_operand.vmem [shape: f32[512,27], index: 0, kind: input, shape index: {}]
  %s1 = inlined_call_operand.vmem [shape: f32[27,64], index: 1, kind: input, shape index: {}]
  %s2 = inlined_call_operand.vmem [shape: f32[1,64], index: 2, kind: input, shape index: {}]
  %s3 = inlined_call_operand.vmem [shape: f32[512,64], index: 3, kind: output, shape index: {}]
  %s4 = sld [smem:[#allocation0]]
  $region22: #{simple_cnn_forward.3} parent=0
    _
  %s6 = ssub.s32 1, %s4
  %s7 = scalar_select 0, %s6, %s4
  // Predicated region
  $region2: #{simple_cnn_forward.3} parent=0 // pred_check
    _
  $region3: #{simple_cnn_forward.3} parent=0 // pred_check_branch
    %9 = sbr.rel (0) target = $region5
  $region4: #{simple_cnn_forward.3} parent=0 // pred_region
    _
  $region5: #{simple_cnn_forward.3} parent=0 // pred_fallthru
    _
  // Predicated region
  $region6: #{simple_cnn_forward.3} parent=0 // pred_check
    _
  $region7: #{simple_cnn_forward.3} parent=0 // pred_check_branch
    %11 = sbr.rel (0) target = $region9
  $region8: #{simple_cnn_forward.3} parent=0 // pred_region
    _
  $region9: #{simple_cnn_forward.3} parent=0 // pred_fallthru
    _
  // Predicated region
  $region10: #{simple_cnn_forward.3} parent=0 // pred_check
    _
  $region11: #{simple_cnn_forward.3} parent=0 // pred_check_branch
    %13 = sbr.rel (0) target = $region13
  $region12: #{simple_cnn_forward.3} parent=0 // pred_region
    _
  $region13: #{simple_cnn_forward.3} parent=0 // pred_fallthru
    _
  %v14 = vld [vmem:[%s0] sm:$0xff]
  %v15 = vld [vmem:[%s0 + $0x8] sm:$0xff]
  %v16 = vld [vmem:[%s0 + $0x10] sm:$0xff]
  %v17 = vld [vmem:[%s0 + $0x18] sm:$0xff]
  %v18 = vld [vmem:[%s0 + $0x20] sm:$0xff]
  %v19 = vld [vmem:[%s0 + $0x28] sm:$0xff]
  %v20 = vld [vmem:[%s0 + $0x30] sm:$0xff]
  %v21 = vld [vmem:[%s0 + $0x38] sm:$0xff]
  %v22 = vld [vmem:[%s0 + $0x40] sm:$0xff]
  %v23 = vld [vmem:[%s0 + $0x48] sm:$0xff]
  %v24 = vld [vmem:[%s0 + $0x50] sm:$0xff]
  %v25 = vld [vmem:[%s0 + $0x58] sm:$0xff]
  %v26 = vld [vmem:[%s0 + $0x60] sm:$0xff]
  %v27 = vld [vmem:[%s0 + $0x68] sm:$0xff]
  %v28 = vld [vmem:[%s0 + $0x70] sm:$0xff]
  %v29 = vld [vmem:[%s0 + $0x78] sm:$0xff]
  %v30 = vld [vmem:[%s0 + $0x80] sm:$0xff]
  %v31 = vld [vmem:[%s0 + $0x88] sm:$0xff]
  %v32 = vld [vmem:[%s0 + $0x90] sm:$0xff]
  %v33 = vld [vmem:[%s0 + $0x98] sm:$0xff]
  %v34 = vld [vmem:[%s0 + $0xa0] sm:$0xff]
  %v35 = vld [vmem:[%s0 + $0xa8] sm:$0xff]
  %v36 = vld [vmem:[%s0 + $0xb0] sm:$0xff]
  %v37 = vld [vmem:[%s0 + $0xb8] sm:$0xff]
  %v38 = vld [vmem:[%s0 + $0xc0] sm:$0xff]
  %v39 = vld [vmem:[%s0 + $0xc8] sm:$0xff]
  %v40 = vld [vmem:[%s0 + $0xd0] sm:$0xff]
  %v41 = vld [vmem:[%s0 + $0xd8] sm:$0xff]
  %v42 = vld [vmem:[%s0 + $0xe0] sm:$0xff]
  %v43 = vld [vmem:[%s0 + $0xe8] sm:$0xff]
  %v44 = vld [vmem:[%s0 + $0xf0] sm:$0xff]
  %v45 = vld [vmem:[%s0 + $0xf8] sm:$0xff]
  %v46 = vld [vmem:[%s0 + $0x100] sm:$0xff]
  %v47 = vld [vmem:[%s0 + $0x108] sm:$0xff]
  %v48 = vld [vmem:[%s0 + $0x110] sm:$0xff]
  %v49 = vld [vmem:[%s0 + $0x118] sm:$0xff]
  %v50 = vld [vmem:[%s0 + $0x120] sm:$0xff]
  %v51 = vld [vmem:[%s0 + $0x128] sm:$0xff]
  %v52 = vld [vmem:[%s0 + $0x130] sm:$0xff]
  %v53 = vld [vmem:[%s0 + $0x138] sm:$0xff]
  %v54 = vld [vmem:[%s0 + $0x140] sm:$0xff]
  %v55 = vld [vmem:[%s0 + $0x148] sm:$0xff]
  %v56 = vld [vmem:[%s0 + $0x150] sm:$0xff]
  %v57 = vld [vmem:[%s0 + $0x158] sm:$0xff]
  %v58 = vld [vmem:[%s0 + $0x160] sm:$0xff]
  %v59 = vld [vmem:[%s0 + $0x168] sm:$0xff]
  %v60 = vld [vmem:[%s0 + $0x170] sm:$0xff]
  %v61 = vld [vmem:[%s0 + $0x178] sm:$0xff]
  %v62 = vld [vmem:[%s0 + $0x180] sm:$0xff]
  %v63 = vld [vmem:[%s0 + $0x188] sm:$0xff]
  %v64 = vld [vmem:[%s0 + $0x190] sm:$0xff]
  %v65 = vld [vmem:[%s0 + $0x198] sm:$0xff]
  %v66 = vld [vmem:[%s0 + $0x1a0] sm:$0xff]
  %v67 = vld [vmem:[%s0 + $0x1a8] sm:$0xff]
  %v68 = vld [vmem:[%s0 + $0x1b0] sm:$0xff]
  %v69 = vld [vmem:[%s0 + $0x1b8] sm:$0xff]
  %v70 = vld [vmem:[%s0 + $0x1c0] sm:$0xff]
  %v71 = vld [vmem:[%s0 + $0x1c8] sm:$0xff]
  %v72 = vld [vmem:[%s0 + $0x1d0] sm:$0xff]
  %v73 = vld [vmem:[%s0 + $0x1d8] sm:$0xff]
  %v74 = vld [vmem:[%s0 + $0x1e0] sm:$0xff]
  %v75 = vld [vmem:[%s0 + $0x1e8] sm:$0xff]
  %v76 = vld [vmem:[%s0 + $0x1f0] sm:$0xff]
  %v77 = vld [vmem:[%s0 + $0x1f8] sm:$0xff]
  %v78 = vld [vmem:[%s1] sm:$0xff]
  %v79 = vld [vmem:[%s1 + $0x8] sm:$0xff]
  %v80 = vld [vmem:[%s1 + $0x10] sm:$0xff]
  %v81 = vld [vmem:[%s1 + $0x18] sm:$0x7]
  %v82 = vld [vmem:[%s2] sm:$0x1]
  %v84 = vlaneseq
  %v85 = vshrl.u32 %v84, 7
  %v86 = vsub.s32 0, %v85
  %v87 = vrot.slane %v82, %v86
  %vm89 = vcmask 220160
  %v91 = vsel %vm89, %v14, 0
  %v94 = vsel %vm89, %v15, 0
  %v97 = vsel %vm89, %v16, 0
  %v100 = vsel %vm89, %v17, 0
  %v103 = vsel %vm89, %v18, 0
  %v106 = vsel %vm89, %v19, 0
  %v109 = vsel %vm89, %v20, 0
  %v112 = vsel %vm89, %v21, 0
  %v115 = vsel %vm89, %v22, 0
  %v118 = vsel %vm89, %v23, 0
  %v121 = vsel %vm89, %v24, 0
  %v124 = vsel %vm89, %v25, 0
  %v127 = vsel %vm89, %v26, 0
  %v130 = vsel %vm89, %v27, 0
  %v133 = vsel %vm89, %v28, 0
  %v136 = vsel %vm89, %v29, 0
  %v139 = vsel %vm89, %v30, 0
  %v142 = vsel %vm89, %v31, 0
  %v145 = vsel %vm89, %v32, 0
  %v148 = vsel %vm89, %v33, 0
  %v151 = vsel %vm89, %v34, 0
  %v154 = vsel %vm89, %v35, 0
  %v157 = vsel %vm89, %v36, 0
  %v160 = vsel %vm89, %v37, 0
  %v163 = vsel %vm89, %v38, 0
  %v166 = vsel %vm89, %v39, 0
  %v169 = vsel %vm89, %v40, 0
  %v172 = vsel %vm89, %v41, 0
  %v175 = vsel %vm89, %v42, 0
  %v178 = vsel %vm89, %v43, 0
  %v181 = vsel %vm89, %v44, 0
  %v184 = vsel %vm89, %v45, 0
  %v187 = vsel %vm89, %v46, 0
  %v190 = vsel %vm89, %v47, 0
  %v193 = vsel %vm89, %v48, 0
  %v196 = vsel %vm89, %v49, 0
  %v199 = vsel %vm89, %v50, 0
  %v202 = vsel %vm89, %v51, 0
  %v205 = vsel %vm89, %v52, 0
  %v208 = vsel %vm89, %v53, 0
  %v211 = vsel %vm89, %v54, 0
  %v214 = vsel %vm89, %v55, 0
  %v217 = vsel %vm89, %v56, 0
  %v220 = vsel %vm89, %v57, 0
  %v223 = vsel %vm89, %v58, 0
  %v226 = vsel %vm89, %v59, 0
  %v229 = vsel %vm89, %v60, 0
  %v232 = vsel %vm89, %v61, 0
  %v235 = vsel %vm89, %v62, 0
  %v238 = vsel %vm89, %v63, 0
  %v241 = vsel %vm89, %v64, 0
  %v244 = vsel %vm89, %v65, 0
  %v247 = vsel %vm89, %v66, 0
  %v250 = vsel %vm89, %v67, 0
  %v253 = vsel %vm89, %v68, 0
  %v256 = vsel %vm89, %v69, 0
  %v259 = vsel %vm89, %v70, 0
  %v262 = vsel %vm89, %v71, 0
  %v265 = vsel %vm89, %v72, 0
  %v268 = vsel %vm89, %v73, 0
  %v271 = vsel %vm89, %v74, 0
  %v274 = vsel %vm89, %v75, 0
  %v277 = vsel %vm89, %v76, 0
  %v280 = vsel %vm89, %v77, 0
  %vm282 = vcmask 1042432
  %v284 = vsel %vm282, %v81, 0
  %286 = vmatprep.subr.mxu0 0.0
  %287 = vmatpush1.msra.mxu0 %v78
  %288 = vmatprep.subr.mxu0 0.0
  %289 = vmatpush1.msra.mxu0 %v79
  %290 = vmatprep.subr.mxu0 0.0
  %291 = vmatpush1.msra.mxu0 %v80
  %292 = vmatprep.subr.mxu0 0.0
  %293 = vmatpush1.msra.mxu0 %v284
  %294 = vmatprep.subr.mxu0 0.0
  %295 = vmatpush1.msra.mxu0 0.0
  %296 = vmatprep.subr.mxu0 0.0
  %297 = vmatpush1.msra.mxu0 0.0
  %298 = vmatprep.subr.mxu0 0.0
  %299 = vmatpush1.msra.mxu0 0.0
  %300 = vmatprep.subr.mxu0 0.0
  %301 = vmatpush1.msra.mxu0 0.0
  %302 = vmatprep.subr.mxu0 0.0
  %303 = vmatpush1.msra.mxu0 0.0
  %304 = vmatprep.subr.mxu0 0.0
  %305 = vmatpush1.msra.mxu0 0.0
  %306 = vmatprep.subr.mxu0 0.0
  %307 = vmatpush1.msra.mxu0 0.0
  %308 = vmatprep.subr.mxu0 0.0
  %309 = vmatpush1.msra.mxu0 0.0
  %310 = vmatprep.subr.mxu0 0.0
  %311 = vmatpush1.msra.mxu0 0.0
  %312 = vmatprep.subr.mxu0 0.0
  %313 = vmatpush1.msra.mxu0 0.0
  %314 = vmatprep.subr.mxu0 0.0
  %315 = vmatpush1.msra.mxu0 0.0
  %316 = vmatprep.subr.mxu0 0.0
  %317 = vmatpush1.msra.mxu0 0.0
  %318 = vmatprep.subr.mxu0 0.0
  %319 = vmatpush1.msra.mxu0 0.0
  %320 = vmatprep.subr.mxu0 0.0
  %321 = vmatpush1.msra.mxu0 0.0
  %322 = vmatprep.subr.mxu0 0.0
  %323 = vmatpush1.msra.mxu0 0.0
  %324 = vmatprep.subr.mxu0 0.0
  %325 = vmatpush1.msra.mxu0 0.0
  %326 = vmatprep.subr.mxu0 0.0
  %327 = vmatpush1.msra.mxu0 0.0
  %328 = vmatprep.subr.mxu0 0.0
  %329 = vmatpush1.msra.mxu0 0.0
  %330 = vmatprep.subr.mxu0 0.0
  %331 = vmatpush1.msra.mxu0 0.0
  %332 = vmatprep.subr.mxu0 0.0
  %333 = vmatpush1.msra.mxu0 0.0
  %334 = vmatprep.subr.mxu0 0.0
  %335 = vmatpush1.msra.mxu0 0.0
  %336 = vmatprep.subr.mxu0 0.0
  %337 = vmatpush1.msra.mxu0 0.0
  %338 = vmatprep.subr.mxu0 0.0
  %339 = vmatpush1.msra.mxu0 0.0
  %340 = vmatprep.subr.mxu0 0.0
  %341 = vmatpush1.msra.mxu0 0.0
  %342 = vmatprep.subr.mxu0 0.0
  %343 = vmatpush1.msra.mxu0 0.0
  %344 = vmatprep.subr.mxu0 0.0
  %345 = vmatpush1.msra.mxu0 0.0
  %346 = vmatprep.subr.mxu0 0.0
  %347 = vmatpush1.msra.mxu0 0.0
  %348 = vmatprep.subr.mxu0 0.0
  %349 = vmatpush1.msra.mxu0 0.0
  %350 = vmatprep.mubr.f32.mxu0 0.0
  %351 = vmatmul.mubr.f32.gmra.mrb[0].mxu0 %v91
  %v352 = vpop.f32.mrb[0].mxu0
  %v353 = vadd.f32 %v87, %v352
  %v354 = vpop.f32.mrb[0].mxu0
  %355 = vmatprep.mubr.f32.mxu0 0.0
  %356 = vmatmul.mubr.f32.gmra.mrb[0].mxu0 %v94
  %v357 = vpop.f32.mrb[0].mxu0
  %v358 = vadd.f32 %v87, %v357
  %v359 = vpop.f32.mrb[0].mxu0
  %360 = vmatprep.mubr.f32.mxu0 0.0
  %361 = vmatmul.mubr.f32.gmra.mrb[0].mxu0 %v97
  %v362 = vpop.f32.mrb[0].mxu0
  %v363 = vadd.f32 %v87, %v362
  %v364 = vpop.f32.mrb[0].mxu0
  %365 = vmatprep.mubr.f32.mxu0 0.0
  %366 = vmatmul.mubr.f32.gmra.mrb[0].mxu0 %v100
  %v367 = vpop.f32.mrb[0].mxu0
  %v368 = vadd.f32 %v87, %v367
  %v369 = vpop.f32.mrb[0].mxu0
  %370 = vmatprep.mubr.f32.mxu0 0.0
  %371 = vmatmul.mubr.f32.gmra.mrb[0].mxu0 %v103
  %v372 = vpop.f32.mrb[0].mxu0
  %v373 = vadd.f32 %v87, %v372
  %v374 = vpop.f32.mrb[0].mxu0
  %375 = vmatprep.mubr.f32.mxu0 0.0
  %376 = vmatmul.mubr.f32.gmra.mrb[0].mxu0 %v106
  %v377 = vpop.f32.mrb[0].mxu0
  %v378 = vadd.f32 %v87, %v377
  %v379 = vpop.f32.mrb[0].mxu0
  %380 = vmatprep.mubr.f32.mxu0 0.0
  %381 = vmatmul.mubr.f32.gmra.mrb[0].mxu0 %v109
  %v382 = vpop.f32.mrb[0].mxu0
  %v383 = vadd.f32 %v87, %v382
  %v384 = vpop.f32.mrb[0].mxu0
  %385 = vmatprep.mubr.f32.mxu0 0.0
  %386 = vmatmul.mubr.f32.gmra.mrb[0].mxu0 %v112
  %v387 = vpop.f32.mrb[0].mxu0
  %v388 = vadd.f32 %v87, %v387
  %v389 = vpop.f32.mrb[0].mxu0
  %390 = vmatprep.mubr.f32.mxu0 0.0
  %391 = vmatmul.mubr.f32.gmra.mrb[0].mxu0 %v115
  %v392 = vpop.f32.mrb[0].mxu0
  %v393 = vadd.f32 %v87, %v392
  %v394 = vpop.f32.mrb[0].mxu0
  %395 = vmatprep.mubr.f32.mxu0 0.0
  %396 = vmatmul.mubr.f32.gmra.mrb[0].mxu0 %v118
  %v397 = vpop.f32.mrb[0].mxu0
  %v398 = vadd.f32 %v87, %v397
  %v399 = vpop.f32.mrb[0].mxu0
  %400 = vmatprep.mubr.f32.mxu0 0.0
  %401 = vmatmul.mubr.f32.gmra.mrb[0].mxu0 %v121
  %v402 = vpop.f32.mrb[0].mxu0
  %v403 = vadd.f32 %v87, %v402
  %v404 = vpop.f32.mrb[0].mxu0
  %405 = vmatprep.mubr.f32.mxu0 0.0
  %406 = vmatmul.mubr.f32.gmra.mrb[0].mxu0 %v124
  %v407 = vpop.f32.mrb[0].mxu0
  %v408 = vadd.f32 %v87, %v407
  %v409 = vpop.f32.mrb[0].mxu0
  %410 = vmatprep.mubr.f32.mxu0 0.0
  %411 = vmatmul.mubr.f32.gmra.mrb[0].mxu0 %v127
  %v412 = vpop.f32.mrb[0].mxu0
  %v413 = vadd.f32 %v87, %v412
  %v414 = vpop.f32.mrb[0].mxu0
  %415 = vmatprep.mubr.f32.mxu0 0.0
  %416 = vmatmul.mubr.f32.gmra.mrb[0].mxu0 %v130
  %v417 = vpop.f32.mrb[0].mxu0
  %v418 = vadd.f32 %v87, %v417
  %v419 = vpop.f32.mrb[0].mxu0
  %420 = vmatprep.mubr.f32.mxu0 0.0
  %421 = vmatmul.mubr.f32.gmra.mrb[0].mxu0 %v133
  %v422 = vpop.f32.mrb[0].mxu0
  %v423 = vadd.f32 %v87, %v422
  %v424 = vpop.f32.mrb[0].mxu0
  %425 = vmatprep.mubr.f32.mxu0 0.0
  %426 = vmatmul.mubr.f32.gmra.mrb[0].mxu0 %v136
  %v427 = vpop.f32.mrb[0].mxu0
  %v428 = vadd.f32 %v87, %v427
  %v429 = vpop.f32.mrb[0].mxu0
  %430 = vmatprep.mubr.f32.mxu0 0.0
  %431 = vmatmul.mubr.f32.gmra.mrb[0].mxu0 %v139
  %v432 = vpop.f32.mrb[0].mxu0
  %v433 = vadd.f32 %v87, %v432
  %v434 = vpop.f32.mrb[0].mxu0
  %435 = vmatprep.mubr.f32.mxu0 0.0
  %436 = vmatmul.mubr.f32.gmra.mrb[0].mxu0 %v142
  %v437 = vpop.f32.mrb[0].mxu0
  %v438 = vadd.f32 %v87, %v437
  %v439 = vpop.f32.mrb[0].mxu0
  %440 = vmatprep.mubr.f32.mxu0 0.0
  %441 = vmatmul.mubr.f32.gmra.mrb[0].mxu0 %v145
  %v442 = vpop.f32.mrb[0].mxu0
  %v443 = vadd.f32 %v87, %v442
  %v444 = vpop.f32.mrb[0].mxu0
  %445 = vmatprep.mubr.f32.mxu0 0.0
  %446 = vmatmul.mubr.f32.gmra.mrb[0].mxu0 %v148
  %v447 = vpop.f32.mrb[0].mxu0
  %v448 = vadd.f32 %v87, %v447
  %v449 = vpop.f32.mrb[0].mxu0
  %450 = vmatprep.mubr.f32.mxu0 0.0
  %451 = vmatmul.mubr.f32.gmra.mrb[0].mxu0 %v151
  %v452 = vpop.f32.mrb[0].mxu0
  %v453 = vadd.f32 %v87, %v452
  %v454 = vpop.f32.mrb[0].mxu0
  %455 = vmatprep.mubr.f32.mxu0 0.0
  %456 = vmatmul.mubr.f32.gmra.mrb[0].mxu0 %v154
  %v457 = vpop.f32.mrb[0].mxu0
  %v458 = vadd.f32 %v87, %v457
  %v459 = vpop.f32.mrb[0].mxu0
  %460 = vmatprep.mubr.f32.mxu0 0.0
  %461 = vmatmul.mubr.f32.gmra.mrb[0].mxu0 %v157
  %v462 = vpop.f32.mrb[0].mxu0
  %v463 = vadd.f32 %v87, %v462
  %v464 = vpop.f32.mrb[0].mxu0
  %465 = vmatprep.mubr.f32.mxu0 0.0
  %466 = vmatmul.mubr.f32.gmra.mrb[0].mxu0 %v160
  %v467 = vpop.f32.mrb[0].mxu0
  %v468 = vadd.f32 %v87, %v467
  %v469 = vpop.f32.mrb[0].mxu0
  %470 = vmatprep.mubr.f32.mxu0 0.0
  %471 = vmatmul.mubr.f32.gmra.mrb[0].mxu0 %v163
  %v472 = vpop.f32.mrb[0].mxu0
  %v473 = vadd.f32 %v87, %v472
  %v474 = vpop.f32.mrb[0].mxu0
  %475 = vmatprep.mubr.f32.mxu0 0.0
  %476 = vmatmul.mubr.f32.gmra.mrb[0].mxu0 %v166
  %v477 = vpop.f32.mrb[0].mxu0
  %v478 = vadd.f32 %v87, %v477
  %v479 = vpop.f32.mrb[0].mxu0
  %480 = vmatprep.mubr.f32.mxu0 0.0
  %481 = vmatmul.mubr.f32.gmra.mrb[0].mxu0 %v169
  %v482 = vpop.f32.mrb[0].mxu0
  %v483 = vadd.f32 %v87, %v482
  %v484 = vpop.f32.mrb[0].mxu0
  %485 = vmatprep.mubr.f32.mxu0 0.0
  %486 = vmatmul.mubr.f32.gmra.mrb[0].mxu0 %v172
  %v487 = vpop.f32.mrb[0].mxu0
  %v488 = vadd.f32 %v87, %v487
  %v489 = vpop.f32.mrb[0].mxu0
  %490 = vmatprep.mubr.f32.mxu0 0.0
  %491 = vmatmul.mubr.f32.gmra.mrb[0].mxu0 %v175
  %v492 = vpop.f32.mrb[0].mxu0
  %v493 = vadd.f32 %v87, %v492
  %v494 = vpop.f32.mrb[0].mxu0
  %495 = vmatprep.mubr.f32.mxu0 0.0
  %496 = vmatmul.mubr.f32.gmra.mrb[0].mxu0 %v178
  %v497 = vpop.f32.mrb[0].mxu0
  %v498 = vadd.f32 %v87, %v497
  %v499 = vpop.f32.mrb[0].mxu0
  %500 = vmatprep.mubr.f32.mxu0 0.0
  %501 = vmatmul.mubr.f32.gmra.mrb[0].mxu0 %v181
  %v502 = vpop.f32.mrb[0].mxu0
  %v503 = vadd.f32 %v87, %v502
  %v504 = vpop.f32.mrb[0].mxu0
  %505 = vmatprep.mubr.f32.mxu0 0.0
  %506 = vmatmul.mubr.f32.gmra.mrb[0].mxu0 %v184
  %v507 = vpop.f32.mrb[0].mxu0
  %v508 = vadd.f32 %v87, %v507
  %v509 = vpop.f32.mrb[0].mxu0
  %510 = vmatprep.mubr.f32.mxu0 0.0
  %511 = vmatmul.mubr.f32.gmra.mrb[0].mxu0 %v187
  %v512 = vpop.f32.mrb[0].mxu0
  %v513 = vadd.f32 %v87, %v512
  %v514 = vpop.f32.mrb[0].mxu0
  %515 = vmatprep.mubr.f32.mxu0 0.0
  %516 = vmatmul.mubr.f32.gmra.mrb[0].mxu0 %v190
  %v517 = vpop.f32.mrb[0].mxu0
  %v518 = vadd.f32 %v87, %v517
  %v519 = vpop.f32.mrb[0].mxu0
  %520 = vmatprep.mubr.f32.mxu0 0.0
  %521 = vmatmul.mubr.f32.gmra.mrb[0].mxu0 %v193
  %v522 = vpop.f32.mrb[0].mxu0
  %v523 = vadd.f32 %v87, %v522
  %v524 = vpop.f32.mrb[0].mxu0
  %525 = vmatprep.mubr.f32.mxu0 0.0
  %526 = vmatmul.mubr.f32.gmra.mrb[0].mxu0 %v196
  %v527 = vpop.f32.mrb[0].mxu0
  %v528 = vadd.f32 %v87, %v527
  %v529 = vpop.f32.mrb[0].mxu0
  %530 = vmatprep.mubr.f32.mxu0 0.0
  %531 = vmatmul.mubr.f32.gmra.mrb[0].mxu0 %v199
  %v532 = vpop.f32.mrb[0].mxu0
  %v533 = vadd.f32 %v87, %v532
  %v534 = vpop.f32.mrb[0].mxu0
  %535 = vmatprep.mubr.f32.mxu0 0.0
  %536 = vmatmul.mubr.f32.gmra.mrb[0].mxu0 %v202
  %v537 = vpop.f32.mrb[0].mxu0
  %v538 = vadd.f32 %v87, %v537
  %v539 = vpop.f32.mrb[0].mxu0
  %540 = vmatprep.mubr.f32.mxu0 0.0
  %541 = vmatmul.mubr.f32.gmra.mrb[0].mxu0 %v205
  %v542 = vpop.f32.mrb[0].mxu0
  %v543 = vadd.f32 %v87, %v542
  %v544 = vpop.f32.mrb[0].mxu0
  %545 = vmatprep.mubr.f32.mxu0 0.0
  %546 = vmatmul.mubr.f32.gmra.mrb[0].mxu0 %v208
  %v547 = vpop.f32.mrb[0].mxu0
  %v548 = vadd.f32 %v87, %v547
  %v549 = vpop.f32.mrb[0].mxu0
  %550 = vmatprep.mubr.f32.mxu0 0.0
  %551 = vmatmul.mubr.f32.gmra.mrb[0].mxu0 %v211
  %v552 = vpop.f32.mrb[0].mxu0
  %v553 = vadd.f32 %v87, %v552
  %v554 = vpop.f32.mrb[0].mxu0
  %555 = vmatprep.mubr.f32.mxu0 0.0
  %556 = vmatmul.mubr.f32.gmra.mrb[0].mxu0 %v214
  %v557 = vpop.f32.mrb[0].mxu0
  %v558 = vadd.f32 %v87, %v557
  %v559 = vpop.f32.mrb[0].mxu0
  %560 = vmatprep.mubr.f32.mxu0 0.0
  %561 = vmatmul.mubr.f32.gmra.mrb[0].mxu0 %v217
  %v562 = vpop.f32.mrb[0].mxu0
  %v563 = vadd.f32 %v87, %v562
  %v564 = vpop.f32.mrb[0].mxu0
  %565 = vmatprep.mubr.f32.mxu0 0.0
  %566 = vmatmul.mubr.f32.gmra.mrb[0].mxu0 %v220
  %v567 = vpop.f32.mrb[0].mxu0
  %v568 = vadd.f32 %v87, %v567
  %v569 = vpop.f32.mrb[0].mxu0
  %570 = vmatprep.mubr.f32.mxu0 0.0
  %571 = vmatmul.mubr.f32.gmra.mrb[0].mxu0 %v223
  %v572 = vpop.f32.mrb[0].mxu0
  %v573 = vadd.f32 %v87, %v572
  %v574 = vpop.f32.mrb[0].mxu0
  %575 = vmatprep.mubr.f32.mxu0 0.0
  %576 = vmatmul.mubr.f32.gmra.mrb[0].mxu0 %v226
  %v577 = vpop.f32.mrb[0].mxu0
  %v578 = vadd.f32 %v87, %v577
  %v579 = vpop.f32.mrb[0].mxu0
  %580 = vmatprep.mubr.f32.mxu0 0.0
  %581 = vmatmul.mubr.f32.gmra.mrb[0].mxu0 %v229
  %v582 = vpop.f32.mrb[0].mxu0
  %v583 = vadd.f32 %v87, %v582
  %v584 = vpop.f32.mrb[0].mxu0
  %585 = vmatprep.mubr.f32.mxu0 0.0
  %586 = vmatmul.mubr.f32.gmra.mrb[0].mxu0 %v232
  %v587 = vpop.f32.mrb[0].mxu0
  %v588 = vadd.f32 %v87, %v587
  %v589 = vpop.f32.mrb[0].mxu0
  %590 = vmatprep.mubr.f32.mxu0 0.0
  %591 = vmatmul.mubr.f32.gmra.mrb[0].mxu0 %v235
  %v592 = vpop.f32.mrb[0].mxu0
  %v593 = vadd.f32 %v87, %v592
  %v594 = vpop.f32.mrb[0].mxu0
  %595 = vmatprep.mubr.f32.mxu0 0.0
  %596 = vmatmul.mubr.f32.gmra.mrb[0].mxu0 %v238
  %v597 = vpop.f32.mrb[0].mxu0
  %v598 = vadd.f32 %v87, %v597
  %v599 = vpop.f32.mrb[0].mxu0
  %600 = vmatprep.mubr.f32.mxu0 0.0
  %601 = vmatmul.mubr.f32.gmra.mrb[0].mxu0 %v241
  %v602 = vpop.f32.mrb[0].mxu0
  %v603 = vadd.f32 %v87, %v602
  %v604 = vpop.f32.mrb[0].mxu0
  %605 = vmatprep.mubr.f32.mxu0 0.0
  %606 = vmatmul.mubr.f32.gmra.mrb[0].mxu0 %v244
  %v607 = vpop.f32.mrb[0].mxu0
  %v608 = vadd.f32 %v87, %v607
  %v609 = vpop.f32.mrb[0].mxu0
  %610 = vmatprep.mubr.f32.mxu0 0.0
  %611 = vmatmul.mubr.f32.gmra.mrb[0].mxu0 %v247
  %v612 = vpop.f32.mrb[0].mxu0
  %v613 = vadd.f32 %v87, %v612
  %v614 = vpop.f32.mrb[0].mxu0
  %615 = vmatprep.mubr.f32.mxu0 0.0
  %616 = vmatmul.mubr.f32.gmra.mrb[0].mxu0 %v250
  %v617 = vpop.f32.mrb[0].mxu0
  %v618 = vadd.f32 %v87, %v617
  %v619 = vpop.f32.mrb[0].mxu0
  %620 = vmatprep.mubr.f32.mxu0 0.0
  %621 = vmatmul.mubr.f32.gmra.mrb[0].mxu0 %v253
  %v622 = vpop.f32.mrb[0].mxu0
  %v623 = vadd.f32 %v87, %v622
  %v624 = vpop.f32.mrb[0].mxu0
  %625 = vmatprep.mubr.f32.mxu0 0.0
  %626 = vmatmul.mubr.f32.gmra.mrb[0].mxu0 %v256
  %v627 = vpop.f32.mrb[0].mxu0
  %v628 = vadd.f32 %v87, %v627
  %v629 = vpop.f32.mrb[0].mxu0
  %630 = vmatprep.mubr.f32.mxu0 0.0
  %631 = vmatmul.mubr.f32.gmra.mrb[0].mxu0 %v259
  %v632 = vpop.f32.mrb[0].mxu0
  %v633 = vadd.f32 %v87, %v632
  %v634 = vpop.f32.mrb[0].mxu0
  %635 = vmatprep.mubr.f32.mxu0 0.0
  %636 = vmatmul.mubr.f32.gmra.mrb[0].mxu0 %v262
  %v637 = vpop.f32.mrb[0].mxu0
  %v638 = vadd.f32 %v87, %v637
  %v639 = vpop.f32.mrb[0].mxu0
  %640 = vmatprep.mubr.f32.mxu0 0.0
  %641 = vmatmul.mubr.f32.gmra.mrb[0].mxu0 %v265
  %v642 = vpop.f32.mrb[0].mxu0
  %v643 = vadd.f32 %v87, %v642
  %v644 = vpop.f32.mrb[0].mxu0
  %645 = vmatprep.mubr.f32.mxu0 0.0
  %646 = vmatmul.mubr.f32.gmra.mrb[0].mxu0 %v268
  %v647 = vpop.f32.mrb[0].mxu0
  %v648 = vadd.f32 %v87, %v647
  %v649 = vpop.f32.mrb[0].mxu0
  %650 = vmatprep.mubr.f32.mxu0 0.0
  %651 = vmatmul.mubr.f32.gmra.mrb[0].mxu0 %v271
  %v652 = vpop.f32.mrb[0].mxu0
  %v653 = vadd.f32 %v87, %v652
  %v654 = vpop.f32.mrb[0].mxu0
  %655 = vmatprep.mubr.f32.mxu0 0.0
  %656 = vmatmul.mubr.f32.gmra.mrb[0].mxu0 %v274
  %v657 = vpop.f32.mrb[0].mxu0
  %v658 = vadd.f32 %v87, %v657
  %v659 = vpop.f32.mrb[0].mxu0
  %660 = vmatprep.mubr.f32.mxu0 0.0
  %661 = vmatmul.mubr.f32.gmra.mrb[0].mxu0 %v277
  %v662 = vpop.f32.mrb[0].mxu0
  %v663 = vadd.f32 %v87, %v662
  %v664 = vpop.f32.mrb[0].mxu0
  %665 = vmatprep.mubr.f32.mxu0 0.0
  %666 = vmatmul.mubr.f32.gmra.mrb[0].mxu0 %v280
  %v667 = vpop.f32.mrb[0].mxu0
  %v668 = vadd.f32 %v87, %v667
  %v669 = vpop.f32.mrb[0].mxu0
  %670 = vdwg.mxu0
  %vm671 = vcmp.ge.f32.partialorder %v353, 0.0
  %vm672 = vcmp.ge.f32.partialorder %v358, 0.0
  %vm673 = vcmp.ge.f32.partialorder %v363, 0.0
  %vm674 = vcmp.ge.f32.partialorder %v368, 0.0
  %vm675 = vcmp.ge.f32.partialorder %v373, 0.0
  %vm676 = vcmp.ge.f32.partialorder %v378, 0.0
  %vm677 = vcmp.ge.f32.partialorder %v383, 0.0
  %vm678 = vcmp.ge.f32.partialorder %v388, 0.0
  %vm679 = vcmp.ge.f32.partialorder %v393, 0.0
  %vm680 = vcmp.ge.f32.partialorder %v398, 0.0
  %vm681 = vcmp.ge.f32.partialorder %v403, 0.0
  %vm682 = vcmp.ge.f32.partialorder %v408, 0.0
  %vm683 = vcmp.ge.f32.partialorder %v413, 0.0
  %vm684 = vcmp.ge.f32.partialorder %v418, 0.0
  %vm685 = vcmp.ge.f32.partialorder %v423, 0.0
  %vm686 = vcmp.ge.f32.partialorder %v428, 0.0
  %vm687 = vcmp.ge.f32.partialorder %v433, 0.0
  %vm688 = vcmp.ge.f32.partialorder %v438, 0.0
  %vm689 = vcmp.ge.f32.partialorder %v443, 0.0
  %vm690 = vcmp.ge.f32.partialorder %v448, 0.0
  %vm691 = vcmp.ge.f32.partialorder %v453, 0.0
  %vm692 = vcmp.ge.f32.partialorder %v458, 0.0
  %vm693 = vcmp.ge.f32.partialorder %v463, 0.0
  %vm694 = vcmp.ge.f32.partialorder %v468, 0.0
  %vm695 = vcmp.ge.f32.partialorder %v473, 0.0
  %vm696 = vcmp.ge.f32.partialorder %v478, 0.0
  %vm697 = vcmp.ge.f32.partialorder %v483, 0.0
  %vm698 = vcmp.ge.f32.partialorder %v488, 0.0
  %vm699 = vcmp.ge.f32.partialorder %v493, 0.0
  %vm700 = vcmp.ge.f32.partialorder %v498, 0.0
  %vm701 = vcmp.ge.f32.partialorder %v503, 0.0
  %vm702 = vcmp.ge.f32.partialorder %v508, 0.0
  %vm703 = vcmp.ge.f32.partialorder %v513, 0.0
  %vm704 = vcmp.ge.f32.partialorder %v518, 0.0
  %vm705 = vcmp.ge.f32.partialorder %v523, 0.0
  %vm706 = vcmp.ge.f32.partialorder %v528, 0.0
  %vm707 = vcmp.ge.f32.partialorder %v533, 0.0
  %vm708 = vcmp.ge.f32.partialorder %v538, 0.0
  %vm709 = vcmp.ge.f32.partialorder %v543, 0.0
  %vm710 = vcmp.ge.f32.partialorder %v548, 0.0
  %vm711 = vcmp.ge.f32.partialorder %v553, 0.0
  %vm712 = vcmp.ge.f32.partialorder %v558, 0.0
  %vm713 = vcmp.ge.f32.partialorder %v563, 0.0
  %vm714 = vcmp.ge.f32.partialorder %v568, 0.0
  %vm715 = vcmp.ge.f32.partialorder %v573, 0.0
  %vm716 = vcmp.ge.f32.partialorder %v578, 0.0
  %vm717 = vcmp.ge.f32.partialorder %v583, 0.0
  %vm718 = vcmp.ge.f32.partialorder %v588, 0.0
  %vm719 = vcmp.ge.f32.partialorder %v593, 0.0
  %vm720 = vcmp.ge.f32.partialorder %v598, 0.0
  %vm721 = vcmp.ge.f32.partialorder %v603, 0.0
  %vm722 = vcmp.ge.f32.partialorder %v608, 0.0
  %vm723 = vcmp.ge.f32.partialorder %v613, 0.0
  %vm724 = vcmp.ge.f32.partialorder %v618, 0.0
  %vm725 = vcmp.ge.f32.partialorder %v623, 0.0
  %vm726 = vcmp.ge.f32.partialorder %v628, 0.0
  %vm727 = vcmp.ge.f32.partialorder %v633, 0.0
  %vm728 = vcmp.ge.f32.partialorder %v638, 0.0
  %vm729 = vcmp.ge.f32.partialorder %v643, 0.0
  %vm730 = vcmp.ge.f32.partialorder %v648, 0.0
  %vm731 = vcmp.ge.f32.partialorder %v653, 0.0
  %vm732 = vcmp.ge.f32.partialorder %v658, 0.0
  %vm733 = vcmp.ge.f32.partialorder %v663, 0.0
  %vm734 = vcmp.ge.f32.partialorder %v668, 0.0
  %v735 = vmul.f32 %v353, 0.2
  %v736 = vmul.f32 %v358, 0.2
  %v737 = vmul.f32 %v363, 0.2
  %v738 = vmul.f32 %v368, 0.2
  %v739 = vmul.f32 %v373, 0.2
  %v740 = vmul.f32 %v378, 0.2
  %v741 = vmul.f32 %v383, 0.2
  %v742 = vmul.f32 %v388, 0.2
  %v743 = vmul.f32 %v393, 0.2
  %v744 = vmul.f32 %v398, 0.2
  %v745 = vmul.f32 %v403, 0.2
  %v746 = vmul.f32 %v408, 0.2
  %v747 = vmul.f32 %v413, 0.2
  %v748 = vmul.f32 %v418, 0.2
  %v749 = vmul.f32 %v423, 0.2
  %v750 = vmul.f32 %v428, 0.2
  %v751 = vmul.f32 %v433, 0.2
  %v752 = vmul.f32 %v438, 0.2
  %v753 = vmul.f32 %v443, 0.2
  %v754 = vmul.f32 %v448, 0.2
  %v755 = vmul.f32 %v453, 0.2
  %v756 = vmul.f32 %v458, 0.2
  %v757 = vmul.f32 %v463, 0.2
  %v758 = vmul.f32 %v468, 0.2
  %v759 = vmul.f32 %v473, 0.2
  %v760 = vmul.f32 %v478, 0.2
  %v761 = vmul.f32 %v483, 0.2
  %v762 = vmul.f32 %v488, 0.2
  %v763 = vmul.f32 %v493, 0.2
  %v764 = vmul.f32 %v498, 0.2
  %v765 = vmul.f32 %v503, 0.2
  %v766 = vmul.f32 %v508, 0.2
  %v767 = vmul.f32 %v513, 0.2
  %v768 = vmul.f32 %v518, 0.2
  %v769 = vmul.f32 %v523, 0.2
  %v770 = vmul.f32 %v528, 0.2
  %v771 = vmul.f32 %v533, 0.2
  %v772 = vmul.f32 %v538, 0.2
  %v773 = vmul.f32 %v543, 0.2
  %v774 = vmul.f32 %v548, 0.2
  %v775 = vmul.f32 %v553, 0.2
  %v776 = vmul.f32 %v558, 0.2
  %v777 = vmul.f32 %v563, 0.2
  %v778 = vmul.f32 %v568, 0.2
  %v779 = vmul.f32 %v573, 0.2
  %v780 = vmul.f32 %v578, 0.2
  %v781 = vmul.f32 %v583, 0.2
  %v782 = vmul.f32 %v588, 0.2
  %v783 = vmul.f32 %v593, 0.2
  %v784 = vmul.f32 %v598, 0.2
  %v785 = vmul.f32 %v603, 0.2
  %v786 = vmul.f32 %v608, 0.2
  %v787 = vmul.f32 %v613, 0.2
  %v788 = vmul.f32 %v618, 0.2
  %v789 = vmul.f32 %v623, 0.2
  %v790 = vmul.f32 %v628, 0.2
  %v791 = vmul.f32 %v633, 0.2
  %v792 = vmul.f32 %v638, 0.2
  %v793 = vmul.f32 %v643, 0.2
  %v794 = vmul.f32 %v648, 0.2
  %v795 = vmul.f32 %v653, 0.2
  %v796 = vmul.f32 %v658, 0.2
  %v797 = vmul.f32 %v663, 0.2
  %v798 = vmul.f32 %v668, 0.2
  %v799 = vsel %vm671, %v353, %v735
  %v800 = vsel %vm672, %v358, %v736
  %v801 = vsel %vm673, %v363, %v737
  %v802 = vsel %vm674, %v368, %v738
  %v803 = vsel %vm675, %v373, %v739
  %v804 = vsel %vm676, %v378, %v740
  %v805 = vsel %vm677, %v383, %v741
  %v806 = vsel %vm678, %v388, %v742
  %v807 = vsel %vm679, %v393, %v743
  %v808 = vsel %vm680, %v398, %v744
  %v809 = vsel %vm681, %v403, %v745
  %v810 = vsel %vm682, %v408, %v746
  %v811 = vsel %vm683, %v413, %v747
  %v812 = vsel %vm684, %v418, %v748
  %v813 = vsel %vm685, %v423, %v749
  %v814 = vsel %vm686, %v428, %v750
  %v815 = vsel %vm687, %v433, %v751
  %v816 = vsel %vm688, %v438, %v752
  %v817 = vsel %vm689, %v443, %v753
  %v818 = vsel %vm690, %v448, %v754
  %v819 = vsel %vm691, %v453, %v755
  %v820 = vsel %vm692, %v458, %v756
  %v821 = vsel %vm693, %v463, %v757
  %v822 = vsel %vm694, %v468, %v758
  %v823 = vsel %vm695, %v473, %v759
  %v824 = vsel %vm696, %v478, %v760
  %v825 = vsel %vm697, %v483, %v761
  %v826 = vsel %vm698, %v488, %v762
  %v827 = vsel %vm699, %v493, %v763
  %v828 = vsel %vm700, %v498, %v764
  %v829 = vsel %vm701, %v503, %v765
  %v830 = vsel %vm702, %v508, %v766
  %v831 = vsel %vm703, %v513, %v767
  %v832 = vsel %vm704, %v518, %v768
  %v833 = vsel %vm705, %v523, %v769
  %v834 = vsel %vm706, %v528, %v770
  %v835 = vsel %vm707, %v533, %v771
  %v836 = vsel %vm708, %v538, %v772
  %v837 = vsel %vm709, %v543, %v773
  %v838 = vsel %vm710, %v548, %v774
  %v839 = vsel %vm711, %v553, %v775
  %v840 = vsel %vm712, %v558, %v776
  %v841 = vsel %vm713, %v563, %v777
  %v842 = vsel %vm714, %v568, %v778
  %v843 = vsel %vm715, %v573, %v779
  %v844 = vsel %vm716, %v578, %v780
  %v845 = vsel %vm717, %v583, %v781
  %v846 = vsel %vm718, %v588, %v782
  %v847 = vsel %vm719, %v593, %v783
  %v848 = vsel %vm720, %v598, %v784
  %v849 = vsel %vm721, %v603, %v785
  %v850 = vsel %vm722, %v608, %v786
  %v851 = vsel %vm723, %v613, %v787
  %v852 = vsel %vm724, %v618, %v788
  %v853 = vsel %vm725, %v623, %v789
  %v854 = vsel %vm726, %v628, %v790
  %v855 = vsel %vm727, %v633, %v791
  %v856 = vsel %vm728, %v638, %v792
  %v857 = vsel %vm729, %v643, %v793
  %v858 = vsel %vm730, %v648, %v794
  %v859 = vsel %vm731, %v653, %v795
  %v860 = vsel %vm732, %v658, %v796
  %v861 = vsel %vm733, %v663, %v797
  %v862 = vsel %vm734, %v668, %v798
  %vm863 = vcmask 523264
  %864 = vst.msk [vmem:[%s3] sm:$0xff] %vm863, %v799
  %865 = vst.msk [vmem:[%s3 + $0x8] sm:$0xff] %vm863, %v800
  %866 = vst.msk [vmem:[%s3 + $0x10] sm:$0xff] %vm863, %v801
  %867 = vst.msk [vmem:[%s3 + $0x18] sm:$0xff] %vm863, %v802
  %868 = vst.msk [vmem:[%s3 + $0x20] sm:$0xff] %vm863, %v803
  %869 = vst.msk [vmem:[%s3 + $0x28] sm:$0xff] %vm863, %v804
  %870 = vst.msk [vmem:[%s3 + $0x30] sm:$0xff] %vm863, %v805
  %871 = vst.msk [vmem:[%s3 + $0x38] sm:$0xff] %vm863, %v806
  %872 = vst.msk [vmem:[%s3 + $0x40] sm:$0xff] %vm863, %v807
  %873 = vst.msk [vmem:[%s3 + $0x48] sm:$0xff] %vm863, %v808
  %874 = vst.msk [vmem:[%s3 + $0x50] sm:$0xff] %vm863, %v809
  %875 = vst.msk [vmem:[%s3 + $0x58] sm:$0xff] %vm863, %v810
  %876 = vst.msk [vmem:[%s3 + $0x60] sm:$0xff] %vm863, %v811
  %877 = vst.msk [vmem:[%s3 + $0x68] sm:$0xff] %vm863, %v812
  %878 = vst.msk [vmem:[%s3 + $0x70] sm:$0xff] %vm863, %v813
  %879 = vst.msk [vmem:[%s3 + $0x78] sm:$0xff] %vm863, %v814
  %880 = vst.msk [vmem:[%s3 + $0x80] sm:$0xff] %vm863, %v815
  %881 = vst.msk [vmem:[%s3 + $0x88] sm:$0xff] %vm863, %v816
  %882 = vst.msk [vmem:[%s3 + $0x90] sm:$0xff] %vm863, %v817
  %883 = vst.msk [vmem:[%s3 + $0x98] sm:$0xff] %vm863, %v818
  %884 = vst.msk [vmem:[%s3 + $0xa0] sm:$0xff] %vm863, %v819
  %885 = vst.msk [vmem:[%s3 + $0xa8] sm:$0xff] %vm863, %v820
  %886 = vst.msk [vmem:[%s3 + $0xb0] sm:$0xff] %vm863, %v821
  %887 = vst.msk [vmem:[%s3 + $0xb8] sm:$0xff] %vm863, %v822
  %888 = vst.msk [vmem:[%s3 + $0xc0] sm:$0xff] %vm863, %v823
  %889 = vst.msk [vmem:[%s3 + $0xc8] sm:$0xff] %vm863, %v824
  %890 = vst.msk [vmem:[%s3 + $0xd0] sm:$0xff] %vm863, %v825
  %891 = vst.msk [vmem:[%s3 + $0xd8] sm:$0xff] %vm863, %v826
  %892 = vst.msk [vmem:[%s3 + $0xe0] sm:$0xff] %vm863, %v827
  %893 = vst.msk [vmem:[%s3 + $0xe8] sm:$0xff] %vm863, %v828
  %894 = vst.msk [vmem:[%s3 + $0xf0] sm:$0xff] %vm863, %v829
  %895 = vst.msk [vmem:[%s3 + $0xf8] sm:$0xff] %vm863, %v830
  %896 = vst.msk [vmem:[%s3 + $0x100] sm:$0xff] %vm863, %v831
  %897 = vst.msk [vmem:[%s3 + $0x108] sm:$0xff] %vm863, %v832
  %898 = vst.msk [vmem:[%s3 + $0x110] sm:$0xff] %vm863, %v833
  %899 = vst.msk [vmem:[%s3 + $0x118] sm:$0xff] %vm863, %v834
  %900 = vst.msk [vmem:[%s3 + $0x120] sm:$0xff] %vm863, %v835
  %901 = vst.msk [vmem:[%s3 + $0x128] sm:$0xff] %vm863, %v836
  %902 = vst.msk [vmem:[%s3 + $0x130] sm:$0xff] %vm863, %v837
  %903 = vst.msk [vmem:[%s3 + $0x138] sm:$0xff] %vm863, %v838
  %904 = vst.msk [vmem:[%s3 + $0x140] sm:$0xff] %vm863, %v839
  %905 = vst.msk [vmem:[%s3 + $0x148] sm:$0xff] %vm863, %v840
  %906 = vst.msk [vmem:[%s3 + $0x150] sm:$0xff] %vm863, %v841
  %907 = vst.msk [vmem:[%s3 + $0x158] sm:$0xff] %vm863, %v842
  %908 = vst.msk [vmem:[%s3 + $0x160] sm:$0xff] %vm863, %v843
  %909 = vst.msk [vmem:[%s3 + $0x168] sm:$0xff] %vm863, %v844
  %910 = vst.msk [vmem:[%s3 + $0x170] sm:$0xff] %vm863, %v845
  %911 = vst.msk [vmem:[%s3 + $0x178] sm:$0xff] %vm863, %v846
  %912 = vst.msk [vmem:[%s3 + $0x180] sm:$0xff] %vm863, %v847
  %913 = vst.msk [vmem:[%s3 + $0x188] sm:$0xff] %vm863, %v848
  %914 = vst.msk [vmem:[%s3 + $0x190] sm:$0xff] %vm863, %v849
  %915 = vst.msk [vmem:[%s3 + $0x198] sm:$0xff] %vm863, %v850
  %916 = vst.msk [vmem:[%s3 + $0x1a0] sm:$0xff] %vm863, %v851
  %917 = vst.msk [vmem:[%s3 + $0x1a8] sm:$0xff] %vm863, %v852
  %918 = vst.msk [vmem:[%s3 + $0x1b0] sm:$0xff] %vm863, %v853
  %919 = vst.msk [vmem:[%s3 + $0x1b8] sm:$0xff] %vm863, %v854
  %920 = vst.msk [vmem:[%s3 + $0x1c0] sm:$0xff] %vm863, %v855
  %921 = vst.msk [vmem:[%s3 + $0x1c8] sm:$0xff] %vm863, %v856
  %922 = vst.msk [vmem:[%s3 + $0x1d0] sm:$0xff] %vm863, %v857
  %923 = vst.msk [vmem:[%s3 + $0x1d8] sm:$0xff] %vm863, %v858
  %924 = vst.msk [vmem:[%s3 + $0x1e0] sm:$0xff] %vm863, %v859
  %925 = vst.msk [vmem:[%s3 + $0x1e8] sm:$0xff] %vm863, %v860
  %926 = vst.msk [vmem:[%s3 + $0x1f0] sm:$0xff] %vm863, %v861
  %927 = vst.msk [vmem:[%s3 + $0x1f8] sm:$0xff] %vm863, %v862
  // Predicated region
  $region14: #{simple_cnn_forward.3} parent=0 // pred_check
    _
  $region15: #{simple_cnn_forward.3} parent=0 // pred_check_branch
    %929 = sbr.rel (0) target = $region17
  $region16: #{simple_cnn_forward.3} parent=0 // pred_region
    _
  $region17: #{simple_cnn_forward.3} parent=0 // pred_fallthru
    _
  // Predicated region
  $region18: #{simple_cnn_forward.3} parent=0 // pred_check
    _
  $region19: #{simple_cnn_forward.3} parent=0 // pred_check_branch
    %931 = sbr.rel (0) target = $region21
  $region20: #{simple_cnn_forward.3} parent=0 // pred_region
    _
  $region21: #{simple_cnn_forward.3} parent=0 // pred_fallthru
    _

// kernel: simple_cnn_forward.5
$region0: #{simple_cnn_forward.5}
  #allocation0 [shape = 'u32[]', space=smem, size = 0x4, offset = 0x4, fixed_abs, tag = 'smem constant byte address 0x4 - core index']
  #allocation1 [shape = 'u32[144,128]{1,0:T(1,128)}', space=vmem, size = 0x12000, scoped, tag = 'internal scratch']
  %s0 = inlined_call_operand.vmem [shape: f32[2,2048], index: 0, kind: input, shape index: {}]
  %s1 = inlined_call_operand.vmem [shape: f32[2048,128], index: 1, kind: input, shape index: {}]
  %s2 = inlined_call_operand.vmem [shape: f32[1,128], index: 2, kind: input, shape index: {}]
  %s3 = inlined_call_operand.hbm [shape: f32[2,128], index: 3, kind: output, shape index: {}]
  %s4 = sld [smem:[#allocation0]]
  $region22: #{simple_cnn_forward.5} parent=0
    _
  %s6 = ssub.s32 1, %s4
  %s7 = scalar_select 0, %s6, %s4
  $region1: #{simple_cnn_forward.5} parent=0
    #allocation2 [shape = 'u8[1024]{0}', space=vmem, size = 0x400, scoped, tag = 'output window, operand 0, single buffered']
    #allocation3 [shape = 's32[1]{0}', space=sflag, size = 0x4, scoped, tag = 'scoped memory for simple_cnn_forward.5']
    %8 = vsyncpa [#allocation3], 0
    // Predicated region
    $region2: #{simple_cnn_forward.5} parent=1 // pred_check
      _
    $region3: #{simple_cnn_forward.5} parent=1 // pred_check_branch
      %10 = sbr.rel (0) target = $region5
    $region4: #{simple_cnn_forward.5} parent=1 // pred_region
      _
    $region5: #{simple_cnn_forward.5} parent=1 // pred_fallthru
      _
    // Predicated region
    $region6: #{simple_cnn_forward.5} parent=1 // pred_check
      _
    $region7: #{simple_cnn_forward.5} parent=1 // pred_check_branch
      %12 = sbr.rel (0) target = $region9
    $region8: #{simple_cnn_forward.5} parent=1 // pred_region
      _
    $region9: #{simple_cnn_forward.5} parent=1 // pred_fallthru
      _
    // Predicated region
    $region10: #{simple_cnn_forward.5} parent=1 // pred_check
      _
    $region11: #{simple_cnn_forward.5} parent=1 // pred_check_branch
      %14 = sbr.rel (0) target = $region13
    $region12: #{simple_cnn_forward.5} parent=1 // pred_region
      _
    $region13: #{simple_cnn_forward.5} parent=1 // pred_fallthru
      _
    %v15 = vld [vmem:[%s0] sm:$0xff]
    %v16 = vld [vmem:[%s0 + $0x8] sm:$0xff]
    %v17 = vld [vmem:[%s0 + $0x10] sm:$0xff]
    %v18 = vld [vmem:[%s0 + $0x18] sm:$0xff]
    %v19 = vld [vmem:[%s1] sm:$0xff]
    %v20 = vld [vmem:[%s1 + $0x8] sm:$0xff]
    %v21 = vld [vmem:[%s1 + $0x10] sm:$0xff]
    %v22 = vld [vmem:[%s1 + $0x18] sm:$0xff]
    %v23 = vld [vmem:[%s1 + $0x20] sm:$0xff]
    %v24 = vld [vmem:[%s1 + $0x28] sm:$0xff]
    %v25 = vld [vmem:[%s1 + $0x30] sm:$0xff]
    %v26 = vld [vmem:[%s1 + $0x38] sm:$0xff]
    %v27 = vld [vmem:[%s1 + $0x40] sm:$0xff]
    %v28 = vld [vmem:[%s1 + $0x48] sm:$0xff]
    %v29 = vld [vmem:[%s1 + $0x50] sm:$0xff]
    %v30 = vld [vmem:[%s1 + $0x58] sm:$0xff]
    %v31 = vld [vmem:[%s1 + $0x60] sm:$0xff]
    %v32 = vld [vmem:[%s1 + $0x68] sm:$0xff]
    %v33 = vld [vmem:[%s1 + $0x70] sm:$0xff]
    %v34 = vld [vmem:[%s1 + $0x78] sm:$0xff]
    %v35 = vld [vmem:[%s1 + $0x80] sm:$0xff]
    %v36 = vld [vmem:[%s1 + $0x88] sm:$0xff]
    %v37 = vld [vmem:[%s1 + $0x90] sm:$0xff]
    %v38 = vld [vmem:[%s1 + $0x98] sm:$0xff]
    %v39 = vld [vmem:[%s1 + $0xa0] sm:$0xff]
    %v40 = vld [vmem:[%s1 + $0xa8] sm:$0xff]
    %v41 = vld [vmem:[%s1 + $0xb0] sm:$0xff]
    %v42 = vld [vmem:[%s1 + $0xb8] sm:$0xff]
    %v43 = vld [vmem:[%s1 + $0xc0] sm:$0xff]
    %v44 = vld [vmem:[%s1 + $0xc8] sm:$0xff]
    %v45 = vld [vmem:[%s1 + $0xd0] sm:$0xff]
    %v46 = vld [vmem:[%s1 + $0xd8] sm:$0xff]
    %v47 = vld [vmem:[%s1 + $0xe0] sm:$0xff]
    %v48 = vld [vmem:[%s1 + $0xe8] sm:$0xff]
    %v49 = vld [vmem:[%s1 + $0xf0] sm:$0xff]
    %v50 = vld [vmem:[%s1 + $0xf8] sm:$0xff]
    %v51 = vld [vmem:[%s1 + $0x100] sm:$0xff]
    %v52 = vld [vmem:[%s1 + $0x108] sm:$0xff]
    %v53 = vld [vmem:[%s1 + $0x110] sm:$0xff]
    %v54 = vld [vmem:[%s1 + $0x118] sm:$0xff]
    %v55 = vld [vmem:[%s1 + $0x120] sm:$0xff]
    %v56 = vld [vmem:[%s1 + $0x128] sm:$0xff]
    %v57 = vld [vmem:[%s1 + $0x130] sm:$0xff]
    %v58 = vld [vmem:[%s1 + $0x138] sm:$0xff]
    %v59 = vld [vmem:[%s1 + $0x140] sm:$0xff]
    %v60 = vld [vmem:[%s1 + $0x148] sm:$0xff]
    %v61 = vld [vmem:[%s1 + $0x150] sm:$0xff]
    %v62 = vld [vmem:[%s1 + $0x158] sm:$0xff]
    %v63 = vld [vmem:[%s1 + $0x160] sm:$0xff]
    %v64 = vld [vmem:[%s1 + $0x168] sm:$0xff]
    %v65 = vld [vmem:[%s1 + $0x170] sm:$0xff]
    %v66 = vld [vmem:[%s1 + $0x178] sm:$0xff]
    %v67 = vld [vmem:[%s1 + $0x180] sm:$0xff]
    %v68 = vld [vmem:[%s1 + $0x188] sm:$0xff]
    %v69 = vld [vmem:[%s1 + $0x190] sm:$0xff]
    %v70 = vld [vmem:[%s1 + $0x198] sm:$0xff]
    %v71 = vld [vmem:[%s1 + $0x1a0] sm:$0xff]
    %v72 = vld [vmem:[%s1 + $0x1a8] sm:$0xff]
    %v73 = vld [vmem:[%s1 + $0x1b0] sm:$0xff]
    %v74 = vld [vmem:[%s1 + $0x1b8] sm:$0xff]
    %v75 = vld [vmem:[%s1 + $0x1c0] sm:$0xff]
    %v76 = vld [vmem:[%s1 + $0x1c8] sm:$0xff]
    %v77 = vld [vmem:[%s1 + $0x1d0] sm:$0xff]
    %v78 = vld [vmem:[%s1 + $0x1d8] sm:$0xff]
    %v79 = vld [vmem:[%s1 + $0x1e0] sm:$0xff]
    %v80 = vld [vmem:[%s1 + $0x1e8] sm:$0xff]
    %v81 = vld [vmem:[%s1 + $0x1f0] sm:$0xff]
    %v82 = vld [vmem:[%s1 + $0x1f8] sm:$0xff]
    %v83 = vld [vmem:[%s1 + $0x200] sm:$0xff]
    %v84 = vld [vmem:[%s1 + $0x208] sm:$0xff]
    %v85 = vld [vmem:[%s1 + $0x210] sm:$0xff]
    %v86 = vld [vmem:[%s1 + $0x218] sm:$0xff]
    %v87 = vld [vmem:[%s1 + $0x220] sm:$0xff]
    %v88 = vld [vmem:[%s1 + $0x228] sm:$0xff]
    %v89 = vld [vmem:[%s1 + $0x230] sm:$0xff]
    %v90 = vld [vmem:[%s1 + $0x238] sm:$0xff]
    %v91 = vld [vmem:[%s1 + $0x240] sm:$0xff]
    %v92 = vld [vmem:[%s1 + $0x248] sm:$0xff]
    %v93 = vld [vmem:[%s1 + $0x250] sm:$0xff]
    %v94 = vld [vmem:[%s1 + $0x258] sm:$0xff]
    %v95 = vld [vmem:[%s1 + $0x260] sm:$0xff]
    %v96 = vld [vmem:[%s1 + $0x268] sm:$0xff]
    %v97 = vld [vmem:[%s1 + $0x270] sm:$0xff]
    %v98 = vld [vmem:[%s1 + $0x278] sm:$0xff]
    %v99 = vld [vmem:[%s1 + $0x280] sm:$0xff]
    %v100 = vld [vmem:[%s1 + $0x288] sm:$0xff]
    %v101 = vld [vmem:[%s1 + $0x290] sm:$0xff]
    %v102 = vld [vmem:[%s1 + $0x298] sm:$0xff]
    %v103 = vld [vmem:[%s1 + $0x2a0] sm:$0xff]
    %v104 = vld [vmem:[%s1 + $0x2a8] sm:$0xff]
    %v105 = vld [vmem:[%s1 + $0x2b0] sm:$0xff]
    %v106 = vld [vmem:[%s1 + $0x2b8] sm:$0xff]
    %v107 = vld [vmem:[%s1 + $0x2c0] sm:$0xff]
    %v108 = vld [vmem:[%s1 + $0x2c8] sm:$0xff]
    %v109 = vld [vmem:[%s1 + $0x2d0] sm:$0xff]
    %v110 = vld [vmem:[%s1 + $0x2d8] sm:$0xff]
    %v111 = vld [vmem:[%s1 + $0x2e0] sm:$0xff]
    %v112 = vld [vmem:[%s1 + $0x2e8] sm:$0xff]
    %v113 = vld [vmem:[%s1 + $0x2f0] sm:$0xff]
    %v114 = vld [vmem:[%s1 + $0x2f8] sm:$0xff]
    %v115 = vld [vmem:[%s1 + $0x300] sm:$0xff]
    %v116 = vld [vmem:[%s1 + $0x308] sm:$0xff]
    %v117 = vld [vmem:[%s1 + $0x310] sm:$0xff]
    %v118 = vld [vmem:[%s1 + $0x318] sm:$0xff]
    %v119 = vld [vmem:[%s1 + $0x320] sm:$0xff]
    %v120 = vld [vmem:[%s1 + $0x328] sm:$0xff]
    %v121 = vld [vmem:[%s1 + $0x330] sm:$0xff]
    %v122 = vld [vmem:[%s1 + $0x338] sm:$0xff]
    %v123 = vld [vmem:[%s1 + $0x340] sm:$0xff]
    %v124 = vld [vmem:[%s1 + $0x348] sm:$0xff]
    %v125 = vld [vmem:[%s1 + $0x350] sm:$0xff]
    %v126 = vld [vmem:[%s1 + $0x358] sm:$0xff]
    %v127 = vld [vmem:[%s1 + $0x360] sm:$0xff]
    %v128 = vld [vmem:[%s1 + $0x368] sm:$0xff]
    %v129 = vld [vmem:[%s1 + $0x370] sm:$0xff]
    %v130 = vld [vmem:[%s1 + $0x378] sm:$0xff]
    %v131 = vld [vmem:[%s1 + $0x380] sm:$0xff]
    %v132 = vld [vmem:[%s1 + $0x388] sm:$0xff]
    %v133 = vld [vmem:[%s1 + $0x390] sm:$0xff]
    %v134 = vld [vmem:[%s1 + $0x398] sm:$0xff]
    %v135 = vld [vmem:[%s1 + $0x3a0] sm:$0xff]
    %v136 = vld [vmem:[%s1 + $0x3a8] sm:$0xff]
    %v137 = vld [vmem:[%s1 + $0x3b0] sm:$0xff]
    %v138 = vld [vmem:[%s1 + $0x3b8] sm:$0xff]
    %v139 = vld [vmem:[%s1 + $0x3c0] sm:$0xff]
    %v140 = vld [vmem:[%s1 + $0x3c8] sm:$0xff]
    %v141 = vld [vmem:[%s1 + $0x3d0] sm:$0xff]
    %v142 = vld [vmem:[%s1 + $0x3d8] sm:$0xff]
    %v143 = vld [vmem:[%s1 + $0x3e0] sm:$0xff]
    %v144 = vld [vmem:[%s1 + $0x3e8] sm:$0xff]
    %v145 = vld [vmem:[%s1 + $0x3f0] sm:$0xff]
    %v146 = vld [vmem:[%s1 + $0x3f8] sm:$0xff]
    %v147 = vld [vmem:[%s1 + $0x400] sm:$0xff]
    %v148 = vld [vmem:[%s1 + $0x408] sm:$0xff]
    %v149 = vld [vmem:[%s1 + $0x410] sm:$0xff]
    %v150 = vld [vmem:[%s1 + $0x418] sm:$0xff]
    %v151 = vld [vmem:[%s1 + $0x420] sm:$0xff]
    %v152 = vld [vmem:[%s1 + $0x428] sm:$0xff]
    %v153 = vld [vmem:[%s1 + $0x430] sm:$0xff]
    %v154 = vld [vmem:[%s1 + $0x438] sm:$0xff]
    %v155 = vld [vmem:[%s1 + $0x440] sm:$0xff]
    %v156 = vld [vmem:[%s1 + $0x448] sm:$0xff]
    %v157 = vld [vmem:[%s1 + $0x450] sm:$0xff]
    %v158 = vld [vmem:[%s1 + $0x458] sm:$0xff]
    %v159 = vld [vmem:[%s1 + $0x460] sm:$0xff]
    %v160 = vld [vmem:[%s1 + $0x468] sm:$0xff]
    %v161 = vld [vmem:[%s1 + $0x470] sm:$0xff]
    %v162 = vld [vmem:[%s1 + $0x478] sm:$0xff]
    %v163 = vld [vmem:[%s1 + $0x480] sm:$0xff]
    %v164 = vld [vmem:[%s1 + $0x488] sm:$0xff]
    %v165 = vld [vmem:[%s1 + $0x490] sm:$0xff]
    %v166 = vld [vmem:[%s1 + $0x498] sm:$0xff]
    %v167 = vld [vmem:[%s1 + $0x4a0] sm:$0xff]
    %v168 = vld [vmem:[%s1 + $0x4a8] sm:$0xff]
    %v169 = vld [vmem:[%s1 + $0x4b0] sm:$0xff]
    %v170 = vld [vmem:[%s1 + $0x4b8] sm:$0xff]
    %v171 = vld [vmem:[%s1 + $0x4c0] sm:$0xff]
    %v172 = vld [vmem:[%s1 + $0x4c8] sm:$0xff]
    %v173 = vld [vmem:[%s1 + $0x4d0] sm:$0xff]
    %v174 = vld [vmem:[%s1 + $0x4d8] sm:$0xff]
    %v175 = vld [vmem:[%s1 + $0x4e0] sm:$0xff]
    %v176 = vld [vmem:[%s1 + $0x4e8] sm:$0xff]
    %v177 = vld [vmem:[%s1 + $0x4f0] sm:$0xff]
    %v178 = vld [vmem:[%s1 + $0x4f8] sm:$0xff]
    %v179 = vld [vmem:[%s1 + $0x500] sm:$0xff]
    %v180 = vld [vmem:[%s1 + $0x508] sm:$0xff]
    %v181 = vld [vmem:[%s1 + $0x510] sm:$0xff]
    %v182 = vld [vmem:[%s1 + $0x518] sm:$0xff]
    %v183 = vld [vmem:[%s1 + $0x520] sm:$0xff]
    %v184 = vld [vmem:[%s1 + $0x528] sm:$0xff]
    %v185 = vld [vmem:[%s1 + $0x530] sm:$0xff]
    %v186 = vld [vmem:[%s1 + $0x538] sm:$0xff]
    %v187 = vld [vmem:[%s1 + $0x540] sm:$0xff]
    %v188 = vld [vmem:[%s1 + $0x548] sm:$0xff]
    %v189 = vld [vmem:[%s1 + $0x550] sm:$0xff]
    %v190 = vld [vmem:[%s1 + $0x558] sm:$0xff]
    %v191 = vld [vmem:[%s1 + $0x560] sm:$0xff]
    %v192 = vld [vmem:[%s1 + $0x568] sm:$0xff]
    %v193 = vld [vmem:[%s1 + $0x570] sm:$0xff]
    %v194 = vld [vmem:[%s1 + $0x578] sm:$0xff]
    %v195 = vld [vmem:[%s1 + $0x580] sm:$0xff]
    %v196 = vld [vmem:[%s1 + $0x588] sm:$0xff]
    %v197 = vld [vmem:[%s1 + $0x590] sm:$0xff]
    %v198 = vld [vmem:[%s1 + $0x598] sm:$0xff]
    %v199 = vld [vmem:[%s1 + $0x5a0] sm:$0xff]
    %v200 = vld [vmem:[%s1 + $0x5a8] sm:$0xff]
    %v201 = vld [vmem:[%s1 + $0x5b0] sm:$0xff]
    %v202 = vld [vmem:[%s1 + $0x5b8] sm:$0xff]
    %v203 = vld [vmem:[%s1 + $0x5c0] sm:$0xff]
    %v204 = vld [vmem:[%s1 + $0x5c8] sm:$0xff]
    %v205 = vld [vmem:[%s1 + $0x5d0] sm:$0xff]
    %v206 = vld [vmem:[%s1 + $0x5d8] sm:$0xff]
    %v207 = vld [vmem:[%s1 + $0x5e0] sm:$0xff]
    %v208 = vld [vmem:[%s1 + $0x5e8] sm:$0xff]
    %v209 = vld [vmem:[%s1 + $0x5f0] sm:$0xff]
    %v210 = vld [vmem:[%s1 + $0x5f8] sm:$0xff]
    %v211 = vld [vmem:[%s1 + $0x600] sm:$0xff]
    %v212 = vld [vmem:[%s1 + $0x608] sm:$0xff]
    %v213 = vld [vmem:[%s1 + $0x610] sm:$0xff]
    %v214 = vld [vmem:[%s1 + $0x618] sm:$0xff]
    %v215 = vld [vmem:[%s1 + $0x620] sm:$0xff]
    %v216 = vld [vmem:[%s1 + $0x628] sm:$0xff]
    %v217 = vld [vmem:[%s1 + $0x630] sm:$0xff]
    %v218 = vld [vmem:[%s1 + $0x638] sm:$0xff]
    %v219 = vld [vmem:[%s1 + $0x640] sm:$0xff]
    %v220 = vld [vmem:[%s1 + $0x648] sm:$0xff]
    %v221 = vld [vmem:[%s1 + $0x650] sm:$0xff]
    %v222 = vld [vmem:[%s1 + $0x658] sm:$0xff]
    %v223 = vld [vmem:[%s1 + $0x660] sm:$0xff]
    %v224 = vld [vmem:[%s1 + $0x668] sm:$0xff]
    %v225 = vld [vmem:[%s1 + $0x670] sm:$0xff]
    %v226 = vld [vmem:[%s1 + $0x678] sm:$0xff]
    %v227 = vld [vmem:[%s1 + $0x680] sm:$0xff]
    %v228 = vld [vmem:[%s1 + $0x688] sm:$0xff]
    %v229 = vld [vmem:[%s1 + $0x690] sm:$0xff]
    %v230 = vld [vmem:[%s1 + $0x698] sm:$0xff]
    %v231 = vld [vmem:[%s1 + $0x6a0] sm:$0xff]
    %v232 = vld [vmem:[%s1 + $0x6a8] sm:$0xff]
    %v233 = vld [vmem:[%s1 + $0x6b0] sm:$0xff]
    %v234 = vld [vmem:[%s1 + $0x6b8] sm:$0xff]
    %v235 = vld [vmem:[%s1 + $0x6c0] sm:$0xff]
    %v236 = vld [vmem:[%s1 + $0x6c8] sm:$0xff]
    %v237 = vld [vmem:[%s1 + $0x6d0] sm:$0xff]
    %v238 = vld [vmem:[%s1 + $0x6d8] sm:$0xff]
    %v239 = vld [vmem:[%s1 + $0x6e0] sm:$0xff]
    %v240 = vld [vmem:[%s1 + $0x6e8] sm:$0xff]
    %v241 = vld [vmem:[%s1 + $0x6f0] sm:$0xff]
    %v242 = vld [vmem:[%s1 + $0x6f8] sm:$0xff]
    %v243 = vld [vmem:[%s1 + $0x700] sm:$0xff]
    %v244 = vld [vmem:[%s1 + $0x708] sm:$0xff]
    %v245 = vld [vmem:[%s1 + $0x710] sm:$0xff]
    %v246 = vld [vmem:[%s1 + $0x718] sm:$0xff]
    %v247 = vld [vmem:[%s1 + $0x720] sm:$0xff]
    %v248 = vld [vmem:[%s1 + $0x728] sm:$0xff]
    %v249 = vld [vmem:[%s1 + $0x730] sm:$0xff]
    %v250 = vld [vmem:[%s1 + $0x738] sm:$0xff]
    %v251 = vld [vmem:[%s1 + $0x740] sm:$0xff]
    %v252 = vld [vmem:[%s1 + $0x748] sm:$0xff]
    %v253 = vld [vmem:[%s1 + $0x750] sm:$0xff]
    %v254 = vld [vmem:[%s1 + $0x758] sm:$0xff]
    %v255 = vld [vmem:[%s1 + $0x760] sm:$0xff]
    %v256 = vld [vmem:[%s1 + $0x768] sm:$0xff]
    %v257 = vld [vmem:[%s1 + $0x770] sm:$0xff]
    %v258 = vld [vmem:[%s1 + $0x778] sm:$0xff]
    %v259 = vld [vmem:[%s1 + $0x780] sm:$0xff]
    %v260 = vld [vmem:[%s1 + $0x788] sm:$0xff]
    %v261 = vld [vmem:[%s1 + $0x790] sm:$0xff]
    %v262 = vld [vmem:[%s1 + $0x798] sm:$0xff]
    %v263 = vld [vmem:[%s1 + $0x7a0] sm:$0xff]
    %v264 = vld [vmem:[%s1 + $0x7a8] sm:$0xff]
    %v265 = vld [vmem:[%s1 + $0x7b0] sm:$0xff]
    %v266 = vld [vmem:[%s1 + $0x7b8] sm:$0xff]
    %v267 = vld [vmem:[%s1 + $0x7c0] sm:$0xff]
    %v268 = vld [vmem:[%s1 + $0x7c8] sm:$0xff]
    %v269 = vld [vmem:[%s1 + $0x7d0] sm:$0xff]
    %v270 = vld [vmem:[%s1 + $0x7d8] sm:$0xff]
    %v271 = vld [vmem:[%s1 + $0x7e0] sm:$0xff]
    %v272 = vld [vmem:[%s1 + $0x7e8] sm:$0xff]
    %v273 = vld [vmem:[%s1 + $0x7f0] sm:$0xff]
    %v274 = vld [vmem:[%s1 + $0x7f8] sm:$0xff]
    %v275 = vld [vmem:[%s2] sm:$0x1]
    %v277 = vlaneseq
    %v278 = vshrl.u32 %v277, 7
    %v279 = vsub.s32 0, %v278
    %v280 = vrot.slane %v275, %v279
    %v286 = vcombine.high %v15, %v15
    %v288 = vunpack.c.l.s4 1983009808
    %v289 = vunpack.c.0.s8 %v288
    %v290 = vlaneseq
    %v291 = vshrl.u32 %v290, 7
    %v292 = vsub.s32 %v289, %v291
    %v293 = vrot.slane %v15, %v292
    %v295 = vunpack.c.l.s4 1983009808
    %v296 = vunpack.c.0.s8 %v295
    %v297 = vlaneseq
    %v298 = vshrl.u32 %v297, 7
    %v299 = vsub.s32 %v296, %v298
    %v300 = vrot.slane %v286, %v299
    %v301 = vcombine.high %v293, %v293
    %v302 = vcombine.high %v300, %v300
    %v303 = vcombine.high %v16, %v16
    %v305 = vunpack.c.l.s4 1983009808
    %v306 = vunpack.c.0.s8 %v305
    %v307 = vlaneseq
    %v308 = vshrl.u32 %v307, 7
    %v309 = vsub.s32 %v306, %v308
    %v310 = vrot.slane %v16, %v309
    %v312 = vunpack.c.l.s4 1983009808
    %v313 = vunpack.c.0.s8 %v312
    %v314 = vlaneseq
    %v315 = vshrl.u32 %v314, 7
    %v316 = vsub.s32 %v313, %v315
    %v317 = vrot.slane %v303, %v316
    %v318 = vcombine.high %v310, %v310
    %v319 = vcombine.high %v317, %v317
    %v320 = vcombine.high %v17, %v17
    %v322 = vunpack.c.l.s4 1983009808
    %v323 = vunpack.c.0.s8 %v322
    %v324 = vlaneseq
    %v325 = vshrl.u32 %v324, 7
    %v326 = vsub.s32 %v323, %v325
    %v327 = vrot.slane %v17, %v326
    %v329 = vunpack.c.l.s4 1983009808
    %v330 = vunpack.c.0.s8 %v329
    %v331 = vlaneseq
    %v332 = vshrl.u32 %v331, 7
    %v333 = vsub.s32 %v330, %v332
    %v334 = vrot.slane %v320, %v333
    %v335 = vcombine.high %v327, %v327
    %v336 = vcombine.high %v334, %v334
    %v337 = vcombine.high %v18, %v18
    %v339 = vunpack.c.l.s4 1983009808
    %v340 = vunpack.c.0.s8 %v339
    %v341 = vlaneseq
    %v342 = vshrl.u32 %v341, 7
    %v343 = vsub.s32 %v340, %v342
    %v344 = vrot.slane %v18, %v343
    %v346 = vunpack.c.l.s4 1983009808
    %v347 = vunpack.c.0.s8 %v346
    %v348 = vlaneseq
    %v349 = vshrl.u32 %v348, 7
    %v350 = vsub.s32 %v347, %v349
    %v351 = vrot.slane %v337, %v350
    %v352 = vcombine.high %v344, %v344
    %v353 = vcombine.high %v351, %v351
    %370 = vmatprep.subr.mxu0 0.0
    %371 = vmatpush1.msra.mxu0 %v19
    %372 = vmatprep.subr.mxu0 0.0
    %373 = vmatpush1.msra.mxu0 %v20
    %374 = vmatprep.subr.mxu0 0.0
    %375 = vmatpush1.msra.mxu0 %v21
    %376 = vmatprep.subr.mxu0 0.0
    %377 = vmatpush1.msra.mxu0 %v22
    %378 = vmatprep.subr.mxu0 0.0
    %379 = vmatpush1.msra.mxu0 %v23
    %380 = vmatprep.subr.mxu0 0.0
    %381 = vmatpush1.msra.mxu0 %v24
    %382 = vmatprep.subr.mxu0 0.0
    %383 = vmatpush1.msra.mxu0 %v25
    %384 = vmatprep.subr.mxu0 0.0
    %385 = vmatpush1.msra.mxu0 %v26
    %386 = vmatprep.subr.mxu0 0.0
    %387 = vmatpush1.msra.mxu0 %v27
    %388 = vmatprep.subr.mxu0 0.0
    %389 = vmatpush1.msra.mxu0 %v28
    %390 = vmatprep.subr.mxu0 0.0
    %391 = vmatpush1.msra.mxu0 %v29
    %392 = vmatprep.subr.mxu0 0.0
    %393 = vmatpush1.msra.mxu0 %v30
    %394 = vmatprep.subr.mxu0 0.0
    %395 = vmatpush1.msra.mxu0 %v31
    %396 = vmatprep.subr.mxu0 0.0
    %397 = vmatpush1.msra.mxu0 %v32
    %398 = vmatprep.subr.mxu0 0.0
    %399 = vmatpush1.msra.mxu0 %v33
    %400 = vmatprep.subr.mxu0 0.0
    %401 = vmatpush1.msra.mxu0 %v34
    %402 = vmatprep.subr.mxu0 0.0
    %403 = vmatpush1.msra.mxu0 %v35
    %404 = vmatprep.subr.mxu0 0.0
    %405 = vmatpush1.msra.mxu0 %v36
    %406 = vmatprep.subr.mxu0 0.0
    %407 = vmatpush1.msra.mxu0 %v37
    %408 = vmatprep.subr.mxu0 0.0
    %409 = vmatpush1.msra.mxu0 %v38
    %410 = vmatprep.subr.mxu0 0.0
    %411 = vmatpush1.msra.mxu0 %v39
    %412 = vmatprep.subr.mxu0 0.0
    %413 = vmatpush1.msra.mxu0 %v40
    %414 = vmatprep.subr.mxu0 0.0
    %415 = vmatpush1.msra.mxu0 %v41
    %416 = vmatprep.subr.mxu0 0.0
    %417 = vmatpush1.msra.mxu0 %v42
    %418 = vmatprep.subr.mxu0 0.0
    %419 = vmatpush1.msra.mxu0 %v43
    %420 = vmatprep.subr.mxu0 0.0
    %421 = vmatpush1.msra.mxu0 %v44
    %422 = vmatprep.subr.mxu0 0.0
    %423 = vmatpush1.msra.mxu0 %v45
    %424 = vmatprep.subr.mxu0 0.0
    %425 = vmatpush1.msra.mxu0 %v46
    %426 = vmatprep.subr.mxu0 0.0
    %427 = vmatpush1.msra.mxu0 %v47
    %428 = vmatprep.subr.mxu0 0.0
    %429 = vmatpush1.msra.mxu0 %v48
    %430 = vmatprep.subr.mxu0 0.0
    %431 = vmatpush1.msra.mxu0 %v49
    %432 = vmatprep.subr.mxu0 0.0
    %433 = vmatpush1.msra.mxu0 %v50
    %434 = vmatprep.mubr.f32.mxu0 %v301
    %435 = vmatmul.mubr.f32.gmra.mrb[0].mxu0 %v293
    %v436 = vpop.f32.mrb[0].mxu0
    %v437 = vadd.f32 %v280, %v436
    %v438 = vpop.f32.mrb[0].mxu0
    %439 = vdwg.mxu0
    %440 = vmatprep.subr.mxu0 0.0
    %441 = vmatpush1.msra.mxu0 %v51
    %442 = vmatprep.subr.mxu0 0.0
    %443 = vmatpush1.msra.mxu0 %v52
    %444 = vmatprep.subr.mxu0 0.0
    %445 = vmatpush1.msra.mxu0 %v53
    %446 = vmatprep.subr.mxu0 0.0
    %447 = vmatpush1.msra.mxu0 %v54
    %448 = vmatprep.subr.mxu0 0.0
    %449 = vmatpush1.msra.mxu0 %v55
    %450 = vmatprep.subr.mxu0 0.0
    %451 = vmatpush1.msra.mxu0 %v56
    %452 = vmatprep.subr.mxu0 0.0
    %453 = vmatpush1.msra.mxu0 %v57
    %454 = vmatprep.subr.mxu0 0.0
    %455 = vmatpush1.msra.mxu0 %v58
    %456 = vmatprep.subr.mxu0 0.0
    %457 = vmatpush1.msra.mxu0 %v59
    %458 = vmatprep.subr.mxu0 0.0
    %459 = vmatpush1.msra.mxu0 %v60
    %460 = vmatprep.subr.mxu0 0.0
    %461 = vmatpush1.msra.mxu0 %v61
    %462 = vmatprep.subr.mxu0 0.0
    %463 = vmatpush1.msra.mxu0 %v62
    %464 = vmatprep.subr.mxu0 0.0
    %465 = vmatpush1.msra.mxu0 %v63
    %466 = vmatprep.subr.mxu0 0.0
    %467 = vmatpush1.msra.mxu0 %v64
    %468 = vmatprep.subr.mxu0 0.0
    %469 = vmatpush1.msra.mxu0 %v65
    %470 = vmatprep.subr.mxu0 0.0
    %471 = vmatpush1.msra.mxu0 %v66
    %472 = vmatprep.subr.mxu0 0.0
    %473 = vmatpush1.msra.mxu0 %v67
    %474 = vmatprep.subr.mxu0 0.0
    %475 = vmatpush1.msra.mxu0 %v68
    %476 = vmatprep.subr.mxu0 0.0
    %477 = vmatpush1.msra.mxu0 %v69
    %478 = vmatprep.subr.mxu0 0.0
    %479 = vmatpush1.msra.mxu0 %v70
    %480 = vmatprep.subr.mxu0 0.0
    %481 = vmatpush1.msra.mxu0 %v71
    %482 = vmatprep.subr.mxu0 0.0
    %483 = vmatpush1.msra.mxu0 %v72
    %484 = vmatprep.subr.mxu0 0.0
    %485 = vmatpush1.msra.mxu0 %v73
    %486 = vmatprep.subr.mxu0 0.0
    %487 = vmatpush1.msra.mxu0 %v74
    %488 = vmatprep.subr.mxu0 0.0
    %489 = vmatpush1.msra.mxu0 %v75
    %490 = vmatprep.subr.mxu0 0.0
    %491 = vmatpush1.msra.mxu0 %v76
    %492 = vmatprep.subr.mxu0 0.0
    %493 = vmatpush1.msra.mxu0 %v77
    %494 = vmatprep.subr.mxu0 0.0
    %495 = vmatpush1.msra.mxu0 %v78
    %496 = vmatprep.subr.mxu0 0.0
    %497 = vmatpush1.msra.mxu0 %v79
    %498 = vmatprep.subr.mxu0 0.0
    %499 = vmatpush1.msra.mxu0 %v80
    %500 = vmatprep.subr.mxu0 0.0
    %501 = vmatpush1.msra.mxu0 %v81
    %502 = vmatprep.subr.mxu0 0.0
    %503 = vmatpush1.msra.mxu0 %v82
    %504 = vmatprep.mubr.f32.mxu0 %v302
    %505 = vmatmul.mubr.f32.gmra.mrb[0].mxu0 %v300
    %v506 = vpop.f32.mrb[0].mxu0
    %v507 = vadd.f32 %v437, %v506
    %v508 = vpop.f32.mrb[0].mxu0
    %509 = vdwg.mxu0
    %510 = vmatprep.subr.mxu0 0.0
    %511 = vmatpush1.msra.mxu0 %v83
    %512 = vmatprep.subr.mxu0 0.0
    %513 = vmatpush1.msra.mxu0 %v84
    %514 = vmatprep.subr.mxu0 0.0
    %515 = vmatpush1.msra.mxu0 %v85
    %516 = vmatprep.subr.mxu0 0.0
    %517 = vmatpush1.msra.mxu0 %v86
    %518 = vmatprep.subr.mxu0 0.0
    %519 = vmatpush1.msra.mxu0 %v87
    %520 = vmatprep.subr.mxu0 0.0
    %521 = vmatpush1.msra.mxu0 %v88
    %522 = vmatprep.subr.mxu0 0.0
    %523 = vmatpush1.msra.mxu0 %v89
    %524 = vmatprep.subr.mxu0 0.0
    %525 = vmatpush1.msra.mxu0 %v90
    %526 = vmatprep.subr.mxu0 0.0
    %527 = vmatpush1.msra.mxu0 %v91
    %528 = vmatprep.subr.mxu0 0.0
    %529 = vmatpush1.msra.mxu0 %v92
    %530 = vmatprep.subr.mxu0 0.0
    %531 = vmatpush1.msra.mxu0 %v93
    %532 = vmatprep.subr.mxu0 0.0
    %533 = vmatpush1.msra.mxu0 %v94
    %534 = vmatprep.subr.mxu0 0.0
    %535 = vmatpush1.msra.mxu0 %v95
    %536 = vmatprep.subr.mxu0 0.0
    %537 = vmatpush1.msra.mxu0 %v96
    %538 = vmatprep.subr.mxu0 0.0
    %539 = vmatpush1.msra.mxu0 %v97
    %540 = vmatprep.subr.mxu0 0.0
    %541 = vmatpush1.msra.mxu0 %v98
    %542 = vmatprep.subr.mxu0 0.0
    %543 = vmatpush1.msra.mxu0 %v99
    %544 = vmatprep.subr.mxu0 0.0
    %545 = vmatpush1.msra.mxu0 %v100
    %546 = vmatprep.subr.mxu0 0.0
    %547 = vmatpush1.msra.mxu0 %v101
    %548 = vmatprep.subr.mxu0 0.0
    %549 = vmatpush1.msra.mxu0 %v102
    %550 = vmatprep.subr.mxu0 0.0
    %551 = vmatpush1.msra.mxu0 %v103
    %552 = vmatprep.subr.mxu0 0.0
    %553 = vmatpush1.msra.mxu0 %v104
    %554 = vmatprep.subr.mxu0 0.0
    %555 = vmatpush1.msra.mxu0 %v105
    %556 = vmatprep.subr.mxu0 0.0
    %557 = vmatpush1.msra.mxu0 %v106
    %558 = vmatprep.subr.mxu0 0.0
    %559 = vmatpush1.msra.mxu0 %v107
    %560 = vmatprep.subr.mxu0 0.0
    %561 = vmatpush1.msra.mxu0 %v108
    %562 = vmatprep.subr.mxu0 0.0
    %563 = vmatpush1.msra.mxu0 %v109
    %564 = vmatprep.subr.mxu0 0.0
    %565 = vmatpush1.msra.mxu0 %v110
    %566 = vmatprep.subr.mxu0 0.0
    %567 = vmatpush1.msra.mxu0 %v111
    %568 = vmatprep.subr.mxu0 0.0
    %569 = vmatpush1.msra.mxu0 %v112
    %570 = vmatprep.subr.mxu0 0.0
    %571 = vmatpush1.msra.mxu0 %v113
    %572 = vmatprep.subr.mxu0 0.0
    %573 = vmatpush1.msra.mxu0 %v114
    %574 = vmatprep.mubr.f32.mxu0 %v318
    %575 = vmatmul.mubr.f32.gmra.mrb[0].mxu0 %v310
    %v576 = vpop.f32.mrb[0].mxu0
    %v577 = vadd.f32 %v507, %v576
    %v578 = vpop.f32.mrb[0].mxu0
    %579 = vdwg.mxu0
    %580 = vmatprep.subr.mxu0 0.0
    %581 = vmatpush1.msra.mxu0 %v115
    %582 = vmatprep.subr.mxu0 0.0
    %583 = vmatpush1.msra.mxu0 %v116
    %584 = vmatprep.subr.mxu0 0.0
    %585 = vmatpush1.msra.mxu0 %v117
    %586 = vmatprep.subr.mxu0 0.0
    %587 = vmatpush1.msra.mxu0 %v118
    %588 = vmatprep.subr.mxu0 0.0
    %589 = vmatpush1.msra.mxu0 %v119
    %590 = vmatprep.subr.mxu0 0.0
    %591 = vmatpush1.msra.mxu0 %v120
    %592 = vmatprep.subr.mxu0 0.0
    %593 = vmatpush1.msra.mxu0 %v121
    %594 = vmatprep.subr.mxu0 0.0
    %595 = vmatpush1.msra.mxu0 %v122
    %596 = vmatprep.subr.mxu0 0.0
    %597 = vmatpush1.msra.mxu0 %v123
    %598 = vmatprep.subr.mxu0 0.0
    %599 = vmatpush1.msra.mxu0 %v124
    %600 = vmatprep.subr.mxu0 0.0
    %601 = vmatpush1.msra.mxu0 %v125
    %602 = vmatprep.subr.mxu0 0.0
    %603 = vmatpush1.msra.mxu0 %v126
    %604 = vmatprep.subr.mxu0 0.0
    %605 = vmatpush1.msra.mxu0 %v127
    %606 = vmatprep.subr.mxu0 0.0
    %607 = vmatpush1.msra.mxu0 %v128
    %608 = vmatprep.subr.mxu0 0.0
    %609 = vmatpush1.msra.mxu0 %v129
    %610 = vmatprep.subr.mxu0 0.0
    %611 = vmatpush1.msra.mxu0 %v130
    %612 = vmatprep.subr.mxu0 0.0
    %613 = vmatpush1.msra.mxu0 %v131
    %614 = vmatprep.subr.mxu0 0.0
    %615 = vmatpush1.msra.mxu0 %v132
    %616 = vmatprep.subr.mxu0 0.0
    %617 = vmatpush1.msra.mxu0 %v133
    %618 = vmatprep.subr.mxu0 0.0
    %619 = vmatpush1.msra.mxu0 %v134
    %620 = vmatprep.subr.mxu0 0.0
    %621 = vmatpush1.msra.mxu0 %v135
    %622 = vmatprep.subr.mxu0 0.0
    %623 = vmatpush1.msra.mxu0 %v136
    %624 = vmatprep.subr.mxu0 0.0
    %625 = vmatpush1.msra.mxu0 %v137
    %626 = vmatprep.subr.mxu0 0.0
    %627 = vmatpush1.msra.mxu0 %v138
    %628 = vmatprep.subr.mxu0 0.0
    %629 = vmatpush1.msra.mxu0 %v139
    %630 = vmatprep.subr.mxu0 0.0
    %631 = vmatpush1.msra.mxu0 %v140
    %632 = vmatprep.subr.mxu0 0.0
    %633 = vmatpush1.msra.mxu0 %v141
    %634 = vmatprep.subr.mxu0 0.0
    %635 = vmatpush1.msra.mxu0 %v142
    %636 = vmatprep.subr.mxu0 0.0
    %637 = vmatpush1.msra.mxu0 %v143
    %638 = vmatprep.subr.mxu0 0.0
    %639 = vmatpush1.msra.mxu0 %v144
    %640 = vmatprep.subr.mxu0 0.0
    %641 = vmatpush1.msra.mxu0 %v145
    %642 = vmatprep.subr.mxu0 0.0
    %643 = vmatpush1.msra.mxu0 %v146
    %644 = vmatprep.mubr.f32.mxu0 %v319
    %645 = vmatmul.mubr.f32.gmra.mrb[0].mxu0 %v317
    %v646 = vpop.f32.mrb[0].mxu0
    %v647 = vadd.f32 %v577, %v646
    %v648 = vpop.f32.mrb[0].mxu0
    %649 = vdwg.mxu0
    %650 = vmatprep.subr.mxu0 0.0
    %651 = vmatpush1.msra.mxu0 %v147
    %652 = vmatprep.subr.mxu0 0.0
    %653 = vmatpush1.msra.mxu0 %v148
    %654 = vmatprep.subr.mxu0 0.0
    %655 = vmatpush1.msra.mxu0 %v149
    %656 = vmatprep.subr.mxu0 0.0
    %657 = vmatpush1.msra.mxu0 %v150
    %658 = vmatprep.subr.mxu0 0.0
    %659 = vmatpush1.msra.mxu0 %v151
    %660 = vmatprep.subr.mxu0 0.0
    %661 = vmatpush1.msra.mxu0 %v152
    %662 = vmatprep.subr.mxu0 0.0
    %663 = vmatpush1.msra.mxu0 %v153
    %664 = vmatprep.subr.mxu0 0.0
    %665 = vmatpush1.msra.mxu0 %v154
    %666 = vmatprep.subr.mxu0 0.0
    %667 = vmatpush1.msra.mxu0 %v155
    %668 = vmatprep.subr.mxu0 0.0
    %669 = vmatpush1.msra.mxu0 %v156
    %670 = vmatprep.subr.mxu0 0.0
    %671 = vmatpush1.msra.mxu0 %v157
    %672 = vmatprep.subr.mxu0 0.0
    %673 = vmatpush1.msra.mxu0 %v158
    %674 = vmatprep.subr.mxu0 0.0
    %675 = vmatpush1.msra.mxu0 %v159
    %676 = vmatprep.subr.mxu0 0.0
    %677 = vmatpush1.msra.mxu0 %v160
    %678 = vmatprep.subr.mxu0 0.0
    %679 = vmatpush1.msra.mxu0 %v161
    %680 = vmatprep.subr.mxu0 0.0
    %681 = vmatpush1.msra.mxu0 %v162
    %682 = vmatprep.subr.mxu0 0.0
    %683 = vmatpush1.msra.mxu0 %v163
    %684 = vmatprep.subr.mxu0 0.0
    %685 = vmatpush1.msra.mxu0 %v164
    %686 = vmatprep.subr.mxu0 0.0
    %687 = vmatpush1.msra.mxu0 %v165
    %688 = vmatprep.subr.mxu0 0.0
    %689 = vmatpush1.msra.mxu0 %v166
    %690 = vmatprep.subr.mxu0 0.0
    %691 = vmatpush1.msra.mxu0 %v167
    %692 = vmatprep.subr.mxu0 0.0
    %693 = vmatpush1.msra.mxu0 %v168
    %694 = vmatprep.subr.mxu0 0.0
    %695 = vmatpush1.msra.mxu0 %v169
    %696 = vmatprep.subr.mxu0 0.0
    %697 = vmatpush1.msra.mxu0 %v170
    %698 = vmatprep.subr.mxu0 0.0
    %699 = vmatpush1.msra.mxu0 %v171
    %700 = vmatprep.subr.mxu0 0.0
    %701 = vmatpush1.msra.mxu0 %v172
    %702 = vmatprep.subr.mxu0 0.0
    %703 = vmatpush1.msra.mxu0 %v173
    %704 = vmatprep.subr.mxu0 0.0
    %705 = vmatpush1.msra.mxu0 %v174
    %706 = vmatprep.subr.mxu0 0.0
    %707 = vmatpush1.msra.mxu0 %v175
    %708 = vmatprep.subr.mxu0 0.0
    %709 = vmatpush1.msra.mxu0 %v176
    %710 = vmatprep.subr.mxu0 0.0
    %711 = vmatpush1.msra.mxu0 %v177
    %712 = vmatprep.subr.mxu0 0.0
    %713 = vmatpush1.msra.mxu0 %v178
    %714 = vmatprep.mubr.f32.mxu0 %v335
    %715 = vmatmul.mubr.f32.gmra.mrb[0].mxu0 %v327
    %v716 = vpop.f32.mrb[0].mxu0
    %v717 = vadd.f32 %v647, %v716
    %v718 = vpop.f32.mrb[0].mxu0
    %719 = vdwg.mxu0
    %720 = vmatprep.subr.mxu0 0.0
    %721 = vmatpush1.msra.mxu0 %v179
    %722 = vmatprep.subr.mxu0 0.0
    %723 = vmatpush1.msra.mxu0 %v180
    %724 = vmatprep.subr.mxu0 0.0
    %725 = vmatpush1.msra.mxu0 %v181
    %726 = vmatprep.subr.mxu0 0.0
    %727 = vmatpush1.msra.mxu0 %v182
    %728 = vmatprep.subr.mxu0 0.0
    %729 = vmatpush1.msra.mxu0 %v183
    %730 = vmatprep.subr.mxu0 0.0
    %731 = vmatpush1.msra.mxu0 %v184
    %732 = vmatprep.subr.mxu0 0.0
    %733 = vmatpush1.msra.mxu0 %v185
    %734 = vmatprep.subr.mxu0 0.0
    %735 = vmatpush1.msra.mxu0 %v186
    %736 = vmatprep.subr.mxu0 0.0
    %737 = vmatpush1.msra.mxu0 %v187
    %738 = vmatprep.subr.mxu0 0.0
    %739 = vmatpush1.msra.mxu0 %v188
    %740 = vmatprep.subr.mxu0 0.0
    %741 = vmatpush1.msra.mxu0 %v189
    %742 = vmatprep.subr.mxu0 0.0
    %743 = vmatpush1.msra.mxu0 %v190
    %744 = vmatprep.subr.mxu0 0.0
    %745 = vmatpush1.msra.mxu0 %v191
    %746 = vmatprep.subr.mxu0 0.0
    %747 = vmatpush1.msra.mxu0 %v192
    %748 = vmatprep.subr.mxu0 0.0
    %749 = vmatpush1.msra.mxu0 %v193
    %750 = vmatprep.subr.mxu0 0.0
    %751 = vmatpush1.msra.mxu0 %v194
    %752 = vmatprep.subr.mxu0 0.0
    %753 = vmatpush1.msra.mxu0 %v195
    %754 = vmatprep.subr.mxu0 0.0
    %755 = vmatpush1.msra.mxu0 %v196
    %756 = vmatprep.subr.mxu0 0.0
    %757 = vmatpush1.msra.mxu0 %v197
    %758 = vmatprep.subr.mxu0 0.0
    %759 = vmatpush1.msra.mxu0 %v198
    %760 = vmatprep.subr.mxu0 0.0
    %761 = vmatpush1.msra.mxu0 %v199
    %762 = vmatprep.subr.mxu0 0.0
    %763 = vmatpush1.msra.mxu0 %v200
    %764 = vmatprep.subr.mxu0 0.0
    %765 = vmatpush1.msra.mxu0 %v201
    %766 = vmatprep.subr.mxu0 0.0
    %767 = vmatpush1.msra.mxu0 %v202
    %768 = vmatprep.subr.mxu0 0.0
    %769 = vmatpush1.msra.mxu0 %v203
    %770 = vmatprep.subr.mxu0 0.0
    %771 = vmatpush1.msra.mxu0 %v204
    %772 = vmatprep.subr.mxu0 0.0
    %773 = vmatpush1.msra.mxu0 %v205
    %774 = vmatprep.subr.mxu0 0.0
    %775 = vmatpush1.msra.mxu0 %v206
    %776 = vmatprep.subr.mxu0 0.0
    %777 = vmatpush1.msra.mxu0 %v207
    %778 = vmatprep.subr.mxu0 0.0
    %779 = vmatpush1.msra.mxu0 %v208
    %780 = vmatprep.subr.mxu0 0.0
    %781 = vmatpush1.msra.mxu0 %v209
    %782 = vmatprep.subr.mxu0 0.0
    %783 = vmatpush1.msra.mxu0 %v210
    %784 = vmatprep.mubr.f32.mxu0 %v336
    %785 = vmatmul.mubr.f32.gmra.mrb[0].mxu0 %v334
    %v786 = vpop.f32.mrb[0].mxu0
    %v787 = vadd.f32 %v717, %v786
    %v788 = vpop.f32.mrb[0].mxu0
    %789 = vdwg.mxu0
    %790 = vmatprep.subr.mxu0 0.0
    %791 = vmatpush1.msra.mxu0 %v211
    %792 = vmatprep.subr.mxu0 0.0
    %793 = vmatpush1.msra.mxu0 %v212
    %794 = vmatprep.subr.mxu0 0.0
    %795 = vmatpush1.msra.mxu0 %v213
    %796 = vmatprep.subr.mxu0 0.0
    %797 = vmatpush1.msra.mxu0 %v214
    %798 = vmatprep.subr.mxu0 0.0
    %799 = vmatpush1.msra.mxu0 %v215
    %800 = vmatprep.subr.mxu0 0.0
    %801 = vmatpush1.msra.mxu0 %v216
    %802 = vmatprep.subr.mxu0 0.0
    %803 = vmatpush1.msra.mxu0 %v217
    %804 = vmatprep.subr.mxu0 0.0
    %805 = vmatpush1.msra.mxu0 %v218
    %806 = vmatprep.subr.mxu0 0.0
    %807 = vmatpush1.msra.mxu0 %v219
    %808 = vmatprep.subr.mxu0 0.0
    %809 = vmatpush1.msra.mxu0 %v220
    %810 = vmatprep.subr.mxu0 0.0
    %811 = vmatpush1.msra.mxu0 %v221
    %812 = vmatprep.subr.mxu0 0.0
    %813 = vmatpush1.msra.mxu0 %v222
    %814 = vmatprep.subr.mxu0 0.0
    %815 = vmatpush1.msra.mxu0 %v223
    %816 = vmatprep.subr.mxu0 0.0
    %817 = vmatpush1.msra.mxu0 %v224
    %818 = vmatprep.subr.mxu0 0.0
    %819 = vmatpush1.msra.mxu0 %v225
    %820 = vmatprep.subr.mxu0 0.0
    %821 = vmatpush1.msra.mxu0 %v226
    %822 = vmatprep.subr.mxu0 0.0
    %823 = vmatpush1.msra.mxu0 %v227
    %824 = vmatprep.subr.mxu0 0.0
    %825 = vmatpush1.msra.mxu0 %v228
    %826 = vmatprep.subr.mxu0 0.0
    %827 = vmatpush1.msra.mxu0 %v229
    %828 = vmatprep.subr.mxu0 0.0
    %829 = vmatpush1.msra.mxu0 %v230
    %830 = vmatprep.subr.mxu0 0.0
    %831 = vmatpush1.msra.mxu0 %v231
    %832 = vmatprep.subr.mxu0 0.0
    %833 = vmatpush1.msra.mxu0 %v232
    %834 = vmatprep.subr.mxu0 0.0
    %835 = vmatpush1.msra.mxu0 %v233
    %836 = vmatprep.subr.mxu0 0.0
    %837 = vmatpush1.msra.mxu0 %v234
    %838 = vmatprep.subr.mxu0 0.0
    %839 = vmatpush1.msra.mxu0 %v235
    %840 = vmatprep.subr.mxu0 0.0
    %841 = vmatpush1.msra.mxu0 %v236
    %842 = vmatprep.subr.mxu0 0.0
    %843 = vmatpush1.msra.mxu0 %v237
    %844 = vmatprep.subr.mxu0 0.0
    %845 = vmatpush1.msra.mxu0 %v238
    %846 = vmatprep.subr.mxu0 0.0
    %847 = vmatpush1.msra.mxu0 %v239
    %848 = vmatprep.subr.mxu0 0.0
    %849 = vmatpush1.msra.mxu0 %v240
    %850 = vmatprep.subr.mxu0 0.0
    %851 = vmatpush1.msra.mxu0 %v241
    %852 = vmatprep.subr.mxu0 0.0
    %853 = vmatpush1.msra.mxu0 %v242
    %854 = vmatprep.mubr.f32.mxu0 %v352
    %855 = vmatmul.mubr.f32.gmra.mrb[0].mxu0 %v344
    %v856 = vpop.f32.mrb[0].mxu0
    %v857 = vadd.f32 %v787, %v856
    %v858 = vpop.f32.mrb[0].mxu0
    %859 = vdwg.mxu0
    %860 = vmatprep.subr.mxu0 0.0
    %861 = vmatpush1.msra.mxu0 %v243
    %862 = vmatprep.subr.mxu0 0.0
    %863 = vmatpush1.msra.mxu0 %v244
    %864 = vmatprep.subr.mxu0 0.0
    %865 = vmatpush1.msra.mxu0 %v245
    %866 = vmatprep.subr.mxu0 0.0
    %867 = vmatpush1.msra.mxu0 %v246
    %868 = vmatprep.subr.mxu0 0.0
    %869 = vmatpush1.msra.mxu0 %v247
    %870 = vmatprep.subr.mxu0 0.0
    %871 = vmatpush1.msra.mxu0 %v248
    %872 = vmatprep.subr.mxu0 0.0
    %873 = vmatpush1.msra.mxu0 %v249
    %874 = vmatprep.subr.mxu0 0.0
    %875 = vmatpush1.msra.mxu0 %v250
    %876 = vmatprep.subr.mxu0 0.0
    %877 = vmatpush1.msra.mxu0 %v251
    %878 = vmatprep.subr.mxu0 0.0
    %879 = vmatpush1.msra.mxu0 %v252
    %880 = vmatprep.subr.mxu0 0.0
    %881 = vmatpush1.msra.mxu0 %v253
    %882 = vmatprep.subr.mxu0 0.0
    %883 = vmatpush1.msra.mxu0 %v254
    %884 = vmatprep.subr.mxu0 0.0
    %885 = vmatpush1.msra.mxu0 %v255
    %886 = vmatprep.subr.mxu0 0.0
    %887 = vmatpush1.msra.mxu0 %v256
    %888 = vmatprep.subr.mxu0 0.0
    %889 = vmatpush1.msra.mxu0 %v257
    %890 = vmatprep.subr.mxu0 0.0
    %891 = vmatpush1.msra.mxu0 %v258
    %892 = vmatprep.subr.mxu0 0.0
    %893 = vmatpush1.msra.mxu0 %v259
    %894 = vmatprep.subr.mxu0 0.0
    %895 = vmatpush1.msra.mxu0 %v260
    %896 = vmatprep.subr.mxu0 0.0
    %897 = vmatpush1.msra.mxu0 %v261
    %898 = vmatprep.subr.mxu0 0.0
    %899 = vmatpush1.msra.mxu0 %v262
    %900 = vmatprep.subr.mxu0 0.0
    %901 = vmatpush1.msra.mxu0 %v263
    %902 = vmatprep.subr.mxu0 0.0
    %903 = vmatpush1.msra.mxu0 %v264
    %904 = vmatprep.subr.mxu0 0.0
    %905 = vmatpush1.msra.mxu0 %v265
    %906 = vmatprep.subr.mxu0 0.0
    %907 = vmatpush1.msra.mxu0 %v266
    %908 = vmatprep.subr.mxu0 0.0
    %909 = vmatpush1.msra.mxu0 %v267
    %910 = vmatprep.subr.mxu0 0.0
    %911 = vmatpush1.msra.mxu0 %v268
    %912 = vmatprep.subr.mxu0 0.0
    %913 = vmatpush1.msra.mxu0 %v269
    %914 = vmatprep.subr.mxu0 0.0
    %915 = vmatpush1.msra.mxu0 %v270
    %916 = vmatprep.subr.mxu0 0.0
    %917 = vmatpush1.msra.mxu0 %v271
    %918 = vmatprep.subr.mxu0 0.0
    %919 = vmatpush1.msra.mxu0 %v272
    %920 = vmatprep.subr.mxu0 0.0
    %921 = vmatpush1.msra.mxu0 %v273
    %922 = vmatprep.subr.mxu0 0.0
    %923 = vmatpush1.msra.mxu0 %v274
    %924 = vmatprep.mubr.f32.mxu0 %v353
    %925 = vmatmul.mubr.f32.gmra.mrb[0].mxu0 %v351
    %v926 = vpop.f32.mrb[0].mxu0
    %v927 = vadd.f32 %v857, %v926
    %v928 = vpop.f32.mrb[0].mxu0
    %929 = vdwg.mxu0
    %930 = vst [vmem:[#allocation2] sm:$0x3] %v927
    // Predicated region
    $region14: #{simple_cnn_forward.5} parent=1 // pred_check
      _
    $region15: #{simple_cnn_forward.5} parent=1 // pred_check_branch
      %932 = sbr.rel (0) target = $region17
    $region16: #{simple_cnn_forward.5} parent=1 // pred_region
      %s934 = ssub.s32 32, 32
      %935 = vsyncadd [#allocation3], %s934
      %s937 = sshll.u32 [#allocation2], 4
      %s938 = int_to_ptr.vmem [resolvable:$true] %s937
      %940 = dma.vmem_to_hbm [thread:$0]  %s938, 32, %s3, [#allocation3]
    $region17: #{simple_cnn_forward.5} parent=1 // pred_fallthru
      _
    // Predicated region
    $region18: #{simple_cnn_forward.5} parent=1 // pred_check
      _
    $region19: #{simple_cnn_forward.5} parent=1 // pred_check_branch
      %942 = sbr.rel (0) target = $region21
    $region20: #{simple_cnn_forward.5} parent=1 // pred_region
      %943 = dma.done [#allocation3], 32
    $region21: #{simple_cnn_forward.5} parent=1 // pred_fallthru
      _
    %944 = vsyncpa [#allocation3], 1

// kernel: simple_cnn_forward.4
$region0: #{simple_cnn_forward.4}
  #allocation0 [shape = 'u32[]', space=smem, size = 0x4, offset = 0x4, fixed_abs, tag = 'smem constant byte address 0x4 - core index']
  #allocation1 [shape = 'u32[144,128]{1,0:T(1,128)}', space=vmem, size = 0x12000, scoped, tag = 'internal scratch']
  #allocation2 [shape = 'f32[2,4,8,128]{3,2,1,0:T(8,128)}', space=vmem, size = 0x8000, scoped, tag = 'scratch operand']
  %s0 = inlined_call_operand.vmem [shape: f32[2,9,9,64], index: 0, kind: input, shape index: {}]
  %s1 = inlined_call_operand.vmem [shape: f32[2,9,9,64], index: 1, kind: input, shape index: {}]
  %s2 = inlined_call_operand.vmem [shape: f32[2,9,9,64], index: 2, kind: input, shape index: {}]
  %s3 = inlined_call_operand.vmem [shape: f32[2,9,9,64], index: 3, kind: input, shape index: {}]
  %s4 = inlined_call_operand.vmem [shape: f32[9,64,128], index: 4, kind: input, shape index: {}]
  %s5 = inlined_call_operand.vmem [shape: f32[1,128], index: 5, kind: input, shape index: {}]
  %s6 = inlined_call_operand.vmem [shape: f32[2,4,4,128], index: 6, kind: output, shape index: {}]
  %s7 = sld [smem:[#allocation0]]
  $region34: #{simple_cnn_forward.4} parent=0
    _
  %s9 = ssub.s32 1, %s7
  %s10 = scalar_select 0, %s9, %s7
  // Predicated region
  $region2: #{simple_cnn_forward.4} parent=0 // pred_check
    _
  $region3: #{simple_cnn_forward.4} parent=0 // pred_check_branch
    %12 = sbr.rel (0) target = $region5
  $region4: #{simple_cnn_forward.4} parent=0 // pred_region
    _
  $region5: #{simple_cnn_forward.4} parent=0 // pred_fallthru
    _
  // Predicated region
  $region6: #{simple_cnn_forward.4} parent=0 // pred_check
    _
  $region7: #{simple_cnn_forward.4} parent=0 // pred_check_branch
    %14 = sbr.rel (0) target = $region9
  $region8: #{simple_cnn_forward.4} parent=0 // pred_region
    _
  $region9: #{simple_cnn_forward.4} parent=0 // pred_fallthru
    _
  // Predicated region
  $region10: #{simple_cnn_forward.4} parent=0 // pred_check
    _
  $region11: #{simple_cnn_forward.4} parent=0 // pred_check_branch
    %16 = sbr.rel (0) target = $region13
  $region12: #{simple_cnn_forward.4} parent=0 // pred_region
    _
  $region13: #{simple_cnn_forward.4} parent=0 // pred_fallthru
    _
  // Predicated region
  $region14: #{simple_cnn_forward.4} parent=0 // pred_check
    _
  $region15: #{simple_cnn_forward.4} parent=0 // pred_check_branch
    %18 = sbr.rel (0) target = $region17
  $region16: #{simple_cnn_forward.4} parent=0 // pred_region
    _
  $region17: #{simple_cnn_forward.4} parent=0 // pred_fallthru
    _
  // Predicated region
  $region18: #{simple_cnn_forward.4} parent=0 // pred_check
    _
  $region19: #{simple_cnn_forward.4} parent=0 // pred_check_branch
    %20 = sbr.rel (0) target = $region21
  $region20: #{simple_cnn_forward.4} parent=0 // pred_region
    _
  $region21: #{simple_cnn_forward.4} parent=0 // pred_fallthru
    _
  // Predicated region
  $region22: #{simple_cnn_forward.4} parent=0 // pred_check
    _
  $region23: #{simple_cnn_forward.4} parent=0 // pred_check_branch
    %22 = sbr.rel (0) target = $region25
  $region24: #{simple_cnn_forward.4} parent=0 // pred_region
    _
  $region25: #{simple_cnn_forward.4} parent=0 // pred_fallthru
    _
  %v23 = vld [vmem:[%s0] sm:$0xff]
  %v24 = vld [vmem:[%s0 + $0x10] sm:$0xff]
  %v25 = vld [vmem:[%s0 + $0x20] sm:$0xff]
  %v26 = vld [vmem:[%s0 + $0x30] sm:$0xff]
  %v27 = vld [vmem:[%s0 + $0x40] sm:$0xff]
  %v28 = vld [vmem:[%s0 + $0x50] sm:$0xff]
  %v29 = vld [vmem:[%s0 + $0x60] sm:$0xff]
  %v30 = vld [vmem:[%s0 + $0x70] sm:$0xff]
  %v31 = vld [vmem:[%s0 + $0x90] sm:$0xff]
  %v32 = vld [vmem:[%s0 + $0xa0] sm:$0xff]
  %v33 = vld [vmem:[%s0 + $0xb0] sm:$0xff]
  %v34 = vld [vmem:[%s0 + $0xc0] sm:$0xff]
  %v35 = vld [vmem:[%s0 + $0xd0] sm:$0xff]
  %v36 = vld [vmem:[%s0 + $0xe0] sm:$0xff]
  %v37 = vld [vmem:[%s0 + $0xf0] sm:$0xff]
  %v38 = vld [vmem:[%s0 + $0x100] sm:$0xff]
  %v39 = vld [vmem:[%s4] sm:$0xff]
  %v40 = vld [vmem:[%s4 + $0x8] sm:$0xff]
  %v41 = vld [vmem:[%s4 + $0x10] sm:$0xff]
  %v42 = vld [vmem:[%s4 + $0x18] sm:$0xff]
  %v43 = vld [vmem:[%s4 + $0x20] sm:$0xff]
  %v44 = vld [vmem:[%s4 + $0x28] sm:$0xff]
  %v45 = vld [vmem:[%s4 + $0x30] sm:$0xff]
  %v46 = vld [vmem:[%s4 + $0x38] sm:$0xff]
  %v47 = vld [vmem:[%s1] sm:$0xff]
  %v48 = vld [vmem:[%s1 + $0x10] sm:$0xff]
  %v49 = vld [vmem:[%s1 + $0x20] sm:$0xff]
  %v50 = vld [vmem:[%s1 + $0x30] sm:$0xff]
  %v51 = vld [vmem:[%s1 + $0x40] sm:$0xff]
  %v52 = vld [vmem:[%s1 + $0x50] sm:$0xff]
  %v53 = vld [vmem:[%s1 + $0x60] sm:$0xff]
  %v54 = vld [vmem:[%s1 + $0x70] sm:$0xff]
  %v55 = vld [vmem:[%s1 + $0x90] sm:$0xff]
  %v56 = vld [vmem:[%s1 + $0xa0] sm:$0xff]
  %v57 = vld [vmem:[%s1 + $0xb0] sm:$0xff]
  %v58 = vld [vmem:[%s1 + $0xc0] sm:$0xff]
  %v59 = vld [vmem:[%s1 + $0xd0] sm:$0xff]
  %v60 = vld [vmem:[%s1 + $0xe0] sm:$0xff]
  %v61 = vld [vmem:[%s1 + $0xf0] sm:$0xff]
  %v62 = vld [vmem:[%s1 + $0x100] sm:$0xff]
  %s63 = scalar_lea.vmem %s4, 64
  %v64 = vld [vmem:[%s63] sm:$0xff]
  %v65 = vld [vmem:[%s63 + $0x8] sm:$0xff]
  %v66 = vld [vmem:[%s63 + $0x10] sm:$0xff]
  %v67 = vld [vmem:[%s63 + $0x18] sm:$0xff]
  %v68 = vld [vmem:[%s63 + $0x20] sm:$0xff]
  %v69 = vld [vmem:[%s63 + $0x28] sm:$0xff]
  %v70 = vld [vmem:[%s63 + $0x30] sm:$0xff]
  %v71 = vld [vmem:[%s63 + $0x38] sm:$0xff]
  %vm72 = vcmask 523264
  %v74 = vsel %vm72, %v47, 0
  %v77 = vsel %vm72, %v48, 0
  %v80 = vsel %vm72, %v49, 0
  %v83 = vsel %vm72, %v50, 0
  %v86 = vsel %vm72, %v51, 0
  %v89 = vsel %vm72, %v52, 0
  %v92 = vsel %vm72, %v53, 0
  %v95 = vsel %vm72, %v54, 0
  %v98 = vsel %vm72, %v55, 0
  %v101 = vsel %vm72, %v56, 0
  %v104 = vsel %vm72, %v57, 0
  %v107 = vsel %vm72, %v58, 0
  %v110 = vsel %vm72, %v59, 0
  %v113 = vsel %vm72, %v60, 0
  %v116 = vsel %vm72, %v61, 0
  %v119 = vsel %vm72, %v62, 0
  %121 = vmatprep.subr.mxu0 0.0
  %122 = vmatpush1.msra.mxu0 %v64
  %123 = vmatprep.subr.mxu0 0.0
  %124 = vmatpush1.msra.mxu0 %v65
  %125 = vmatprep.subr.mxu0 0.0
  %126 = vmatpush1.msra.mxu0 %v66
  %127 = vmatprep.subr.mxu0 0.0
  %128 = vmatpush1.msra.mxu0 %v67
  %129 = vmatprep.subr.mxu0 0.0
  %130 = vmatpush1.msra.mxu0 %v68
  %131 = vmatprep.subr.mxu0 0.0
  %132 = vmatpush1.msra.mxu0 %v69
  %133 = vmatprep.subr.mxu0 0.0
  %134 = vmatpush1.msra.mxu0 %v70
  %135 = vmatprep.subr.mxu0 0.0
  %136 = vmatpush1.msra.mxu0 %v71
  %137 = vmatprep.subr.mxu0 0.0
  %138 = vmatpush1.msra.mxu0 0.0
  %139 = vmatprep.subr.mxu0 0.0
  %140 = vmatpush1.msra.mxu0 0.0
  %141 = vmatprep.subr.mxu0 0.0
  %142 = vmatpush1.msra.mxu0 0.0
  %143 = vmatprep.subr.mxu0 0.0
  %144 = vmatpush1.msra.mxu0 0.0
  %145 = vmatprep.subr.mxu0 0.0
  %146 = vmatpush1.msra.mxu0 0.0
  %147 = vmatprep.subr.mxu0 0.0
  %148 = vmatpush1.msra.mxu0 0.0
  %149 = vmatprep.subr.mxu0 0.0
  %150 = vmatpush1.msra.mxu0 0.0
  %151 = vmatprep.subr.mxu0 0.0
  %152 = vmatpush1.msra.mxu0 0.0
  %153 = vmatprep.subr.mxu0 0.0
  %154 = vmatpush1.msra.mxu0 0.0
  %155 = vmatprep.subr.mxu0 0.0
  %156 = vmatpush1.msra.mxu0 0.0
  %157 = vmatprep.subr.mxu0 0.0
  %158 = vmatpush1.msra.mxu0 0.0
  %159 = vmatprep.subr.mxu0 0.0
  %160 = vmatpush1.msra.mxu0 0.0
  %161 = vmatprep.subr.mxu0 0.0
  %162 = vmatpush1.msra.mxu0 0.0
  %163 = vmatprep.subr.mxu0 0.0
  %164 = vmatpush1.msra.mxu0 0.0
  %165 = vmatprep.subr.mxu0 0.0
  %166 = vmatpush1.msra.mxu0 0.0
  %167 = vmatprep.subr.mxu0 0.0
  %168 = vmatpush1.msra.mxu0 0.0
  %169 = vmatprep.subr.mxu0 0.0
  %170 = vmatpush1.msra.mxu0 0.0
  %171 = vmatprep.subr.mxu0 0.0
  %172 = vmatpush1.msra.mxu0 0.0
  %173 = vmatprep.subr.mxu0 0.0
  %174 = vmatpush1.msra.mxu0 0.0
  %175 = vmatprep.subr.mxu0 0.0
  %176 = vmatpush1.msra.mxu0 0.0
  %177 = vmatprep.subr.mxu0 0.0
  %178 = vmatpush1.msra.mxu0 0.0
  %179 = vmatprep.subr.mxu0 0.0
  %180 = vmatpush1.msra.mxu0 0.0
  %181 = vmatprep.subr.mxu0 0.0
  %182 = vmatpush1.msra.mxu0 0.0
  %183 = vmatprep.subr.mxu0 0.0
  %184 = vmatpush1.msra.mxu0 0.0
  %185 = vmatprep.mubr.f32.mxu0 0.0
  %186 = vmatmul.mubr.f32.gmra.mrb[0].mxu0 %v74
  %v187 = vpop.f32.mrb[0].mxu0
  %v188 = vadd.f32 0.0, %v187
  %v189 = vpop.f32.mrb[0].mxu0
  %190 = vmatprep.mubr.f32.mxu0 0.0
  %191 = vmatmul.mubr.f32.gmra.mrb[0].mxu0 %v77
  %v192 = vpop.f32.mrb[0].mxu0
  %v193 = vadd.f32 0.0, %v192
  %v194 = vpop.f32.mrb[0].mxu0
  %195 = vmatprep.mubr.f32.mxu0 0.0
  %196 = vmatmul.mubr.f32.gmra.mrb[0].mxu0 %v80
  %v197 = vpop.f32.mrb[0].mxu0
  %v198 = vadd.f32 0.0, %v197
  %v199 = vpop.f32.mrb[0].mxu0
  %200 = vmatprep.mubr.f32.mxu0 0.0
  %201 = vmatmul.mubr.f32.gmra.mrb[0].mxu0 %v83
  %v202 = vpop.f32.mrb[0].mxu0
  %v203 = vadd.f32 0.0, %v202
  %v204 = vpop.f32.mrb[0].mxu0
  %205 = vmatprep.mubr.f32.mxu0 0.0
  %206 = vmatmul.mubr.f32.gmra.mrb[0].mxu0 %v86
  %v207 = vpop.f32.mrb[0].mxu0
  %v208 = vadd.f32 0.0, %v207
  %v209 = vpop.f32.mrb[0].mxu0
  %210 = vmatprep.mubr.f32.mxu0 0.0
  %211 = vmatmul.mubr.f32.gmra.mrb[0].mxu0 %v89
  %v212 = vpop.f32.mrb[0].mxu0
  %v213 = vadd.f32 0.0, %v212
  %v214 = vpop.f32.mrb[0].mxu0
  %215 = vmatprep.mubr.f32.mxu0 0.0
  %216 = vmatmul.mubr.f32.gmra.mrb[0].mxu0 %v92
  %v217 = vpop.f32.mrb[0].mxu0
  %v218 = vadd.f32 0.0, %v217
  %v219 = vpop.f32.mrb[0].mxu0
  %220 = vmatprep.mubr.f32.mxu0 0.0
  %221 = vmatmul.mubr.f32.gmra.mrb[0].mxu0 %v95
  %v222 = vpop.f32.mrb[0].mxu0
  %v223 = vadd.f32 0.0, %v222
  %v224 = vpop.f32.mrb[0].mxu0
  %225 = vmatprep.mubr.f32.mxu0 0.0
  %226 = vmatmul.mubr.f32.gmra.mrb[0].mxu0 %v98
  %v227 = vpop.f32.mrb[0].mxu0
  %v228 = vadd.f32 0.0, %v227
  %v229 = vpop.f32.mrb[0].mxu0
  %230 = vmatprep.mubr.f32.mxu0 0.0
  %231 = vmatmul.mubr.f32.gmra.mrb[0].mxu0 %v101
  %v232 = vpop.f32.mrb[0].mxu0
  %v233 = vadd.f32 0.0, %v232
  %v234 = vpop.f32.mrb[0].mxu0
  %235 = vmatprep.mubr.f32.mxu0 0.0
  %236 = vmatmul.mubr.f32.gmra.mrb[0].mxu0 %v104
  %v237 = vpop.f32.mrb[0].mxu0
  %v238 = vadd.f32 0.0, %v237
  %v239 = vpop.f32.mrb[0].mxu0
  %240 = vmatprep.mubr.f32.mxu0 0.0
  %241 = vmatmul.mubr.f32.gmra.mrb[0].mxu0 %v107
  %v242 = vpop.f32.mrb[0].mxu0
  %v243 = vadd.f32 0.0, %v242
  %v244 = vpop.f32.mrb[0].mxu0
  %245 = vmatprep.mubr.f32.mxu0 0.0
  %246 = vmatmul.mubr.f32.gmra.mrb[0].mxu0 %v110
  %v247 = vpop.f32.mrb[0].mxu0
  %v248 = vadd.f32 0.0, %v247
  %v249 = vpop.f32.mrb[0].mxu0
  %250 = vmatprep.mubr.f32.mxu0 0.0
  %251 = vmatmul.mubr.f32.gmra.mrb[0].mxu0 %v113
  %v252 = vpop.f32.mrb[0].mxu0
  %v253 = vadd.f32 0.0, %v252
  %v254 = vpop.f32.mrb[0].mxu0
  %255 = vmatprep.mubr.f32.mxu0 0.0
  %256 = vmatmul.mubr.f32.gmra.mrb[0].mxu0 %v116
  %v257 = vpop.f32.mrb[0].mxu0
  %v258 = vadd.f32 0.0, %v257
  %v259 = vpop.f32.mrb[0].mxu0
  %260 = vmatprep.mubr.f32.mxu0 0.0
  %261 = vmatmul.mubr.f32.gmra.mrb[0].mxu0 %v119
  %v262 = vpop.f32.mrb[0].mxu0
  %v263 = vadd.f32 0.0, %v262
  %v264 = vpop.f32.mrb[0].mxu0
  %265 = vdwg.mxu0
  %v267 = vsel %vm72, %v23, 0
  %v270 = vsel %vm72, %v24, 0
  %v273 = vsel %vm72, %v25, 0
  %v276 = vsel %vm72, %v26, 0
  %v279 = vsel %vm72, %v27, 0
  %v282 = vsel %vm72, %v28, 0
  %v285 = vsel %vm72, %v29, 0
  %v288 = vsel %vm72, %v30, 0
  %v291 = vsel %vm72, %v31, 0
  %v294 = vsel %vm72, %v32, 0
  %v297 = vsel %vm72, %v33, 0
  %v300 = vsel %vm72, %v34, 0
  %v303 = vsel %vm72, %v35, 0
  %v306 = vsel %vm72, %v36, 0
  %v309 = vsel %vm72, %v37, 0
  %v312 = vsel %vm72, %v38, 0
  %314 = vmatprep.subr.mxu0 0.0
  %315 = vmatpush1.msra.mxu0 %v39
  %316 = vmatprep.subr.mxu0 0.0
  %317 = vmatpush1.msra.mxu0 %v40
  %318 = vmatprep.subr.mxu0 0.0
  %319 = vmatpush1.msra.mxu0 %v41
  %320 = vmatprep.subr.mxu0 0.0
  %321 = vmatpush1.msra.mxu0 %v42
  %322 = vmatprep.subr.mxu0 0.0
  %323 = vmatpush1.msra.mxu0 %v43
  %324 = vmatprep.subr.mxu0 0.0
  %325 = vmatpush1.msra.mxu0 %v44
  %326 = vmatprep.subr.mxu0 0.0
  %327 = vmatpush1.msra.mxu0 %v45
  %328 = vmatprep.subr.mxu0 0.0
  %329 = vmatpush1.msra.mxu0 %v46
  %330 = vmatprep.subr.mxu0 0.0
  %331 = vmatpush1.msra.mxu0 0.0
  %332 = vmatprep.subr.mxu0 0.0
  %333 = vmatpush1.msra.mxu0 0.0
  %334 = vmatprep.subr.mxu0 0.0
  %335 = vmatpush1.msra.mxu0 0.0
  %336 = vmatprep.subr.mxu0 0.0
  %337 = vmatpush1.msra.mxu0 0.0
  %338 = vmatprep.subr.mxu0 0.0
  %339 = vmatpush1.msra.mxu0 0.0
  %340 = vmatprep.subr.mxu0 0.0
  %341 = vmatpush1.msra.mxu0 0.0
  %342 = vmatprep.subr.mxu0 0.0
  %343 = vmatpush1.msra.mxu0 0.0
  %344 = vmatprep.subr.mxu0 0.0
  %345 = vmatpush1.msra.mxu0 0.0
  %346 = vmatprep.subr.mxu0 0.0
  %347 = vmatpush1.msra.mxu0 0.0
  %348 = vmatprep.subr.mxu0 0.0
  %349 = vmatpush1.msra.mxu0 0.0
  %350 = vmatprep.subr.mxu0 0.0
  %351 = vmatpush1.msra.mxu0 0.0
  %352 = vmatprep.subr.mxu0 0.0
  %353 = vmatpush1.msra.mxu0 0.0
  %354 = vmatprep.subr.mxu0 0.0
  %355 = vmatpush1.msra.mxu0 0.0
  %356 = vmatprep.subr.mxu0 0.0
  %357 = vmatpush1.msra.mxu0 0.0
  %358 = vmatprep.subr.mxu0 0.0
  %359 = vmatpush1.msra.mxu0 0.0
  %360 = vmatprep.subr.mxu0 0.0
  %361 = vmatpush1.msra.mxu0 0.0
  %362 = vmatprep.subr.mxu0 0.0
  %363 = vmatpush1.msra.mxu0 0.0
  %364 = vmatprep.subr.mxu0 0.0
  %365 = vmatpush1.msra.mxu0 0.0
  %366 = vmatprep.subr.mxu0 0.0
  %367 = vmatpush1.msra.mxu0 0.0
  %368 = vmatprep.subr.mxu0 0.0
  %369 = vmatpush1.msra.mxu0 0.0
  %370 = vmatprep.subr.mxu0 0.0
  %371 = vmatpush1.msra.mxu0 0.0
  %372 = vmatprep.subr.mxu0 0.0
  %373 = vmatpush1.msra.mxu0 0.0
  %374 = vmatprep.subr.mxu0 0.0
  %375 = vmatpush1.msra.mxu0 0.0
  %376 = vmatprep.subr.mxu0 0.0
  %377 = vmatpush1.msra.mxu0 0.0
  %378 = vmatprep.mubr.f32.mxu0 0.0
  %379 = vmatmul.mubr.f32.gmra.mrb[0].mxu0 %v267
  %v380 = vpop.f32.mrb[0].mxu0
  %v381 = vadd.f32 %v188, %v380
  %v382 = vpop.f32.mrb[0].mxu0
  %383 = vmatprep.mubr.f32.mxu0 0.0
  %384 = vmatmul.mubr.f32.gmra.mrb[0].mxu0 %v270
  %v385 = vpop.f32.mrb[0].mxu0
  %v386 = vadd.f32 %v193, %v385
  %v387 = vpop.f32.mrb[0].mxu0
  %388 = vmatprep.mubr.f32.mxu0 0.0
  %389 = vmatmul.mubr.f32.gmra.mrb[0].mxu0 %v273
  %v390 = vpop.f32.mrb[0].mxu0
  %v391 = vadd.f32 %v198, %v390
  %v392 = vpop.f32.mrb[0].mxu0
  %393 = vmatprep.mubr.f32.mxu0 0.0
  %394 = vmatmul.mubr.f32.gmra.mrb[0].mxu0 %v276
  %v395 = vpop.f32.mrb[0].mxu0
  %v396 = vadd.f32 %v203, %v395
  %v397 = vpop.f32.mrb[0].mxu0
  %398 = vmatprep.mubr.f32.mxu0 0.0
  %399 = vmatmul.mubr.f32.gmra.mrb[0].mxu0 %v279
  %v400 = vpop.f32.mrb[0].mxu0
  %v401 = vadd.f32 %v208, %v400
  %v402 = vpop.f32.mrb[0].mxu0
  %403 = vmatprep.mubr.f32.mxu0 0.0
  %404 = vmatmul.mubr.f32.gmra.mrb[0].mxu0 %v282
  %v405 = vpop.f32.mrb[0].mxu0
  %v406 = vadd.f32 %v213, %v405
  %v407 = vpop.f32.mrb[0].mxu0
  %408 = vmatprep.mubr.f32.mxu0 0.0
  %409 = vmatmul.mubr.f32.gmra.mrb[0].mxu0 %v285
  %v410 = vpop.f32.mrb[0].mxu0
  %v411 = vadd.f32 %v218, %v410
  %v412 = vpop.f32.mrb[0].mxu0
  %413 = vmatprep.mubr.f32.mxu0 0.0
  %414 = vmatmul.mubr.f32.gmra.mrb[0].mxu0 %v288
  %v415 = vpop.f32.mrb[0].mxu0
  %v416 = vadd.f32 %v223, %v415
  %v417 = vpop.f32.mrb[0].mxu0
  %418 = vmatprep.mubr.f32.mxu0 0.0
  %419 = vmatmul.mubr.f32.gmra.mrb[0].mxu0 %v291
  %v420 = vpop.f32.mrb[0].mxu0
  %v421 = vadd.f32 %v228, %v420
  %v422 = vpop.f32.mrb[0].mxu0
  %423 = vmatprep.mubr.f32.mxu0 0.0
  %424 = vmatmul.mubr.f32.gmra.mrb[0].mxu0 %v294
  %v425 = vpop.f32.mrb[0].mxu0
  %v426 = vadd.f32 %v233, %v425
  %v427 = vpop.f32.mrb[0].mxu0
  %428 = vmatprep.mubr.f32.mxu0 0.0
  %429 = vmatmul.mubr.f32.gmra.mrb[0].mxu0 %v297
  %v430 = vpop.f32.mrb[0].mxu0
  %v431 = vadd.f32 %v238, %v430
  %v432 = vpop.f32.mrb[0].mxu0
  %433 = vmatprep.mubr.f32.mxu0 0.0
  %434 = vmatmul.mubr.f32.gmra.mrb[0].mxu0 %v300
  %v435 = vpop.f32.mrb[0].mxu0
  %v436 = vadd.f32 %v243, %v435
  %v437 = vpop.f32.mrb[0].mxu0
  %438 = vmatprep.mubr.f32.mxu0 0.0
  %439 = vmatmul.mubr.f32.gmra.mrb[0].mxu0 %v303
  %v440 = vpop.f32.mrb[0].mxu0
  %v441 = vadd.f32 %v248, %v440
  %v442 = vpop.f32.mrb[0].mxu0
  %443 = vmatprep.mubr.f32.mxu0 0.0
  %444 = vmatmul.mubr.f32.gmra.mrb[0].mxu0 %v306
  %v445 = vpop.f32.mrb[0].mxu0
  %v446 = vadd.f32 %v253, %v445
  %v447 = vpop.f32.mrb[0].mxu0
  %448 = vmatprep.mubr.f32.mxu0 0.0
  %449 = vmatmul.mubr.f32.gmra.mrb[0].mxu0 %v309
  %v450 = vpop.f32.mrb[0].mxu0
  %v451 = vadd.f32 %v258, %v450
  %v452 = vpop.f32.mrb[0].mxu0
  %453 = vmatprep.mubr.f32.mxu0 0.0
  %454 = vmatmul.mubr.f32.gmra.mrb[0].mxu0 %v312
  %v455 = vpop.f32.mrb[0].mxu0
  %v456 = vadd.f32 %v263, %v455
  %v457 = vpop.f32.mrb[0].mxu0
  %458 = vdwg.mxu0
  %v459 = vld [vmem:[%s0 + $0x1] sm:$0xff]
  %v460 = vld [vmem:[%s0 + $0x11] sm:$0xff]
  %v461 = vld [vmem:[%s0 + $0x21] sm:$0xff]
  %v462 = vld [vmem:[%s0 + $0x31] sm:$0xff]
  %v463 = vld [vmem:[%s0 + $0x41] sm:$0xff]
  %v464 = vld [vmem:[%s0 + $0x51] sm:$0xff]
  %v465 = vld [vmem:[%s0 + $0x61] sm:$0xff]
  %v466 = vld [vmem:[%s0 + $0x71] sm:$0xff]
  %v467 = vld [vmem:[%s0 + $0x91] sm:$0xff]
  %v468 = vld [vmem:[%s0 + $0xa1] sm:$0xff]
  %v469 = vld [vmem:[%s0 + $0xb1] sm:$0xff]
  %v470 = vld [vmem:[%s0 + $0xc1] sm:$0xff]
  %v471 = vld [vmem:[%s0 + $0xd1] sm:$0xff]
  %v472 = vld [vmem:[%s0 + $0xe1] sm:$0xff]
  %v473 = vld [vmem:[%s0 + $0xf1] sm:$0xff]
  %v474 = vld [vmem:[%s0 + $0x101] sm:$0xff]
  %s475 = scalar_lea.vmem %s4, 128
  %v476 = vld [vmem:[%s475] sm:$0xff]
  %v477 = vld [vmem:[%s475 + $0x8] sm:$0xff]
  %v478 = vld [vmem:[%s475 + $0x10] sm:$0xff]
  %v479 = vld [vmem:[%s475 + $0x18] sm:$0xff]
  %v480 = vld [vmem:[%s475 + $0x20] sm:$0xff]
  %v481 = vld [vmem:[%s475 + $0x28] sm:$0xff]
  %v482 = vld [vmem:[%s475 + $0x30] sm:$0xff]
  %v483 = vld [vmem:[%s475 + $0x38] sm:$0xff]
  %v485 = vsel %vm72, %v459, 0
  %v488 = vsel %vm72, %v460, 0
  %v491 = vsel %vm72, %v461, 0
  %v494 = vsel %vm72, %v462, 0
  %v497 = vsel %vm72, %v463, 0
  %v500 = vsel %vm72, %v464, 0
  %v503 = vsel %vm72, %v465, 0
  %v506 = vsel %vm72, %v466, 0
  %v509 = vsel %vm72, %v467, 0
  %v512 = vsel %vm72, %v468, 0
  %v515 = vsel %vm72, %v469, 0
  %v518 = vsel %vm72, %v470, 0
  %v521 = vsel %vm72, %v471, 0
  %v524 = vsel %vm72, %v472, 0
  %v527 = vsel %vm72, %v473, 0
  %v530 = vsel %vm72, %v474, 0
  %532 = vmatprep.subr.mxu0 0.0
  %533 = vmatpush1.msra.mxu0 %v476
  %534 = vmatprep.subr.mxu0 0.0
  %535 = vmatpush1.msra.mxu0 %v477
  %536 = vmatprep.subr.mxu0 0.0
  %537 = vmatpush1.msra.mxu0 %v478
  %538 = vmatprep.subr.mxu0 0.0
  %539 = vmatpush1.msra.mxu0 %v479
  %540 = vmatprep.subr.mxu0 0.0
  %541 = vmatpush1.msra.mxu0 %v480
  %542 = vmatprep.subr.mxu0 0.0
  %543 = vmatpush1.msra.mxu0 %v481
  %544 = vmatprep.subr.mxu0 0.0
  %545 = vmatpush1.msra.mxu0 %v482
  %546 = vmatprep.subr.mxu0 0.0
  %547 = vmatpush1.msra.mxu0 %v483
  %548 = vmatprep.subr.mxu0 0.0
  %549 = vmatpush1.msra.mxu0 0.0
  %550 = vmatprep.subr.mxu0 0.0
  %551 = vmatpush1.msra.mxu0 0.0
  %552 = vmatprep.subr.mxu0 0.0
  %553 = vmatpush1.msra.mxu0 0.0
  %554 = vmatprep.subr.mxu0 0.0
  %555 = vmatpush1.msra.mxu0 0.0
  %556 = vmatprep.subr.mxu0 0.0
  %557 = vmatpush1.msra.mxu0 0.0
  %558 = vmatprep.subr.mxu0 0.0
  %559 = vmatpush1.msra.mxu0 0.0
  %560 = vmatprep.subr.mxu0 0.0
  %561 = vmatpush1.msra.mxu0 0.0
  %562 = vmatprep.subr.mxu0 0.0
  %563 = vmatpush1.msra.mxu0 0.0
  %564 = vmatprep.subr.mxu0 0.0
  %565 = vmatpush1.msra.mxu0 0.0
  %566 = vmatprep.subr.mxu0 0.0
  %567 = vmatpush1.msra.mxu0 0.0
  %568 = vmatprep.subr.mxu0 0.0
  %569 = vmatpush1.msra.mxu0 0.0
  %570 = vmatprep.subr.mxu0 0.0
  %571 = vmatpush1.msra.mxu0 0.0
  %572 = vmatprep.subr.mxu0 0.0
  %573 = vmatpush1.msra.mxu0 0.0
  %574 = vmatprep.subr.mxu0 0.0
  %575 = vmatpush1.msra.mxu0 0.0
  %576 = vmatprep.subr.mxu0 0.0
  %577 = vmatpush1.msra.mxu0 0.0
  %578 = vmatprep.subr.mxu0 0.0
  %579 = vmatpush1.msra.mxu0 0.0
  %580 = vmatprep.subr.mxu0 0.0
  %581 = vmatpush1.msra.mxu0 0.0
  %582 = vmatprep.subr.mxu0 0.0
  %583 = vmatpush1.msra.mxu0 0.0
  %584 = vmatprep.subr.mxu0 0.0
  %585 = vmatpush1.msra.mxu0 0.0
  %586 = vmatprep.subr.mxu0 0.0
  %587 = vmatpush1.msra.mxu0 0.0
  %588 = vmatprep.subr.mxu0 0.0
  %589 = vmatpush1.msra.mxu0 0.0
  %590 = vmatprep.subr.mxu0 0.0
  %591 = vmatpush1.msra.mxu0 0.0
  %592 = vmatprep.subr.mxu0 0.0
  %593 = vmatpush1.msra.mxu0 0.0
  %594 = vmatprep.subr.mxu0 0.0
  %595 = vmatpush1.msra.mxu0 0.0
  %596 = vmatprep.mubr.f32.mxu0 0.0
  %597 = vmatmul.mubr.f32.gmra.mrb[0].mxu0 %v485
  %v598 = vpop.f32.mrb[0].mxu0
  %v599 = vadd.f32 0.0, %v598
  %v600 = vpop.f32.mrb[0].mxu0
  %601 = vmatprep.mubr.f32.mxu0 0.0
  %602 = vmatmul.mubr.f32.gmra.mrb[0].mxu0 %v488
  %v603 = vpop.f32.mrb[0].mxu0
  %v604 = vadd.f32 0.0, %v603
  %v605 = vpop.f32.mrb[0].mxu0
  %606 = vmatprep.mubr.f32.mxu0 0.0
  %607 = vmatmul.mubr.f32.gmra.mrb[0].mxu0 %v491
  %v608 = vpop.f32.mrb[0].mxu0
  %v609 = vadd.f32 0.0, %v608
  %v610 = vpop.f32.mrb[0].mxu0
  %611 = vmatprep.mubr.f32.mxu0 0.0
  %612 = vmatmul.mubr.f32.gmra.mrb[0].mxu0 %v494
  %v613 = vpop.f32.mrb[0].mxu0
  %v614 = vadd.f32 0.0, %v613
  %v615 = vpop.f32.mrb[0].mxu0
  %616 = vmatprep.mubr.f32.mxu0 0.0
  %617 = vmatmul.mubr.f32.gmra.mrb[0].mxu0 %v497
  %v618 = vpop.f32.mrb[0].mxu0
  %v619 = vadd.f32 0.0, %v618
  %v620 = vpop.f32.mrb[0].mxu0
  %621 = vmatprep.mubr.f32.mxu0 0.0
  %622 = vmatmul.mubr.f32.gmra.mrb[0].mxu0 %v500
  %v623 = vpop.f32.mrb[0].mxu0
  %v624 = vadd.f32 0.0, %v623
  %v625 = vpop.f32.mrb[0].mxu0
  %626 = vmatprep.mubr.f32.mxu0 0.0
  %627 = vmatmul.mubr.f32.gmra.mrb[0].mxu0 %v503
  %v628 = vpop.f32.mrb[0].mxu0
  %v629 = vadd.f32 0.0, %v628
  %v630 = vpop.f32.mrb[0].mxu0
  %631 = vmatprep.mubr.f32.mxu0 0.0
  %632 = vmatmul.mubr.f32.gmra.mrb[0].mxu0 %v506
  %v633 = vpop.f32.mrb[0].mxu0
  %v634 = vadd.f32 0.0, %v633
  %v635 = vpop.f32.mrb[0].mxu0
  %636 = vmatprep.mubr.f32.mxu0 0.0
  %637 = vmatmul.mubr.f32.gmra.mrb[0].mxu0 %v509
  %v638 = vpop.f32.mrb[0].mxu0
  %v639 = vadd.f32 0.0, %v638
  %v640 = vpop.f32.mrb[0].mxu0
  %641 = vmatprep.mubr.f32.mxu0 0.0
  %642 = vmatmul.mubr.f32.gmra.mrb[0].mxu0 %v512
  %v643 = vpop.f32.mrb[0].mxu0
  %v644 = vadd.f32 0.0, %v643
  %v645 = vpop.f32.mrb[0].mxu0
  %646 = vmatprep.mubr.f32.mxu0 0.0
  %647 = vmatmul.mubr.f32.gmra.mrb[0].mxu0 %v515
  %v648 = vpop.f32.mrb[0].mxu0
  %v649 = vadd.f32 0.0, %v648
  %v650 = vpop.f32.mrb[0].mxu0
  %651 = vmatprep.mubr.f32.mxu0 0.0
  %652 = vmatmul.mubr.f32.gmra.mrb[0].mxu0 %v518
  %v653 = vpop.f32.mrb[0].mxu0
  %v654 = vadd.f32 0.0, %v653
  %v655 = vpop.f32.mrb[0].mxu0
  %656 = vmatprep.mubr.f32.mxu0 0.0
  %657 = vmatmul.mubr.f32.gmra.mrb[0].mxu0 %v521
  %v658 = vpop.f32.mrb[0].mxu0
  %v659 = vadd.f32 0.0, %v658
  %v660 = vpop.f32.mrb[0].mxu0
  %661 = vmatprep.mubr.f32.mxu0 0.0
  %662 = vmatmul.mubr.f32.gmra.mrb[0].mxu0 %v524
  %v663 = vpop.f32.mrb[0].mxu0
  %v664 = vadd.f32 0.0, %v663
  %v665 = vpop.f32.mrb[0].mxu0
  %666 = vmatprep.mubr.f32.mxu0 0.0
  %667 = vmatmul.mubr.f32.gmra.mrb[0].mxu0 %v527
  %v668 = vpop.f32.mrb[0].mxu0
  %v669 = vadd.f32 0.0, %v668
  %v670 = vpop.f32.mrb[0].mxu0
  %671 = vmatprep.mubr.f32.mxu0 0.0
  %672 = vmatmul.mubr.f32.gmra.mrb[0].mxu0 %v530
  %v673 = vpop.f32.mrb[0].mxu0
  %v674 = vadd.f32 0.0, %v673
  %v675 = vpop.f32.mrb[0].mxu0
  %676 = vdwg.mxu0
  %v677 = vadd.f32 %v381, %v599
  %v678 = vadd.f32 %v386, %v604
  %v679 = vadd.f32 %v391, %v609
  %v680 = vadd.f32 %v396, %v614
  %v681 = vadd.f32 %v401, %v619
  %v682 = vadd.f32 %v406, %v624
  %v683 = vadd.f32 %v411, %v629
  %v684 = vadd.f32 %v416, %v634
  %v685 = vadd.f32 %v421, %v639
  %v686 = vadd.f32 %v426, %v644
  %v687 = vadd.f32 %v431, %v649
  %v688 = vadd.f32 %v436, %v654
  %v689 = vadd.f32 %v441, %v659
  %v690 = vadd.f32 %v446, %v664
  %v691 = vadd.f32 %v451, %v669
  %v692 = vadd.f32 %v456, %v674
  %v693 = vld [vmem:[%s2] sm:$0xff]
  %v694 = vld [vmem:[%s2 + $0x10] sm:$0xff]
  %v695 = vld [vmem:[%s2 + $0x20] sm:$0xff]
  %v696 = vld [vmem:[%s2 + $0x30] sm:$0xff]
  %v697 = vld [vmem:[%s2 + $0x40] sm:$0xff]
  %v698 = vld [vmem:[%s2 + $0x50] sm:$0xff]
  %v699 = vld [vmem:[%s2 + $0x60] sm:$0xff]
  %v700 = vld [vmem:[%s2 + $0x70] sm:$0xff]
  %v701 = vld [vmem:[%s2 + $0x90] sm:$0xff]
  %v702 = vld [vmem:[%s2 + $0xa0] sm:$0xff]
  %v703 = vld [vmem:[%s2 + $0xb0] sm:$0xff]
  %v704 = vld [vmem:[%s2 + $0xc0] sm:$0xff]
  %v705 = vld [vmem:[%s2 + $0xd0] sm:$0xff]
  %v706 = vld [vmem:[%s2 + $0xe0] sm:$0xff]
  %v707 = vld [vmem:[%s2 + $0xf0] sm:$0xff]
  %v708 = vld [vmem:[%s2 + $0x100] sm:$0xff]
  %s709 = scalar_lea.vmem %s4, 192
  %v710 = vld [vmem:[%s709] sm:$0xff]
  %v711 = vld [vmem:[%s709 + $0x8] sm:$0xff]
  %v712 = vld [vmem:[%s709 + $0x10] sm:$0xff]
  %v713 = vld [vmem:[%s709 + $0x18] sm:$0xff]
  %v714 = vld [vmem:[%s709 + $0x20] sm:$0xff]
  %v715 = vld [vmem:[%s709 + $0x28] sm:$0xff]
  %v716 = vld [vmem:[%s709 + $0x30] sm:$0xff]
  %v717 = vld [vmem:[%s709 + $0x38] sm:$0xff]
  %v719 = vsel %vm72, %v693, 0
  %v722 = vsel %vm72, %v694, 0
  %v725 = vsel %vm72, %v695, 0
  %v728 = vsel %vm72, %v696, 0
  %v731 = vsel %vm72, %v697, 0
  %v734 = vsel %vm72, %v698, 0
  %v737 = vsel %vm72, %v699, 0
  %v740 = vsel %vm72, %v700, 0
  %v743 = vsel %vm72, %v701, 0
  %v746 = vsel %vm72, %v702, 0
  %v749 = vsel %vm72, %v703, 0
  %v752 = vsel %vm72, %v704, 0
  %v755 = vsel %vm72, %v705, 0
  %v758 = vsel %vm72, %v706, 0
  %v761 = vsel %vm72, %v707, 0
  %v764 = vsel %vm72, %v708, 0
  %766 = vmatprep.subr.mxu0 0.0
  %767 = vmatpush1.msra.mxu0 %v710
  %768 = vmatprep.subr.mxu0 0.0
  %769 = vmatpush1.msra.mxu0 %v711
  %770 = vmatprep.subr.mxu0 0.0
  %771 = vmatpush1.msra.mxu0 %v712
  %772 = vmatprep.subr.mxu0 0.0
  %773 = vmatpush1.msra.mxu0 %v713
  %774 = vmatprep.subr.mxu0 0.0
  %775 = vmatpush1.msra.mxu0 %v714
  %776 = vmatprep.subr.mxu0 0.0
  %777 = vmatpush1.msra.mxu0 %v715
  %778 = vmatprep.subr.mxu0 0.0
  %779 = vmatpush1.msra.mxu0 %v716
  %780 = vmatprep.subr.mxu0 0.0
  %781 = vmatpush1.msra.mxu0 %v717
  %782 = vmatprep.subr.mxu0 0.0
  %783 = vmatpush1.msra.mxu0 0.0
  %784 = vmatprep.subr.mxu0 0.0
  %785 = vmatpush1.msra.mxu0 0.0
  %786 = vmatprep.subr.mxu0 0.0
  %787 = vmatpush1.msra.mxu0 0.0
  %788 = vmatprep.subr.mxu0 0.0
  %789 = vmatpush1.msra.mxu0 0.0
  %790 = vmatprep.subr.mxu0 0.0
  %791 = vmatpush1.msra.mxu0 0.0
  %792 = vmatprep.subr.mxu0 0.0
  %793 = vmatpush1.msra.mxu0 0.0
  %794 = vmatprep.subr.mxu0 0.0
  %795 = vmatpush1.msra.mxu0 0.0
  %796 = vmatprep.subr.mxu0 0.0
  %797 = vmatpush1.msra.mxu0 0.0
  %798 = vmatprep.subr.mxu0 0.0
  %799 = vmatpush1.msra.mxu0 0.0
  %800 = vmatprep.subr.mxu0 0.0
  %801 = vmatpush1.msra.mxu0 0.0
  %802 = vmatprep.subr.mxu0 0.0
  %803 = vmatpush1.msra.mxu0 0.0
  %804 = vmatprep.subr.mxu0 0.0
  %805 = vmatpush1.msra.mxu0 0.0
  %806 = vmatprep.subr.mxu0 0.0
  %807 = vmatpush1.msra.mxu0 0.0
  %808 = vmatprep.subr.mxu0 0.0
  %809 = vmatpush1.msra.mxu0 0.0
  %810 = vmatprep.subr.mxu0 0.0
  %811 = vmatpush1.msra.mxu0 0.0
  %812 = vmatprep.subr.mxu0 0.0
  %813 = vmatpush1.msra.mxu0 0.0
  %814 = vmatprep.subr.mxu0 0.0
  %815 = vmatpush1.msra.mxu0 0.0
  %816 = vmatprep.subr.mxu0 0.0
  %817 = vmatpush1.msra.mxu0 0.0
  %818 = vmatprep.subr.mxu0 0.0
  %819 = vmatpush1.msra.mxu0 0.0
  %820 = vmatprep.subr.mxu0 0.0
  %821 = vmatpush1.msra.mxu0 0.0
  %822 = vmatprep.subr.mxu0 0.0
  %823 = vmatpush1.msra.mxu0 0.0
  %824 = vmatprep.subr.mxu0 0.0
  %825 = vmatpush1.msra.mxu0 0.0
  %826 = vmatprep.subr.mxu0 0.0
  %827 = vmatpush1.msra.mxu0 0.0
  %828 = vmatprep.subr.mxu0 0.0
  %829 = vmatpush1.msra.mxu0 0.0
  %830 = vmatprep.mubr.f32.mxu0 0.0
  %831 = vmatmul.mubr.f32.gmra.mrb[0].mxu0 %v719
  %v832 = vpop.f32.mrb[0].mxu0
  %v833 = vadd.f32 0.0, %v832
  %v834 = vpop.f32.mrb[0].mxu0
  %835 = vmatprep.mubr.f32.mxu0 0.0
  %836 = vmatmul.mubr.f32.gmra.mrb[0].mxu0 %v722
  %v837 = vpop.f32.mrb[0].mxu0
  %v838 = vadd.f32 0.0, %v837
  %v839 = vpop.f32.mrb[0].mxu0
  %840 = vmatprep.mubr.f32.mxu0 0.0
  %841 = vmatmul.mubr.f32.gmra.mrb[0].mxu0 %v725
  %v842 = vpop.f32.mrb[0].mxu0
  %v843 = vadd.f32 0.0, %v842
  %v844 = vpop.f32.mrb[0].mxu0
  %845 = vmatprep.mubr.f32.mxu0 0.0
  %846 = vmatmul.mubr.f32.gmra.mrb[0].mxu0 %v728
  %v847 = vpop.f32.mrb[0].mxu0
  %v848 = vadd.f32 0.0, %v847
  %v849 = vpop.f32.mrb[0].mxu0
  %850 = vmatprep.mubr.f32.mxu0 0.0
  %851 = vmatmul.mubr.f32.gmra.mrb[0].mxu0 %v731
  %v852 = vpop.f32.mrb[0].mxu0
  %v853 = vadd.f32 0.0, %v852
  %v854 = vpop.f32.mrb[0].mxu0
  %855 = vmatprep.mubr.f32.mxu0 0.0
  %856 = vmatmul.mubr.f32.gmra.mrb[0].mxu0 %v734
  %v857 = vpop.f32.mrb[0].mxu0
  %v858 = vadd.f32 0.0, %v857
  %v859 = vpop.f32.mrb[0].mxu0
  %860 = vmatprep.mubr.f32.mxu0 0.0
  %861 = vmatmul.mubr.f32.gmra.mrb[0].mxu0 %v737
  %v862 = vpop.f32.mrb[0].mxu0
  %v863 = vadd.f32 0.0, %v862
  %v864 = vpop.f32.mrb[0].mxu0
  %865 = vmatprep.mubr.f32.mxu0 0.0
  %866 = vmatmul.mubr.f32.gmra.mrb[0].mxu0 %v740
  %v867 = vpop.f32.mrb[0].mxu0
  %v868 = vadd.f32 0.0, %v867
  %v869 = vpop.f32.mrb[0].mxu0
  %870 = vmatprep.mubr.f32.mxu0 0.0
  %871 = vmatmul.mubr.f32.gmra.mrb[0].mxu0 %v743
  %v872 = vpop.f32.mrb[0].mxu0
  %v873 = vadd.f32 0.0, %v872
  %v874 = vpop.f32.mrb[0].mxu0
  %875 = vmatprep.mubr.f32.mxu0 0.0
  %876 = vmatmul.mubr.f32.gmra.mrb[0].mxu0 %v746
  %v877 = vpop.f32.mrb[0].mxu0
  %v878 = vadd.f32 0.0, %v877
  %v879 = vpop.f32.mrb[0].mxu0
  %880 = vmatprep.mubr.f32.mxu0 0.0
  %881 = vmatmul.mubr.f32.gmra.mrb[0].mxu0 %v749
  %v882 = vpop.f32.mrb[0].mxu0
  %v883 = vadd.f32 0.0, %v882
  %v884 = vpop.f32.mrb[0].mxu0
  %885 = vmatprep.mubr.f32.mxu0 0.0
  %886 = vmatmul.mubr.f32.gmra.mrb[0].mxu0 %v752
  %v887 = vpop.f32.mrb[0].mxu0
  %v888 = vadd.f32 0.0, %v887
  %v889 = vpop.f32.mrb[0].mxu0
  %890 = vmatprep.mubr.f32.mxu0 0.0
  %891 = vmatmul.mubr.f32.gmra.mrb[0].mxu0 %v755
  %v892 = vpop.f32.mrb[0].mxu0
  %v893 = vadd.f32 0.0, %v892
  %v894 = vpop.f32.mrb[0].mxu0
  %895 = vmatprep.mubr.f32.mxu0 0.0
  %896 = vmatmul.mubr.f32.gmra.mrb[0].mxu0 %v758
  %v897 = vpop.f32.mrb[0].mxu0
  %v898 = vadd.f32 0.0, %v897
  %v899 = vpop.f32.mrb[0].mxu0
  %900 = vmatprep.mubr.f32.mxu0 0.0
  %901 = vmatmul.mubr.f32.gmra.mrb[0].mxu0 %v761
  %v902 = vpop.f32.mrb[0].mxu0
  %v903 = vadd.f32 0.0, %v902
  %v904 = vpop.f32.mrb[0].mxu0
  %905 = vmatprep.mubr.f32.mxu0 0.0
  %906 = vmatmul.mubr.f32.gmra.mrb[0].mxu0 %v764
  %v907 = vpop.f32.mrb[0].mxu0
  %v908 = vadd.f32 0.0, %v907
  %v909 = vpop.f32.mrb[0].mxu0
  %910 = vdwg.mxu0
  %v911 = vadd.f32 %v677, %v833
  %v912 = vadd.f32 %v678, %v838
  %v913 = vadd.f32 %v679, %v843
  %v914 = vadd.f32 %v680, %v848
  %v915 = vadd.f32 %v681, %v853
  %v916 = vadd.f32 %v682, %v858
  %v917 = vadd.f32 %v683, %v863
  %v918 = vadd.f32 %v684, %v868
  %v919 = vadd.f32 %v685, %v873
  %v920 = vadd.f32 %v686, %v878
  %v921 = vadd.f32 %v687, %v883
  %v922 = vadd.f32 %v688, %v888
  %v923 = vadd.f32 %v689, %v893
  %v924 = vadd.f32 %v690, %v898
  %v925 = vadd.f32 %v691, %v903
  %v926 = vadd.f32 %v692, %v908
  %v927 = vld [vmem:[%s3] sm:$0xff]
  %v928 = vld [vmem:[%s3 + $0x10] sm:$0xff]
  %v929 = vld [vmem:[%s3 + $0x20] sm:$0xff]
  %v930 = vld [vmem:[%s3 + $0x30] sm:$0xff]
  %v931 = vld [vmem:[%s3 + $0x40] sm:$0xff]
  %v932 = vld [vmem:[%s3 + $0x50] sm:$0xff]
  %v933 = vld [vmem:[%s3 + $0x60] sm:$0xff]
  %v934 = vld [vmem:[%s3 + $0x70] sm:$0xff]
  %v935 = vld [vmem:[%s3 + $0x90] sm:$0xff]
  %v936 = vld [vmem:[%s3 + $0xa0] sm:$0xff]
  %v937 = vld [vmem:[%s3 + $0xb0] sm:$0xff]
  %v938 = vld [vmem:[%s3 + $0xc0] sm:$0xff]
  %v939 = vld [vmem:[%s3 + $0xd0] sm:$0xff]
  %v940 = vld [vmem:[%s3 + $0xe0] sm:$0xff]
  %v941 = vld [vmem:[%s3 + $0xf0] sm:$0xff]
  %v942 = vld [vmem:[%s3 + $0x100] sm:$0xff]
  %s943 = scalar_lea.vmem %s4, 256
  %v944 = vld [vmem:[%s943] sm:$0xff]
  %v945 = vld [vmem:[%s943 + $0x8] sm:$0xff]
  %v946 = vld [vmem:[%s943 + $0x10] sm:$0xff]
  %v947 = vld [vmem:[%s943 + $0x18] sm:$0xff]
  %v948 = vld [vmem:[%s943 + $0x20] sm:$0xff]
  %v949 = vld [vmem:[%s943 + $0x28] sm:$0xff]
  %v950 = vld [vmem:[%s943 + $0x30] sm:$0xff]
  %v951 = vld [vmem:[%s943 + $0x38] sm:$0xff]
  %v953 = vsel %vm72, %v927, 0
  %v956 = vsel %vm72, %v928, 0
  %v959 = vsel %vm72, %v929, 0
  %v962 = vsel %vm72, %v930, 0
  %v965 = vsel %vm72, %v931, 0
  %v968 = vsel %vm72, %v932, 0
  %v971 = vsel %vm72, %v933, 0
  %v974 = vsel %vm72, %v934, 0
  %v977 = vsel %vm72, %v935, 0
  %v980 = vsel %vm72, %v936, 0
  %v983 = vsel %vm72, %v937, 0
  %v986 = vsel %vm72, %v938, 0
  %v989 = vsel %vm72, %v939, 0
  %v992 = vsel %vm72, %v940, 0
  %v995 = vsel %vm72, %v941, 0
  %v998 = vsel %vm72, %v942, 0
  %1000 = vmatprep.subr.mxu0 0.0
  %1001 = vmatpush1.msra.mxu0 %v944
  %1002 = vmatprep.subr.mxu0 0.0
  %1003 = vmatpush1.msra.mxu0 %v945
  %1004 = vmatprep.subr.mxu0 0.0
  %1005 = vmatpush1.msra.mxu0 %v946
  %1006 = vmatprep.subr.mxu0 0.0
  %1007 = vmatpush1.msra.mxu0 %v947
  %1008 = vmatprep.subr.mxu0 0.0
  %1009 = vmatpush1.msra.mxu0 %v948
  %1010 = vmatprep.subr.mxu0 0.0
  %1011 = vmatpush1.msra.mxu0 %v949
  %1012 = vmatprep.subr.mxu0 0.0
  %1013 = vmatpush1.msra.mxu0 %v950
  %1014 = vmatprep.subr.mxu0 0.0
  %1015 = vmatpush1.msra.mxu0 %v951
  %1016 = vmatprep.subr.mxu0 0.0
  %1017 = vmatpush1.msra.mxu0 0.0
  %1018 = vmatprep.subr.mxu0 0.0
  %1019 = vmatpush1.msra.mxu0 0.0
  %1020 = vmatprep.subr.mxu0 0.0
  %1021 = vmatpush1.msra.mxu0 0.0
  %1022 = vmatprep.subr.mxu0 0.0
  %1023 = vmatpush1.msra.mxu0 0.0
  %1024 = vmatprep.subr.mxu0 0.0
  %1025 = vmatpush1.msra.mxu0 0.0
  %1026 = vmatprep.subr.mxu0 0.0
  %1027 = vmatpush1.msra.mxu0 0.0
  %1028 = vmatprep.subr.mxu0 0.0
  %1029 = vmatpush1.msra.mxu0 0.0
  %1030 = vmatprep.subr.mxu0 0.0
  %1031 = vmatpush1.msra.mxu0 0.0
  %1032 = vmatprep.subr.mxu0 0.0
  %1033 = vmatpush1.msra.mxu0 0.0
  %1034 = vmatprep.subr.mxu0 0.0
  %1035 = vmatpush1.msra.mxu0 0.0
  %1036 = vmatprep.subr.mxu0 0.0
  %1037 = vmatpush1.msra.mxu0 0.0
  %1038 = vmatprep.subr.mxu0 0.0
  %1039 = vmatpush1.msra.mxu0 0.0
  %1040 = vmatprep.subr.mxu0 0.0
  %1041 = vmatpush1.msra.mxu0 0.0
  %1042 = vmatprep.subr.mxu0 0.0
  %1043 = vmatpush1.msra.mxu0 0.0
  %1044 = vmatprep.subr.mxu0 0.0
  %1045 = vmatpush1.msra.mxu0 0.0
  %1046 = vmatprep.subr.mxu0 0.0
  %1047 = vmatpush1.msra.mxu0 0.0
  %1048 = vmatprep.subr.mxu0 0.0
  %1049 = vmatpush1.msra.mxu0 0.0
  %1050 = vmatprep.subr.mxu0 0.0
  %1051 = vmatpush1.msra.mxu0 0.0
  %1052 = vmatprep.subr.mxu0 0.0
  %1053 = vmatpush1.msra.mxu0 0.0
  %1054 = vmatprep.subr.mxu0 0.0
  %1055 = vmatpush1.msra.mxu0 0.0
  %1056 = vmatprep.subr.mxu0 0.0
  %1057 = vmatpush1.msra.mxu0 0.0
  %1058 = vmatprep.subr.mxu0 0.0
  %1059 = vmatpush1.msra.mxu0 0.0
  %1060 = vmatprep.subr.mxu0 0.0
  %1061 = vmatpush1.msra.mxu0 0.0
  %1062 = vmatprep.subr.mxu0 0.0
  %1063 = vmatpush1.msra.mxu0 0.0
  %1064 = vmatprep.mubr.f32.mxu0 0.0
  %1065 = vmatmul.mubr.f32.gmra.mrb[0].mxu0 %v953
  %v1066 = vpop.f32.mrb[0].mxu0
  %v1067 = vadd.f32 0.0, %v1066
  %v1068 = vpop.f32.mrb[0].mxu0
  %1069 = vmatprep.mubr.f32.mxu0 0.0
  %1070 = vmatmul.mubr.f32.gmra.mrb[0].mxu0 %v956
  %v1071 = vpop.f32.mrb[0].mxu0
  %v1072 = vadd.f32 0.0, %v1071
  %v1073 = vpop.f32.mrb[0].mxu0
  %1074 = vmatprep.mubr.f32.mxu0 0.0
  %1075 = vmatmul.mubr.f32.gmra.mrb[0].mxu0 %v959
  %v1076 = vpop.f32.mrb[0].mxu0
  %v1077 = vadd.f32 0.0, %v1076
  %v1078 = vpop.f32.mrb[0].mxu0
  %1079 = vmatprep.mubr.f32.mxu0 0.0
  %1080 = vmatmul.mubr.f32.gmra.mrb[0].mxu0 %v962
  %v1081 = vpop.f32.mrb[0].mxu0
  %v1082 = vadd.f32 0.0, %v1081
  %v1083 = vpop.f32.mrb[0].mxu0
  %1084 = vmatprep.mubr.f32.mxu0 0.0
  %1085 = vmatmul.mubr.f32.gmra.mrb[0].mxu0 %v965
  %v1086 = vpop.f32.mrb[0].mxu0
  %v1087 = vadd.f32 0.0, %v1086
  %v1088 = vpop.f32.mrb[0].mxu0
  %1089 = vmatprep.mubr.f32.mxu0 0.0
  %1090 = vmatmul.mubr.f32.gmra.mrb[0].mxu0 %v968
  %v1091 = vpop.f32.mrb[0].mxu0
  %v1092 = vadd.f32 0.0, %v1091
  %v1093 = vpop.f32.mrb[0].mxu0
  %1094 = vmatprep.mubr.f32.mxu0 0.0
  %1095 = vmatmul.mubr.f32.gmra.mrb[0].mxu0 %v971
  %v1096 = vpop.f32.mrb[0].mxu0
  %v1097 = vadd.f32 0.0, %v1096
  %v1098 = vpop.f32.mrb[0].mxu0
  %1099 = vmatprep.mubr.f32.mxu0 0.0
  %1100 = vmatmul.mubr.f32.gmra.mrb[0].mxu0 %v974
  %v1101 = vpop.f32.mrb[0].mxu0
  %v1102 = vadd.f32 0.0, %v1101
  %v1103 = vpop.f32.mrb[0].mxu0
  %1104 = vmatprep.mubr.f32.mxu0 0.0
  %1105 = vmatmul.mubr.f32.gmra.mrb[0].mxu0 %v977
  %v1106 = vpop.f32.mrb[0].mxu0
  %v1107 = vadd.f32 0.0, %v1106
  %v1108 = vpop.f32.mrb[0].mxu0
  %1109 = vmatprep.mubr.f32.mxu0 0.0
  %1110 = vmatmul.mubr.f32.gmra.mrb[0].mxu0 %v980
  %v1111 = vpop.f32.mrb[0].mxu0
  %v1112 = vadd.f32 0.0, %v1111
  %v1113 = vpop.f32.mrb[0].mxu0
  %1114 = vmatprep.mubr.f32.mxu0 0.0
  %1115 = vmatmul.mubr.f32.gmra.mrb[0].mxu0 %v983
  %v1116 = vpop.f32.mrb[0].mxu0
  %v1117 = vadd.f32 0.0, %v1116
  %v1118 = vpop.f32.mrb[0].mxu0
  %1119 = vmatprep.mubr.f32.mxu0 0.0
  %1120 = vmatmul.mubr.f32.gmra.mrb[0].mxu0 %v986
  %v1121 = vpop.f32.mrb[0].mxu0
  %v1122 = vadd.f32 0.0, %v1121
  %v1123 = vpop.f32.mrb[0].mxu0
  %1124 = vmatprep.mubr.f32.mxu0 0.0
  %1125 = vmatmul.mubr.f32.gmra.mrb[0].mxu0 %v989
  %v1126 = vpop.f32.mrb[0].mxu0
  %v1127 = vadd.f32 0.0, %v1126
  %v1128 = vpop.f32.mrb[0].mxu0
  %1129 = vmatprep.mubr.f32.mxu0 0.0
  %1130 = vmatmul.mubr.f32.gmra.mrb[0].mxu0 %v992
  %v1131 = vpop.f32.mrb[0].mxu0
  %v1132 = vadd.f32 0.0, %v1131
  %v1133 = vpop.f32.mrb[0].mxu0
  %1134 = vmatprep.mubr.f32.mxu0 0.0
  %1135 = vmatmul.mubr.f32.gmra.mrb[0].mxu0 %v995
  %v1136 = vpop.f32.mrb[0].mxu0
  %v1137 = vadd.f32 0.0, %v1136
  %v1138 = vpop.f32.mrb[0].mxu0
  %1139 = vmatprep.mubr.f32.mxu0 0.0
  %1140 = vmatmul.mubr.f32.gmra.mrb[0].mxu0 %v998
  %v1141 = vpop.f32.mrb[0].mxu0
  %v1142 = vadd.f32 0.0, %v1141
  %v1143 = vpop.f32.mrb[0].mxu0
  %1144 = vdwg.mxu0
  %v1145 = vadd.f32 %v911, %v1067
  %v1146 = vadd.f32 %v912, %v1072
  %v1147 = vadd.f32 %v913, %v1077
  %v1148 = vadd.f32 %v914, %v1082
  %v1149 = vadd.f32 %v915, %v1087
  %v1150 = vadd.f32 %v916, %v1092
  %v1151 = vadd.f32 %v917, %v1097
  %v1152 = vadd.f32 %v918, %v1102
  %v1153 = vadd.f32 %v919, %v1107
  %v1154 = vadd.f32 %v920, %v1112
  %v1155 = vadd.f32 %v921, %v1117
  %v1156 = vadd.f32 %v922, %v1122
  %v1157 = vadd.f32 %v923, %v1127
  %v1158 = vadd.f32 %v924, %v1132
  %v1159 = vadd.f32 %v925, %v1137
  %v1160 = vadd.f32 %v926, %v1142
  %v1161 = vld [vmem:[%s2 + $0x1] sm:$0xff]
  %v1162 = vld [vmem:[%s2 + $0x11] sm:$0xff]
  %v1163 = vld [vmem:[%s2 + $0x21] sm:$0xff]
  %v1164 = vld [vmem:[%s2 + $0x31] sm:$0xff]
  %v1165 = vld [vmem:[%s2 + $0x41] sm:$0xff]
  %v1166 = vld [vmem:[%s2 + $0x51] sm:$0xff]
  %v1167 = vld [vmem:[%s2 + $0x61] sm:$0xff]
  %v1168 = vld [vmem:[%s2 + $0x71] sm:$0xff]
  %v1169 = vld [vmem:[%s2 + $0x91] sm:$0xff]
  %v1170 = vld [vmem:[%s2 + $0xa1] sm:$0xff]
  %v1171 = vld [vmem:[%s2 + $0xb1] sm:$0xff]
  %v1172 = vld [vmem:[%s2 + $0xc1] sm:$0xff]
  %v1173 = vld [vmem:[%s2 + $0xd1] sm:$0xff]
  %v1174 = vld [vmem:[%s2 + $0xe1] sm:$0xff]
  %v1175 = vld [vmem:[%s2 + $0xf1] sm:$0xff]
  %v1176 = vld [vmem:[%s2 + $0x101] sm:$0xff]
  %s1177 = scalar_lea.vmem %s4, 320
  %v1178 = vld [vmem:[%s1177] sm:$0xff]
  %v1179 = vld [vmem:[%s1177 + $0x8] sm:$0xff]
  %v1180 = vld [vmem:[%s1177 + $0x10] sm:$0xff]
  %v1181 = vld [vmem:[%s1177 + $0x18] sm:$0xff]
  %v1182 = vld [vmem:[%s1177 + $0x20] sm:$0xff]
  %v1183 = vld [vmem:[%s1177 + $0x28] sm:$0xff]
  %v1184 = vld [vmem:[%s1177 + $0x30] sm:$0xff]
  %v1185 = vld [vmem:[%s1177 + $0x38] sm:$0xff]
  %v1187 = vsel %vm72, %v1161, 0
  %v1190 = vsel %vm72, %v1162, 0
  %v1193 = vsel %vm72, %v1163, 0
  %v1196 = vsel %vm72, %v1164, 0
  %v1199 = vsel %vm72, %v1165, 0
  %v1202 = vsel %vm72, %v1166, 0
  %v1205 = vsel %vm72, %v1167, 0
  %v1208 = vsel %vm72, %v1168, 0
  %v1211 = vsel %vm72, %v1169, 0
  %v1214 = vsel %vm72, %v1170, 0
  %v1217 = vsel %vm72, %v1171, 0
  %v1220 = vsel %vm72, %v1172, 0
  %v1223 = vsel %vm72, %v1173, 0
  %v1226 = vsel %vm72, %v1174, 0
  %v1229 = vsel %vm72, %v1175, 0
  %v1232 = vsel %vm72, %v1176, 0
  %1234 = vmatprep.subr.mxu0 0.0
  %1235 = vmatpush1.msra.mxu0 %v1178
  %1236 = vmatprep.subr.mxu0 0.0
  %1237 = vmatpush1.msra.mxu0 %v1179
  %1238 = vmatprep.subr.mxu0 0.0
  %1239 = vmatpush1.msra.mxu0 %v1180
  %1240 = vmatprep.subr.mxu0 0.0
  %1241 = vmatpush1.msra.mxu0 %v1181
  %1242 = vmatprep.subr.mxu0 0.0
  %1243 = vmatpush1.msra.mxu0 %v1182
  %1244 = vmatprep.subr.mxu0 0.0
  %1245 = vmatpush1.msra.mxu0 %v1183
  %1246 = vmatprep.subr.mxu0 0.0
  %1247 = vmatpush1.msra.mxu0 %v1184
  %1248 = vmatprep.subr.mxu0 0.0
  %1249 = vmatpush1.msra.mxu0 %v1185
  %1250 = vmatprep.subr.mxu0 0.0
  %1251 = vmatpush1.msra.mxu0 0.0
  %1252 = vmatprep.subr.mxu0 0.0
  %1253 = vmatpush1.msra.mxu0 0.0
  %1254 = vmatprep.subr.mxu0 0.0
  %1255 = vmatpush1.msra.mxu0 0.0
  %1256 = vmatprep.subr.mxu0 0.0
  %1257 = vmatpush1.msra.mxu0 0.0
  %1258 = vmatprep.subr.mxu0 0.0
  %1259 = vmatpush1.msra.mxu0 0.0
  %1260 = vmatprep.subr.mxu0 0.0
  %1261 = vmatpush1.msra.mxu0 0.0
  %1262 = vmatprep.subr.mxu0 0.0
  %1263 = vmatpush1.msra.mxu0 0.0
  %1264 = vmatprep.subr.mxu0 0.0
  %1265 = vmatpush1.msra.mxu0 0.0
  %1266 = vmatprep.subr.mxu0 0.0
  %1267 = vmatpush1.msra.mxu0 0.0
  %1268 = vmatprep.subr.mxu0 0.0
  %1269 = vmatpush1.msra.mxu0 0.0
  %1270 = vmatprep.subr.mxu0 0.0
  %1271 = vmatpush1.msra.mxu0 0.0
  %1272 = vmatprep.subr.mxu0 0.0
  %1273 = vmatpush1.msra.mxu0 0.0
  %1274 = vmatprep.subr.mxu0 0.0
  %1275 = vmatpush1.msra.mxu0 0.0
  %1276 = vmatprep.subr.mxu0 0.0
  %1277 = vmatpush1.msra.mxu0 0.0
  %1278 = vmatprep.subr.mxu0 0.0
  %1279 = vmatpush1.msra.mxu0 0.0
  %1280 = vmatprep.subr.mxu0 0.0
  %1281 = vmatpush1.msra.mxu0 0.0
  %1282 = vmatprep.subr.mxu0 0.0
  %1283 = vmatpush1.msra.mxu0 0.0
  %1284 = vmatprep.subr.mxu0 0.0
  %1285 = vmatpush1.msra.mxu0 0.0
  %1286 = vmatprep.subr.mxu0 0.0
  %1287 = vmatpush1.msra.mxu0 0.0
  %1288 = vmatprep.subr.mxu0 0.0
  %1289 = vmatpush1.msra.mxu0 0.0
  %1290 = vmatprep.subr.mxu0 0.0
  %1291 = vmatpush1.msra.mxu0 0.0
  %1292 = vmatprep.subr.mxu0 0.0
  %1293 = vmatpush1.msra.mxu0 0.0
  %1294 = vmatprep.subr.mxu0 0.0
  %1295 = vmatpush1.msra.mxu0 0.0
  %1296 = vmatprep.subr.mxu0 0.0
  %1297 = vmatpush1.msra.mxu0 0.0
  %1298 = vmatprep.mubr.f32.mxu0 0.0
  %1299 = vmatmul.mubr.f32.gmra.mrb[0].mxu0 %v1187
  %v1300 = vpop.f32.mrb[0].mxu0
  %v1301 = vadd.f32 0.0, %v1300
  %v1302 = vpop.f32.mrb[0].mxu0
  %1303 = vmatprep.mubr.f32.mxu0 0.0
  %1304 = vmatmul.mubr.f32.gmra.mrb[0].mxu0 %v1190
  %v1305 = vpop.f32.mrb[0].mxu0
  %v1306 = vadd.f32 0.0, %v1305
  %v1307 = vpop.f32.mrb[0].mxu0
  %1308 = vmatprep.mubr.f32.mxu0 0.0
  %1309 = vmatmul.mubr.f32.gmra.mrb[0].mxu0 %v1193
  %v1310 = vpop.f32.mrb[0].mxu0
  %v1311 = vadd.f32 0.0, %v1310
  %v1312 = vpop.f32.mrb[0].mxu0
  %1313 = vmatprep.mubr.f32.mxu0 0.0
  %1314 = vmatmul.mubr.f32.gmra.mrb[0].mxu0 %v1196
  %v1315 = vpop.f32.mrb[0].mxu0
  %v1316 = vadd.f32 0.0, %v1315
  %v1317 = vpop.f32.mrb[0].mxu0
  %1318 = vmatprep.mubr.f32.mxu0 0.0
  %1319 = vmatmul.mubr.f32.gmra.mrb[0].mxu0 %v1199
  %v1320 = vpop.f32.mrb[0].mxu0
  %v1321 = vadd.f32 0.0, %v1320
  %v1322 = vpop.f32.mrb[0].mxu0
  %1323 = vmatprep.mubr.f32.mxu0 0.0
  %1324 = vmatmul.mubr.f32.gmra.mrb[0].mxu0 %v1202
  %v1325 = vpop.f32.mrb[0].mxu0
  %v1326 = vadd.f32 0.0, %v1325
  %v1327 = vpop.f32.mrb[0].mxu0
  %1328 = vmatprep.mubr.f32.mxu0 0.0
  %1329 = vmatmul.mubr.f32.gmra.mrb[0].mxu0 %v1205
  %v1330 = vpop.f32.mrb[0].mxu0
  %v1331 = vadd.f32 0.0, %v1330
  %v1332 = vpop.f32.mrb[0].mxu0
  %1333 = vmatprep.mubr.f32.mxu0 0.0
  %1334 = vmatmul.mubr.f32.gmra.mrb[0].mxu0 %v1208
  %v1335 = vpop.f32.mrb[0].mxu0
  %v1336 = vadd.f32 0.0, %v1335
  %v1337 = vpop.f32.mrb[0].mxu0
  %1338 = vmatprep.mubr.f32.mxu0 0.0
  %1339 = vmatmul.mubr.f32.gmra.mrb[0].mxu0 %v1211
  %v1340 = vpop.f32.mrb[0].mxu0
  %v1341 = vadd.f32 0.0, %v1340
  %v1342 = vpop.f32.mrb[0].mxu0
  %1343 = vmatprep.mubr.f32.mxu0 0.0
  %1344 = vmatmul.mubr.f32.gmra.mrb[0].mxu0 %v1214
  %v1345 = vpop.f32.mrb[0].mxu0
  %v1346 = vadd.f32 0.0, %v1345
  %v1347 = vpop.f32.mrb[0].mxu0
  %1348 = vmatprep.mubr.f32.mxu0 0.0
  %1349 = vmatmul.mubr.f32.gmra.mrb[0].mxu0 %v1217
  %v1350 = vpop.f32.mrb[0].mxu0
  %v1351 = vadd.f32 0.0, %v1350
  %v1352 = vpop.f32.mrb[0].mxu0
  %1353 = vmatprep.mubr.f32.mxu0 0.0
  %1354 = vmatmul.mubr.f32.gmra.mrb[0].mxu0 %v1220
  %v1355 = vpop.f32.mrb[0].mxu0
  %v1356 = vadd.f32 0.0, %v1355
  %v1357 = vpop.f32.mrb[0].mxu0
  %1358 = vmatprep.mubr.f32.mxu0 0.0
  %1359 = vmatmul.mubr.f32.gmra.mrb[0].mxu0 %v1223
  %v1360 = vpop.f32.mrb[0].mxu0
  %v1361 = vadd.f32 0.0, %v1360
  %v1362 = vpop.f32.mrb[0].mxu0
  %1363 = vmatprep.mubr.f32.mxu0 0.0
  %1364 = vmatmul.mubr.f32.gmra.mrb[0].mxu0 %v1226
  %v1365 = vpop.f32.mrb[0].mxu0
  %v1366 = vadd.f32 0.0, %v1365
  %v1367 = vpop.f32.mrb[0].mxu0
  %1368 = vmatprep.mubr.f32.mxu0 0.0
  %1369 = vmatmul.mubr.f32.gmra.mrb[0].mxu0 %v1229
  %v1370 = vpop.f32.mrb[0].mxu0
  %v1371 = vadd.f32 0.0, %v1370
  %v1372 = vpop.f32.mrb[0].mxu0
  %1373 = vmatprep.mubr.f32.mxu0 0.0
  %1374 = vmatmul.mubr.f32.gmra.mrb[0].mxu0 %v1232
  %v1375 = vpop.f32.mrb[0].mxu0
  %v1376 = vadd.f32 0.0, %v1375
  %v1377 = vpop.f32.mrb[0].mxu0
  %1378 = vdwg.mxu0
  %v1379 = vadd.f32 %v1145, %v1301
  %v1380 = vadd.f32 %v1146, %v1306
  %v1381 = vadd.f32 %v1147, %v1311
  %v1382 = vadd.f32 %v1148, %v1316
  %v1383 = vadd.f32 %v1149, %v1321
  %v1384 = vadd.f32 %v1150, %v1326
  %v1385 = vadd.f32 %v1151, %v1331
  %v1386 = vadd.f32 %v1152, %v1336
  %v1387 = vadd.f32 %v1153, %v1341
  %v1388 = vadd.f32 %v1154, %v1346
  %v1389 = vadd.f32 %v1155, %v1351
  %v1390 = vadd.f32 %v1156, %v1356
  %v1391 = vadd.f32 %v1157, %v1361
  %v1392 = vadd.f32 %v1158, %v1366
  %v1393 = vadd.f32 %v1159, %v1371
  %v1394 = vadd.f32 %v1160, %v1376
  %s1395 = scalar_lea.vmem %s0, 16
  %v1396 = vld [vmem:[%s1395] sm:$0xff]
  %v1397 = vld [vmem:[%s1395 + $0x10] sm:$0xff]
  %v1398 = vld [vmem:[%s1395 + $0x20] sm:$0xff]
  %v1399 = vld [vmem:[%s1395 + $0x30] sm:$0xff]
  %v1400 = vld [vmem:[%s1395 + $0x40] sm:$0xff]
  %v1401 = vld [vmem:[%s1395 + $0x50] sm:$0xff]
  %v1402 = vld [vmem:[%s1395 + $0x60] sm:$0xff]
  %v1403 = vld [vmem:[%s1395 + $0x70] sm:$0xff]
  %v1404 = vld [vmem:[%s1395 + $0x90] sm:$0xff]
  %v1405 = vld [vmem:[%s1395 + $0xa0] sm:$0xff]
  %v1406 = vld [vmem:[%s1395 + $0xb0] sm:$0xff]
  %v1407 = vld [vmem:[%s1395 + $0xc0] sm:$0xff]
  %v1408 = vld [vmem:[%s1395 + $0xd0] sm:$0xff]
  %v1409 = vld [vmem:[%s1395 + $0xe0] sm:$0xff]
  %v1410 = vld [vmem:[%s1395 + $0xf0] sm:$0xff]
  %v1411 = vld [vmem:[%s1395 + $0x100] sm:$0xff]
  %s1412 = scalar_lea.vmem %s4, 384
  %v1413 = vld [vmem:[%s1412] sm:$0xff]
  %v1414 = vld [vmem:[%s1412 + $0x8] sm:$0xff]
  %v1415 = vld [vmem:[%s1412 + $0x10] sm:$0xff]
  %v1416 = vld [vmem:[%s1412 + $0x18] sm:$0xff]
  %v1417 = vld [vmem:[%s1412 + $0x20] sm:$0xff]
  %v1418 = vld [vmem:[%s1412 + $0x28] sm:$0xff]
  %v1419 = vld [vmem:[%s1412 + $0x30] sm:$0xff]
  %v1420 = vld [vmem:[%s1412 + $0x38] sm:$0xff]
  %v1422 = vsel %vm72, %v1396, 0
  %v1425 = vsel %vm72, %v1397, 0
  %v1428 = vsel %vm72, %v1398, 0
  %v1431 = vsel %vm72, %v1399, 0
  %v1434 = vsel %vm72, %v1400, 0
  %v1437 = vsel %vm72, %v1401, 0
  %v1440 = vsel %vm72, %v1402, 0
  %v1443 = vsel %vm72, %v1403, 0
  %v1446 = vsel %vm72, %v1404, 0
  %v1449 = vsel %vm72, %v1405, 0
  %v1452 = vsel %vm72, %v1406, 0
  %v1455 = vsel %vm72, %v1407, 0
  %v1458 = vsel %vm72, %v1408, 0
  %v1461 = vsel %vm72, %v1409, 0
  %v1464 = vsel %vm72, %v1410, 0
  %v1467 = vsel %vm72, %v1411, 0
  %1469 = vmatprep.subr.mxu0 0.0
  %1470 = vmatpush1.msra.mxu0 %v1413
  %1471 = vmatprep.subr.mxu0 0.0
  %1472 = vmatpush1.msra.mxu0 %v1414
  %1473 = vmatprep.subr.mxu0 0.0
  %1474 = vmatpush1.msra.mxu0 %v1415
  %1475 = vmatprep.subr.mxu0 0.0
  %1476 = vmatpush1.msra.mxu0 %v1416
  %1477 = vmatprep.subr.mxu0 0.0
  %1478 = vmatpush1.msra.mxu0 %v1417
  %1479 = vmatprep.subr.mxu0 0.0
  %1480 = vmatpush1.msra.mxu0 %v1418
  %1481 = vmatprep.subr.mxu0 0.0
  %1482 = vmatpush1.msra.mxu0 %v1419
  %1483 = vmatprep.subr.mxu0 0.0
  %1484 = vmatpush1.msra.mxu0 %v1420
  %1485 = vmatprep.subr.mxu0 0.0
  %1486 = vmatpush1.msra.mxu0 0.0
  %1487 = vmatprep.subr.mxu0 0.0
  %1488 = vmatpush1.msra.mxu0 0.0
  %1489 = vmatprep.subr.mxu0 0.0
  %1490 = vmatpush1.msra.mxu0 0.0
  %1491 = vmatprep.subr.mxu0 0.0
  %1492 = vmatpush1.msra.mxu0 0.0
  %1493 = vmatprep.subr.mxu0 0.0
  %1494 = vmatpush1.msra.mxu0 0.0
  %1495 = vmatprep.subr.mxu0 0.0
  %1496 = vmatpush1.msra.mxu0 0.0
  %1497 = vmatprep.subr.mxu0 0.0
  %1498 = vmatpush1.msra.mxu0 0.0
  %1499 = vmatprep.subr.mxu0 0.0
  %1500 = vmatpush1.msra.mxu0 0.0
  %1501 = vmatprep.subr.mxu0 0.0
  %1502 = vmatpush1.msra.mxu0 0.0
  %1503 = vmatprep.subr.mxu0 0.0
  %1504 = vmatpush1.msra.mxu0 0.0
  %1505 = vmatprep.subr.mxu0 0.0
  %1506 = vmatpush1.msra.mxu0 0.0
  %1507 = vmatprep.subr.mxu0 0.0
  %1508 = vmatpush1.msra.mxu0 0.0
  %1509 = vmatprep.subr.mxu0 0.0
  %1510 = vmatpush1.msra.mxu0 0.0
  %1511 = vmatprep.subr.mxu0 0.0
  %1512 = vmatpush1.msra.mxu0 0.0
  %1513 = vmatprep.subr.mxu0 0.0
  %1514 = vmatpush1.msra.mxu0 0.0
  %1515 = vmatprep.subr.mxu0 0.0
  %1516 = vmatpush1.msra.mxu0 0.0
  %1517 = vmatprep.subr.mxu0 0.0
  %1518 = vmatpush1.msra.mxu0 0.0
  %1519 = vmatprep.subr.mxu0 0.0
  %1520 = vmatpush1.msra.mxu0 0.0
  %1521 = vmatprep.subr.mxu0 0.0
  %1522 = vmatpush1.msra.mxu0 0.0
  %1523 = vmatprep.subr.mxu0 0.0
  %1524 = vmatpush1.msra.mxu0 0.0
  %1525 = vmatprep.subr.mxu0 0.0
  %1526 = vmatpush1.msra.mxu0 0.0
  %1527 = vmatprep.subr.mxu0 0.0
  %1528 = vmatpush1.msra.mxu0 0.0
  %1529 = vmatprep.subr.mxu0 0.0
  %1530 = vmatpush1.msra.mxu0 0.0
  %1531 = vmatprep.subr.mxu0 0.0
  %1532 = vmatpush1.msra.mxu0 0.0
  %1533 = vmatprep.mubr.f32.mxu0 0.0
  %1534 = vmatmul.mubr.f32.gmra.mrb[0].mxu0 %v1422
  %v1535 = vpop.f32.mrb[0].mxu0
  %v1536 = vadd.f32 0.0, %v1535
  %v1537 = vpop.f32.mrb[0].mxu0
  %1538 = vmatprep.mubr.f32.mxu0 0.0
  %1539 = vmatmul.mubr.f32.gmra.mrb[0].mxu0 %v1425
  %v1540 = vpop.f32.mrb[0].mxu0
  %v1541 = vadd.f32 0.0, %v1540
  %v1542 = vpop.f32.mrb[0].mxu0
  %1543 = vmatprep.mubr.f32.mxu0 0.0
  %1544 = vmatmul.mubr.f32.gmra.mrb[0].mxu0 %v1428
  %v1545 = vpop.f32.mrb[0].mxu0
  %v1546 = vadd.f32 0.0, %v1545
  %v1547 = vpop.f32.mrb[0].mxu0
  %1548 = vmatprep.mubr.f32.mxu0 0.0
  %1549 = vmatmul.mubr.f32.gmra.mrb[0].mxu0 %v1431
  %v1550 = vpop.f32.mrb[0].mxu0
  %v1551 = vadd.f32 0.0, %v1550
  %v1552 = vpop.f32.mrb[0].mxu0
  %1553 = vmatprep.mubr.f32.mxu0 0.0
  %1554 = vmatmul.mubr.f32.gmra.mrb[0].mxu0 %v1434
  %v1555 = vpop.f32.mrb[0].mxu0
  %v1556 = vadd.f32 0.0, %v1555
  %v1557 = vpop.f32.mrb[0].mxu0
  %1558 = vmatprep.mubr.f32.mxu0 0.0
  %1559 = vmatmul.mubr.f32.gmra.mrb[0].mxu0 %v1437
  %v1560 = vpop.f32.mrb[0].mxu0
  %v1561 = vadd.f32 0.0, %v1560
  %v1562 = vpop.f32.mrb[0].mxu0
  %1563 = vmatprep.mubr.f32.mxu0 0.0
  %1564 = vmatmul.mubr.f32.gmra.mrb[0].mxu0 %v1440
  %v1565 = vpop.f32.mrb[0].mxu0
  %v1566 = vadd.f32 0.0, %v1565
  %v1567 = vpop.f32.mrb[0].mxu0
  %1568 = vmatprep.mubr.f32.mxu0 0.0
  %1569 = vmatmul.mubr.f32.gmra.mrb[0].mxu0 %v1443
  %v1570 = vpop.f32.mrb[0].mxu0
  %v1571 = vadd.f32 0.0, %v1570
  %v1572 = vpop.f32.mrb[0].mxu0
  %1573 = vmatprep.mubr.f32.mxu0 0.0
  %1574 = vmatmul.mubr.f32.gmra.mrb[0].mxu0 %v1446
  %v1575 = vpop.f32.mrb[0].mxu0
  %v1576 = vadd.f32 0.0, %v1575
  %v1577 = vpop.f32.mrb[0].mxu0
  %1578 = vmatprep.mubr.f32.mxu0 0.0
  %1579 = vmatmul.mubr.f32.gmra.mrb[0].mxu0 %v1449
  %v1580 = vpop.f32.mrb[0].mxu0
  %v1581 = vadd.f32 0.0, %v1580
  %v1582 = vpop.f32.mrb[0].mxu0
  %1583 = vmatprep.mubr.f32.mxu0 0.0
  %1584 = vmatmul.mubr.f32.gmra.mrb[0].mxu0 %v1452
  %v1585 = vpop.f32.mrb[0].mxu0
  %v1586 = vadd.f32 0.0, %v1585
  %v1587 = vpop.f32.mrb[0].mxu0
  %1588 = vmatprep.mubr.f32.mxu0 0.0
  %1589 = vmatmul.mubr.f32.gmra.mrb[0].mxu0 %v1455
  %v1590 = vpop.f32.mrb[0].mxu0
  %v1591 = vadd.f32 0.0, %v1590
  %v1592 = vpop.f32.mrb[0].mxu0
  %1593 = vmatprep.mubr.f32.mxu0 0.0
  %1594 = vmatmul.mubr.f32.gmra.mrb[0].mxu0 %v1458
  %v1595 = vpop.f32.mrb[0].mxu0
  %v1596 = vadd.f32 0.0, %v1595
  %v1597 = vpop.f32.mrb[0].mxu0
  %1598 = vmatprep.mubr.f32.mxu0 0.0
  %1599 = vmatmul.mubr.f32.gmra.mrb[0].mxu0 %v1461
  %v1600 = vpop.f32.mrb[0].mxu0
  %v1601 = vadd.f32 0.0, %v1600
  %v1602 = vpop.f32.mrb[0].mxu0
  %1603 = vmatprep.mubr.f32.mxu0 0.0
  %1604 = vmatmul.mubr.f32.gmra.mrb[0].mxu0 %v1464
  %v1605 = vpop.f32.mrb[0].mxu0
  %v1606 = vadd.f32 0.0, %v1605
  %v1607 = vpop.f32.mrb[0].mxu0
  %1608 = vmatprep.mubr.f32.mxu0 0.0
  %1609 = vmatmul.mubr.f32.gmra.mrb[0].mxu0 %v1467
  %v1610 = vpop.f32.mrb[0].mxu0
  %v1611 = vadd.f32 0.0, %v1610
  %v1612 = vpop.f32.mrb[0].mxu0
  %1613 = vdwg.mxu0
  %v1614 = vadd.f32 %v1379, %v1536
  %v1615 = vadd.f32 %v1380, %v1541
  %v1616 = vadd.f32 %v1381, %v1546
  %v1617 = vadd.f32 %v1382, %v1551
  %v1618 = vadd.f32 %v1383, %v1556
  %v1619 = vadd.f32 %v1384, %v1561
  %v1620 = vadd.f32 %v1385, %v1566
  %v1621 = vadd.f32 %v1386, %v1571
  %v1622 = vadd.f32 %v1387, %v1576
  %v1623 = vadd.f32 %v1388, %v1581
  %v1624 = vadd.f32 %v1389, %v1586
  %v1625 = vadd.f32 %v1390, %v1591
  %v1626 = vadd.f32 %v1391, %v1596
  %v1627 = vadd.f32 %v1392, %v1601
  %v1628 = vadd.f32 %v1393, %v1606
  %v1629 = vadd.f32 %v1394, %v1611
  %s1630 = scalar_lea.vmem %s1, 16
  %v1631 = vld [vmem:[%s1630] sm:$0xff]
  %v1632 = vld [vmem:[%s1630 + $0x10] sm:$0xff]
  %v1633 = vld [vmem:[%s1630 + $0x20] sm:$0xff]
  %v1634 = vld [vmem:[%s1630 + $0x30] sm:$0xff]
  %v1635 = vld [vmem:[%s1630 + $0x40] sm:$0xff]
  %v1636 = vld [vmem:[%s1630 + $0x50] sm:$0xff]
  %v1637 = vld [vmem:[%s1630 + $0x60] sm:$0xff]
  %v1638 = vld [vmem:[%s1630 + $0x70] sm:$0xff]
  %v1639 = vld [vmem:[%s1630 + $0x90] sm:$0xff]
  %v1640 = vld [vmem:[%s1630 + $0xa0] sm:$0xff]
  %v1641 = vld [vmem:[%s1630 + $0xb0] sm:$0xff]
  %v1642 = vld [vmem:[%s1630 + $0xc0] sm:$0xff]
  %v1643 = vld [vmem:[%s1630 + $0xd0] sm:$0xff]
  %v1644 = vld [vmem:[%s1630 + $0xe0] sm:$0xff]
  %v1645 = vld [vmem:[%s1630 + $0xf0] sm:$0xff]
  %v1646 = vld [vmem:[%s1630 + $0x100] sm:$0xff]
  %s1647 = scalar_lea.vmem %s4, 448
  %v1648 = vld [vmem:[%s1647] sm:$0xff]
  %v1649 = vld [vmem:[%s1647 + $0x8] sm:$0xff]
  %v1650 = vld [vmem:[%s1647 + $0x10] sm:$0xff]
  %v1651 = vld [vmem:[%s1647 + $0x18] sm:$0xff]
  %v1652 = vld [vmem:[%s1647 + $0x20] sm:$0xff]
  %v1653 = vld [vmem:[%s1647 + $0x28] sm:$0xff]
  %v1654 = vld [vmem:[%s1647 + $0x30] sm:$0xff]
  %v1655 = vld [vmem:[%s1647 + $0x38] sm:$0xff]
  %v1657 = vsel %vm72, %v1631, 0
  %v1660 = vsel %vm72, %v1632, 0
  %v1663 = vsel %vm72, %v1633, 0
  %v1666 = vsel %vm72, %v1634, 0
  %v1669 = vsel %vm72, %v1635, 0
  %v1672 = vsel %vm72, %v1636, 0
  %v1675 = vsel %vm72, %v1637, 0
  %v1678 = vsel %vm72, %v1638, 0
  %v1681 = vsel %vm72, %v1639, 0
  %v1684 = vsel %vm72, %v1640, 0
  %v1687 = vsel %vm72, %v1641, 0
  %v1690 = vsel %vm72, %v1642, 0
  %v1693 = vsel %vm72, %v1643, 0
  %v1696 = vsel %vm72, %v1644, 0
  %v1699 = vsel %vm72, %v1645, 0
  %v1702 = vsel %vm72, %v1646, 0
  %1704 = vmatprep.subr.mxu0 0.0
  %1705 = vmatpush1.msra.mxu0 %v1648
  %1706 = vmatprep.subr.mxu0 0.0
  %1707 = vmatpush1.msra.mxu0 %v1649
  %1708 = vmatprep.subr.mxu0 0.0
  %1709 = vmatpush1.msra.mxu0 %v1650
  %1710 = vmatprep.subr.mxu0 0.0
  %1711 = vmatpush1.msra.mxu0 %v1651
  %1712 = vmatprep.subr.mxu0 0.0
  %1713 = vmatpush1.msra.mxu0 %v1652
  %1714 = vmatprep.subr.mxu0 0.0
  %1715 = vmatpush1.msra.mxu0 %v1653
  %1716 = vmatprep.subr.mxu0 0.0
  %1717 = vmatpush1.msra.mxu0 %v1654
  %1718 = vmatprep.subr.mxu0 0.0
  %1719 = vmatpush1.msra.mxu0 %v1655
  %1720 = vmatprep.subr.mxu0 0.0
  %1721 = vmatpush1.msra.mxu0 0.0
  %1722 = vmatprep.subr.mxu0 0.0
  %1723 = vmatpush1.msra.mxu0 0.0
  %1724 = vmatprep.subr.mxu0 0.0
  %1725 = vmatpush1.msra.mxu0 0.0
  %1726 = vmatprep.subr.mxu0 0.0
  %1727 = vmatpush1.msra.mxu0 0.0
  %1728 = vmatprep.subr.mxu0 0.0
  %1729 = vmatpush1.msra.mxu0 0.0
  %1730 = vmatprep.subr.mxu0 0.0
  %1731 = vmatpush1.msra.mxu0 0.0
  %1732 = vmatprep.subr.mxu0 0.0
  %1733 = vmatpush1.msra.mxu0 0.0
  %1734 = vmatprep.subr.mxu0 0.0
  %1735 = vmatpush1.msra.mxu0 0.0
  %1736 = vmatprep.subr.mxu0 0.0
  %1737 = vmatpush1.msra.mxu0 0.0
  %1738 = vmatprep.subr.mxu0 0.0
  %1739 = vmatpush1.msra.mxu0 0.0
  %1740 = vmatprep.subr.mxu0 0.0
  %1741 = vmatpush1.msra.mxu0 0.0
  %1742 = vmatprep.subr.mxu0 0.0
  %1743 = vmatpush1.msra.mxu0 0.0
  %1744 = vmatprep.subr.mxu0 0.0
  %1745 = vmatpush1.msra.mxu0 0.0
  %1746 = vmatprep.subr.mxu0 0.0
  %1747 = vmatpush1.msra.mxu0 0.0
  %1748 = vmatprep.subr.mxu0 0.0
  %1749 = vmatpush1.msra.mxu0 0.0
  %1750 = vmatprep.subr.mxu0 0.0
  %1751 = vmatpush1.msra.mxu0 0.0
  %1752 = vmatprep.subr.mxu0 0.0
  %1753 = vmatpush1.msra.mxu0 0.0
  %1754 = vmatprep.subr.mxu0 0.0
  %1755 = vmatpush1.msra.mxu0 0.0
  %1756 = vmatprep.subr.mxu0 0.0
  %1757 = vmatpush1.msra.mxu0 0.0
  %1758 = vmatprep.subr.mxu0 0.0
  %1759 = vmatpush1.msra.mxu0 0.0
  %1760 = vmatprep.subr.mxu0 0.0
  %1761 = vmatpush1.msra.mxu0 0.0
  %1762 = vmatprep.subr.mxu0 0.0
  %1763 = vmatpush1.msra.mxu0 0.0
  %1764 = vmatprep.subr.mxu0 0.0
  %1765 = vmatpush1.msra.mxu0 0.0
  %1766 = vmatprep.subr.mxu0 0.0
  %1767 = vmatpush1.msra.mxu0 0.0
  %1768 = vmatprep.mubr.f32.mxu0 0.0
  %1769 = vmatmul.mubr.f32.gmra.mrb[0].mxu0 %v1657
  %v1770 = vpop.f32.mrb[0].mxu0
  %v1771 = vadd.f32 0.0, %v1770
  %v1772 = vpop.f32.mrb[0].mxu0
  %1773 = vmatprep.mubr.f32.mxu0 0.0
  %1774 = vmatmul.mubr.f32.gmra.mrb[0].mxu0 %v1660
  %v1775 = vpop.f32.mrb[0].mxu0
  %v1776 = vadd.f32 0.0, %v1775
  %v1777 = vpop.f32.mrb[0].mxu0
  %1778 = vmatprep.mubr.f32.mxu0 0.0
  %1779 = vmatmul.mubr.f32.gmra.mrb[0].mxu0 %v1663
  %v1780 = vpop.f32.mrb[0].mxu0
  %v1781 = vadd.f32 0.0, %v1780
  %v1782 = vpop.f32.mrb[0].mxu0
  %1783 = vmatprep.mubr.f32.mxu0 0.0
  %1784 = vmatmul.mubr.f32.gmra.mrb[0].mxu0 %v1666
  %v1785 = vpop.f32.mrb[0].mxu0
  %v1786 = vadd.f32 0.0, %v1785
  %v1787 = vpop.f32.mrb[0].mxu0
  %1788 = vmatprep.mubr.f32.mxu0 0.0
  %1789 = vmatmul.mubr.f32.gmra.mrb[0].mxu0 %v1669
  %v1790 = vpop.f32.mrb[0].mxu0
  %v1791 = vadd.f32 0.0, %v1790
  %v1792 = vpop.f32.mrb[0].mxu0
  %1793 = vmatprep.mubr.f32.mxu0 0.0
  %1794 = vmatmul.mubr.f32.gmra.mrb[0].mxu0 %v1672
  %v1795 = vpop.f32.mrb[0].mxu0
  %v1796 = vadd.f32 0.0, %v1795
  %v1797 = vpop.f32.mrb[0].mxu0
  %1798 = vmatprep.mubr.f32.mxu0 0.0
  %1799 = vmatmul.mubr.f32.gmra.mrb[0].mxu0 %v1675
  %v1800 = vpop.f32.mrb[0].mxu0
  %v1801 = vadd.f32 0.0, %v1800
  %v1802 = vpop.f32.mrb[0].mxu0
  %1803 = vmatprep.mubr.f32.mxu0 0.0
  %1804 = vmatmul.mubr.f32.gmra.mrb[0].mxu0 %v1678
  %v1805 = vpop.f32.mrb[0].mxu0
  %v1806 = vadd.f32 0.0, %v1805
  %v1807 = vpop.f32.mrb[0].mxu0
  %1808 = vmatprep.mubr.f32.mxu0 0.0
  %1809 = vmatmul.mubr.f32.gmra.mrb[0].mxu0 %v1681
  %v1810 = vpop.f32.mrb[0].mxu0
  %v1811 = vadd.f32 0.0, %v1810
  %v1812 = vpop.f32.mrb[0].mxu0
  %1813 = vmatprep.mubr.f32.mxu0 0.0
  %1814 = vmatmul.mubr.f32.gmra.mrb[0].mxu0 %v1684
  %v1815 = vpop.f32.mrb[0].mxu0
  %v1816 = vadd.f32 0.0, %v1815
  %v1817 = vpop.f32.mrb[0].mxu0
  %1818 = vmatprep.mubr.f32.mxu0 0.0
  %1819 = vmatmul.mubr.f32.gmra.mrb[0].mxu0 %v1687
  %v1820 = vpop.f32.mrb[0].mxu0
  %v1821 = vadd.f32 0.0, %v1820
  %v1822 = vpop.f32.mrb[0].mxu0
  %1823 = vmatprep.mubr.f32.mxu0 0.0
  %1824 = vmatmul.mubr.f32.gmra.mrb[0].mxu0 %v1690
  %v1825 = vpop.f32.mrb[0].mxu0
  %v1826 = vadd.f32 0.0, %v1825
  %v1827 = vpop.f32.mrb[0].mxu0
  %1828 = vmatprep.mubr.f32.mxu0 0.0
  %1829 = vmatmul.mubr.f32.gmra.mrb[0].mxu0 %v1693
  %v1830 = vpop.f32.mrb[0].mxu0
  %v1831 = vadd.f32 0.0, %v1830
  %v1832 = vpop.f32.mrb[0].mxu0
  %1833 = vmatprep.mubr.f32.mxu0 0.0
  %1834 = vmatmul.mubr.f32.gmra.mrb[0].mxu0 %v1696
  %v1835 = vpop.f32.mrb[0].mxu0
  %v1836 = vadd.f32 0.0, %v1835
  %v1837 = vpop.f32.mrb[0].mxu0
  %1838 = vmatprep.mubr.f32.mxu0 0.0
  %1839 = vmatmul.mubr.f32.gmra.mrb[0].mxu0 %v1699
  %v1840 = vpop.f32.mrb[0].mxu0
  %v1841 = vadd.f32 0.0, %v1840
  %v1842 = vpop.f32.mrb[0].mxu0
  %1843 = vmatprep.mubr.f32.mxu0 0.0
  %1844 = vmatmul.mubr.f32.gmra.mrb[0].mxu0 %v1702
  %v1845 = vpop.f32.mrb[0].mxu0
  %v1846 = vadd.f32 0.0, %v1845
  %v1847 = vpop.f32.mrb[0].mxu0
  %1848 = vdwg.mxu0
  %v1849 = vadd.f32 %v1614, %v1771
  %v1850 = vadd.f32 %v1615, %v1776
  %v1851 = vadd.f32 %v1616, %v1781
  %v1852 = vadd.f32 %v1617, %v1786
  %v1853 = vadd.f32 %v1618, %v1791
  %v1854 = vadd.f32 %v1619, %v1796
  %v1855 = vadd.f32 %v1620, %v1801
  %v1856 = vadd.f32 %v1621, %v1806
  %v1857 = vadd.f32 %v1622, %v1811
  %v1858 = vadd.f32 %v1623, %v1816
  %v1859 = vadd.f32 %v1624, %v1821
  %v1860 = vadd.f32 %v1625, %v1826
  %v1861 = vadd.f32 %v1626, %v1831
  %v1862 = vadd.f32 %v1627, %v1836
  %v1863 = vadd.f32 %v1628, %v1841
  %v1864 = vadd.f32 %v1629, %v1846
  %v1865 = vld [vmem:[%s1395 + $0x1] sm:$0xff]
  %v1866 = vld [vmem:[%s1395 + $0x11] sm:$0xff]
  %v1867 = vld [vmem:[%s1395 + $0x21] sm:$0xff]
  %v1868 = vld [vmem:[%s1395 + $0x31] sm:$0xff]
  %v1869 = vld [vmem:[%s1395 + $0x41] sm:$0xff]
  %v1870 = vld [vmem:[%s1395 + $0x51] sm:$0xff]
  %v1871 = vld [vmem:[%s1395 + $0x61] sm:$0xff]
  %v1872 = vld [vmem:[%s1395 + $0x71] sm:$0xff]
  %v1873 = vld [vmem:[%s1395 + $0x91] sm:$0xff]
  %v1874 = vld [vmem:[%s1395 + $0xa1] sm:$0xff]
  %v1875 = vld [vmem:[%s1395 + $0xb1] sm:$0xff]
  %v1876 = vld [vmem:[%s1395 + $0xc1] sm:$0xff]
  %v1877 = vld [vmem:[%s1395 + $0xd1] sm:$0xff]
  %v1878 = vld [vmem:[%s1395 + $0xe1] sm:$0xff]
  %v1879 = vld [vmem:[%s1395 + $0xf1] sm:$0xff]
  %v1880 = vld [vmem:[%s1395 + $0x101] sm:$0xff]
  %s1881 = scalar_lea.vmem %s4, 512
  %v1882 = vld [vmem:[%s1881] sm:$0xff]
  %v1883 = vld [vmem:[%s1881 + $0x8] sm:$0xff]
  %v1884 = vld [vmem:[%s1881 + $0x10] sm:$0xff]
  %v1885 = vld [vmem:[%s1881 + $0x18] sm:$0xff]
  %v1886 = vld [vmem:[%s1881 + $0x20] sm:$0xff]
  %v1887 = vld [vmem:[%s1881 + $0x28] sm:$0xff]
  %v1888 = vld [vmem:[%s1881 + $0x30] sm:$0xff]
  %v1889 = vld [vmem:[%s1881 + $0x38] sm:$0xff]
  %v1891 = vsel %vm72, %v1865, 0
  %v1894 = vsel %vm72, %v1866, 0
  %v1897 = vsel %vm72, %v1867, 0
  %v1900 = vsel %vm72, %v1868, 0
  %v1903 = vsel %vm72, %v1869, 0
  %v1906 = vsel %vm72, %v1870, 0
  %v1909 = vsel %vm72, %v1871, 0
  %v1912 = vsel %vm72, %v1872, 0
  %v1915 = vsel %vm72, %v1873, 0
  %v1918 = vsel %vm72, %v1874, 0
  %v1921 = vsel %vm72, %v1875, 0
  %v1924 = vsel %vm72, %v1876, 0
  %v1927 = vsel %vm72, %v1877, 0
  %v1930 = vsel %vm72, %v1878, 0
  %v1933 = vsel %vm72, %v1879, 0
  %v1936 = vsel %vm72, %v1880, 0
  %1938 = vmatprep.subr.mxu0 0.0
  %1939 = vmatpush1.msra.mxu0 %v1882
  %1940 = vmatprep.subr.mxu0 0.0
  %1941 = vmatpush1.msra.mxu0 %v1883
  %1942 = vmatprep.subr.mxu0 0.0
  %1943 = vmatpush1.msra.mxu0 %v1884
  %1944 = vmatprep.subr.mxu0 0.0
  %1945 = vmatpush1.msra.mxu0 %v1885
  %1946 = vmatprep.subr.mxu0 0.0
  %1947 = vmatpush1.msra.mxu0 %v1886
  %1948 = vmatprep.subr.mxu0 0.0
  %1949 = vmatpush1.msra.mxu0 %v1887
  %1950 = vmatprep.subr.mxu0 0.0
  %1951 = vmatpush1.msra.mxu0 %v1888
  %1952 = vmatprep.subr.mxu0 0.0
  %1953 = vmatpush1.msra.mxu0 %v1889
  %1954 = vmatprep.subr.mxu0 0.0
  %1955 = vmatpush1.msra.mxu0 0.0
  %1956 = vmatprep.subr.mxu0 0.0
  %1957 = vmatpush1.msra.mxu0 0.0
  %1958 = vmatprep.subr.mxu0 0.0
  %1959 = vmatpush1.msra.mxu0 0.0
  %1960 = vmatprep.subr.mxu0 0.0
  %1961 = vmatpush1.msra.mxu0 0.0
  %1962 = vmatprep.subr.mxu0 0.0
  %1963 = vmatpush1.msra.mxu0 0.0
  %1964 = vmatprep.subr.mxu0 0.0
  %1965 = vmatpush1.msra.mxu0 0.0
  %1966 = vmatprep.subr.mxu0 0.0
  %1967 = vmatpush1.msra.mxu0 0.0
  %1968 = vmatprep.subr.mxu0 0.0
  %1969 = vmatpush1.msra.mxu0 0.0
  %1970 = vmatprep.subr.mxu0 0.0
  %1971 = vmatpush1.msra.mxu0 0.0
  %1972 = vmatprep.subr.mxu0 0.0
  %1973 = vmatpush1.msra.mxu0 0.0
  %1974 = vmatprep.subr.mxu0 0.0
  %1975 = vmatpush1.msra.mxu0 0.0
  %1976 = vmatprep.subr.mxu0 0.0
  %1977 = vmatpush1.msra.mxu0 0.0
  %1978 = vmatprep.subr.mxu0 0.0
  %1979 = vmatpush1.msra.mxu0 0.0
  %1980 = vmatprep.subr.mxu0 0.0
  %1981 = vmatpush1.msra.mxu0 0.0
  %1982 = vmatprep.subr.mxu0 0.0
  %1983 = vmatpush1.msra.mxu0 0.0
  %1984 = vmatprep.subr.mxu0 0.0
  %1985 = vmatpush1.msra.mxu0 0.0
  %1986 = vmatprep.subr.mxu0 0.0
  %1987 = vmatpush1.msra.mxu0 0.0
  %1988 = vmatprep.subr.mxu0 0.0
  %1989 = vmatpush1.msra.mxu0 0.0
  %1990 = vmatprep.subr.mxu0 0.0
  %1991 = vmatpush1.msra.mxu0 0.0
  %1992 = vmatprep.subr.mxu0 0.0
  %1993 = vmatpush1.msra.mxu0 0.0
  %1994 = vmatprep.subr.mxu0 0.0
  %1995 = vmatpush1.msra.mxu0 0.0
  %1996 = vmatprep.subr.mxu0 0.0
  %1997 = vmatpush1.msra.mxu0 0.0
  %1998 = vmatprep.subr.mxu0 0.0
  %1999 = vmatpush1.msra.mxu0 0.0
  %2000 = vmatprep.subr.mxu0 0.0
  %2001 = vmatpush1.msra.mxu0 0.0
  %2002 = vmatprep.mubr.f32.mxu0 0.0
  %2003 = vmatmul.mubr.f32.gmra.mrb[0].mxu0 %v1891
  %v2004 = vpop.f32.mrb[0].mxu0
  %v2005 = vadd.f32 0.0, %v2004
  %v2006 = vpop.f32.mrb[0].mxu0
  %2007 = vmatprep.mubr.f32.mxu0 0.0
  %2008 = vmatmul.mubr.f32.gmra.mrb[0].mxu0 %v1894
  %v2009 = vpop.f32.mrb[0].mxu0
  %v2010 = vadd.f32 0.0, %v2009
  %v2011 = vpop.f32.mrb[0].mxu0
  %2012 = vmatprep.mubr.f32.mxu0 0.0
  %2013 = vmatmul.mubr.f32.gmra.mrb[0].mxu0 %v1897
  %v2014 = vpop.f32.mrb[0].mxu0
  %v2015 = vadd.f32 0.0, %v2014
  %v2016 = vpop.f32.mrb[0].mxu0
  %2017 = vmatprep.mubr.f32.mxu0 0.0
  %2018 = vmatmul.mubr.f32.gmra.mrb[0].mxu0 %v1900
  %v2019 = vpop.f32.mrb[0].mxu0
  %v2020 = vadd.f32 0.0, %v2019
  %v2021 = vpop.f32.mrb[0].mxu0
  %2022 = vmatprep.mubr.f32.mxu0 0.0
  %2023 = vmatmul.mubr.f32.gmra.mrb[0].mxu0 %v1903
  %v2024 = vpop.f32.mrb[0].mxu0
  %v2025 = vadd.f32 0.0, %v2024
  %v2026 = vpop.f32.mrb[0].mxu0
  %2027 = vmatprep.mubr.f32.mxu0 0.0
  %2028 = vmatmul.mubr.f32.gmra.mrb[0].mxu0 %v1906
  %v2029 = vpop.f32.mrb[0].mxu0
  %v2030 = vadd.f32 0.0, %v2029
  %v2031 = vpop.f32.mrb[0].mxu0
  %2032 = vmatprep.mubr.f32.mxu0 0.0
  %2033 = vmatmul.mubr.f32.gmra.mrb[0].mxu0 %v1909
  %v2034 = vpop.f32.mrb[0].mxu0
  %v2035 = vadd.f32 0.0, %v2034
  %v2036 = vpop.f32.mrb[0].mxu0
  %2037 = vmatprep.mubr.f32.mxu0 0.0
  %2038 = vmatmul.mubr.f32.gmra.mrb[0].mxu0 %v1912
  %v2039 = vpop.f32.mrb[0].mxu0
  %v2040 = vadd.f32 0.0, %v2039
  %v2041 = vpop.f32.mrb[0].mxu0
  %2042 = vmatprep.mubr.f32.mxu0 0.0
  %2043 = vmatmul.mubr.f32.gmra.mrb[0].mxu0 %v1915
  %v2044 = vpop.f32.mrb[0].mxu0
  %v2045 = vadd.f32 0.0, %v2044
  %v2046 = vpop.f32.mrb[0].mxu0
  %2047 = vmatprep.mubr.f32.mxu0 0.0
  %2048 = vmatmul.mubr.f32.gmra.mrb[0].mxu0 %v1918
  %v2049 = vpop.f32.mrb[0].mxu0
  %v2050 = vadd.f32 0.0, %v2049
  %v2051 = vpop.f32.mrb[0].mxu0
  %2052 = vmatprep.mubr.f32.mxu0 0.0
  %2053 = vmatmul.mubr.f32.gmra.mrb[0].mxu0 %v1921
  %v2054 = vpop.f32.mrb[0].mxu0
  %v2055 = vadd.f32 0.0, %v2054
  %v2056 = vpop.f32.mrb[0].mxu0
  %2057 = vmatprep.mubr.f32.mxu0 0.0
  %2058 = vmatmul.mubr.f32.gmra.mrb[0].mxu0 %v1924
  %v2059 = vpop.f32.mrb[0].mxu0
  %v2060 = vadd.f32 0.0, %v2059
  %v2061 = vpop.f32.mrb[0].mxu0
  %2062 = vmatprep.mubr.f32.mxu0 0.0
  %2063 = vmatmul.mubr.f32.gmra.mrb[0].mxu0 %v1927
  %v2064 = vpop.f32.mrb[0].mxu0
  %v2065 = vadd.f32 0.0, %v2064
  %v2066 = vpop.f32.mrb[0].mxu0
  %2067 = vmatprep.mubr.f32.mxu0 0.0
  %2068 = vmatmul.mubr.f32.gmra.mrb[0].mxu0 %v1930
  %v2069 = vpop.f32.mrb[0].mxu0
  %v2070 = vadd.f32 0.0, %v2069
  %v2071 = vpop.f32.mrb[0].mxu0
  %2072 = vmatprep.mubr.f32.mxu0 0.0
  %2073 = vmatmul.mubr.f32.gmra.mrb[0].mxu0 %v1933
  %v2074 = vpop.f32.mrb[0].mxu0
  %v2075 = vadd.f32 0.0, %v2074
  %v2076 = vpop.f32.mrb[0].mxu0
  %2077 = vmatprep.mubr.f32.mxu0 0.0
  %2078 = vmatmul.mubr.f32.gmra.mrb[0].mxu0 %v1936
  %v2079 = vpop.f32.mrb[0].mxu0
  %v2080 = vadd.f32 0.0, %v2079
  %v2081 = vpop.f32.mrb[0].mxu0
  %2082 = vdwg.mxu0
  %v2083 = vadd.f32 %v1849, %v2005
  %v2084 = vadd.f32 %v1850, %v2010
  %v2085 = vadd.f32 %v1851, %v2015
  %v2086 = vadd.f32 %v1852, %v2020
  %v2087 = vadd.f32 %v1853, %v2025
  %v2088 = vadd.f32 %v1854, %v2030
  %v2089 = vadd.f32 %v1855, %v2035
  %v2090 = vadd.f32 %v1856, %v2040
  %v2091 = vadd.f32 %v1857, %v2045
  %v2092 = vadd.f32 %v1858, %v2050
  %v2093 = vadd.f32 %v1859, %v2055
  %v2094 = vadd.f32 %v1860, %v2060
  %v2095 = vadd.f32 %v1861, %v2065
  %v2096 = vadd.f32 %v1862, %v2070
  %v2097 = vadd.f32 %v1863, %v2075
  %v2098 = vadd.f32 %v1864, %v2080
  %v2099 = vmax.f32 %v2083, %v2084
  %v2100 = vmax.f32 %v2085, %v2086
  %v2101 = vmax.f32 %v2087, %v2088
  %v2102 = vmax.f32 %v2089, %v2090
  %v2103 = vmax.f32 %v2091, %v2092
  %v2104 = vmax.f32 %v2093, %v2094
  %v2105 = vmax.f32 %v2095, %v2096
  %v2106 = vmax.f32 %v2097, %v2098
  %2107 = vst [vmem:[#allocation2] sm:$0xff] %v2099
  %2108 = vst [vmem:[#allocation2 + $0x8] sm:$0xff] %v2100
  %2109 = vst [vmem:[#allocation2 + $0x10] sm:$0xff] %v2101
  %2110 = vst [vmem:[#allocation2 + $0x18] sm:$0xff] %v2102
  %2111 = vst [vmem:[#allocation2 + $0x20] sm:$0xff] %v2103
  %2112 = vst [vmem:[#allocation2 + $0x28] sm:$0xff] %v2104
  %2113 = vst [vmem:[#allocation2 + $0x30] sm:$0xff] %v2105
  %2114 = vst [vmem:[#allocation2 + $0x38] sm:$0xff] %v2106
  %v2115 = vld [vmem:[%s5] sm:$0x1]
  %v2116 = vld [vmem:[#allocation2] sm:$0x1]
  %v2117 = vld [vmem:[#allocation2 + $0x8] sm:$0x1]
  %v2118 = vld [vmem:[#allocation2 + $0x10] sm:$0x1]
  %v2119 = vld [vmem:[#allocation2 + $0x18] sm:$0x1]
  %v2120 = vld [vmem:[#allocation2 + $0x20] sm:$0x1]
  %v2121 = vld [vmem:[#allocation2 + $0x28] sm:$0x1]
  %v2122 = vld [vmem:[#allocation2 + $0x30] sm:$0x1]
  %v2123 = vld [vmem:[#allocation2 + $0x38] sm:$0x1]
  %v2124 = vld [vmem:[#allocation2 + $0x1] sm:$0x1]
  %v2125 = vld [vmem:[#allocation2 + $0x9] sm:$0x1]
  %v2126 = vld [vmem:[#allocation2 + $0x11] sm:$0x1]
  %v2127 = vld [vmem:[#allocation2 + $0x19] sm:$0x1]
  %v2128 = vld [vmem:[#allocation2 + $0x21] sm:$0x1]
  %v2129 = vld [vmem:[#allocation2 + $0x29] sm:$0x1]
  %v2130 = vld [vmem:[#allocation2 + $0x31] sm:$0x1]
  %v2131 = vld [vmem:[#allocation2 + $0x39] sm:$0x1]
  %v2132 = vmax.f32 %v2116, %v2124
  %v2133 = vmax.f32 %v2117, %v2125
  %v2134 = vmax.f32 %v2118, %v2126
  %v2135 = vmax.f32 %v2119, %v2127
  %v2136 = vmax.f32 %v2120, %v2128
  %v2137 = vmax.f32 %v2121, %v2129
  %v2138 = vmax.f32 %v2122, %v2130
  %v2139 = vmax.f32 %v2123, %v2131
  %v2141 = vlaneseq
  %v2142 = vshrl.u32 %v2141, 7
  %v2143 = vsub.s32 0, %v2142
  %v2144 = vrot.slane %v2115, %v2143
  %v2146 = vadd.f32 %v2132, %v2144
  %v2147 = vadd.f32 %v2133, %v2144
  %v2148 = vadd.f32 %v2134, %v2144
  %v2149 = vadd.f32 %v2135, %v2144
  %v2150 = vadd.f32 %v2136, %v2144
  %v2151 = vadd.f32 %v2137, %v2144
  %v2152 = vadd.f32 %v2138, %v2144
  %v2153 = vadd.f32 %v2139, %v2144
  %vm2154 = vcmp.ge.f32.partialorder %v2146, 0.0
  %vm2155 = vcmp.ge.f32.partialorder %v2147, 0.0
  %vm2156 = vcmp.ge.f32.partialorder %v2148, 0.0
  %vm2157 = vcmp.ge.f32.partialorder %v2149, 0.0
  %vm2158 = vcmp.ge.f32.partialorder %v2150, 0.0
  %vm2159 = vcmp.ge.f32.partialorder %v2151, 0.0
  %vm2160 = vcmp.ge.f32.partialorder %v2152, 0.0
  %vm2161 = vcmp.ge.f32.partialorder %v2153, 0.0
  %v2162 = vmul.f32 %v2146, 0.2
  %v2163 = vmul.f32 %v2147, 0.2
  %v2164 = vmul.f32 %v2148, 0.2
  %v2165 = vmul.f32 %v2149, 0.2
  %v2166 = vmul.f32 %v2150, 0.2
  %v2167 = vmul.f32 %v2151, 0.2
  %v2168 = vmul.f32 %v2152, 0.2
  %v2169 = vmul.f32 %v2153, 0.2
  %v2170 = vsel %vm2154, %v2146, %v2162
  %v2171 = vsel %vm2155, %v2147, %v2163
  %v2172 = vsel %vm2156, %v2148, %v2164
  %v2173 = vsel %vm2157, %v2149, %v2165
  %v2174 = vsel %vm2158, %v2150, %v2166
  %v2175 = vsel %vm2159, %v2151, %v2167
  %v2176 = vsel %vm2160, %v2152, %v2168
  %v2177 = vsel %vm2161, %v2153, %v2169
  %v2186 = vrot.slane %v2171, 7
  %vm2187 = vcmask 1041409
  %v2188 = vsel %vm2187, %v2186, %v2170
  %v2189 = vrot.slane %v2172, 6
  %vm2190 = vcmask 1042434
  %v2191 = vsel %vm2190, %v2189, %v2188
  %v2192 = vrot.slane %v2173, 5
  %vm2193 = vcmask 1043459
  %v2194 = vsel %vm2193, %v2192, %v2191
  %v2195 = vrot.slane %v2175, 7
  %v2196 = vsel %vm2187, %v2195, %v2174
  %v2197 = vrot.slane %v2176, 6
  %v2198 = vsel %vm2190, %v2197, %v2196
  %v2199 = vrot.slane %v2177, 5
  %v2200 = vsel %vm2193, %v2199, %v2198
  %2203 = vst [vmem:[%s6] sm:$0xf] %v2194
  %2204 = vst [vmem:[%s6 + $0x10] sm:$0xf] %v2200
  %v2205 = vld [vmem:[#allocation2 + $0x2] sm:$0x1]
  %v2206 = vld [vmem:[#allocation2 + $0xa] sm:$0x1]
  %v2207 = vld [vmem:[#allocation2 + $0x12] sm:$0x1]
  %v2208 = vld [vmem:[#allocation2 + $0x1a] sm:$0x1]
  %v2209 = vld [vmem:[#allocation2 + $0x22] sm:$0x1]
  %v2210 = vld [vmem:[#allocation2 + $0x2a] sm:$0x1]
  %v2211 = vld [vmem:[#allocation2 + $0x32] sm:$0x1]
  %v2212 = vld [vmem:[#allocation2 + $0x3a] sm:$0x1]
  %v2213 = vld [vmem:[#allocation2 + $0x3] sm:$0x1]
  %v2214 = vld [vmem:[#allocation2 + $0xb] sm:$0x1]
  %v2215 = vld [vmem:[#allocation2 + $0x13] sm:$0x1]
  %v2216 = vld [vmem:[#allocation2 + $0x1b] sm:$0x1]
  %v2217 = vld [vmem:[#allocation2 + $0x23] sm:$0x1]
  %v2218 = vld [vmem:[#allocation2 + $0x2b] sm:$0x1]
  %v2219 = vld [vmem:[#allocation2 + $0x33] sm:$0x1]
  %v2220 = vld [vmem:[#allocation2 + $0x3b] sm:$0x1]
  %v2221 = vmax.f32 %v2205, %v2213
  %v2222 = vmax.f32 %v2206, %v2214
  %v2223 = vmax.f32 %v2207, %v2215
  %v2224 = vmax.f32 %v2208, %v2216
  %v2225 = vmax.f32 %v2209, %v2217
  %v2226 = vmax.f32 %v2210, %v2218
  %v2227 = vmax.f32 %v2211, %v2219
  %v2228 = vmax.f32 %v2212, %v2220
  %v2229 = vadd.f32 %v2221, %v2144
  %v2230 = vadd.f32 %v2222, %v2144
  %v2231 = vadd.f32 %v2223, %v2144
  %v2232 = vadd.f32 %v2224, %v2144
  %v2233 = vadd.f32 %v2225, %v2144
  %v2234 = vadd.f32 %v2226, %v2144
  %v2235 = vadd.f32 %v2227, %v2144
  %v2236 = vadd.f32 %v2228, %v2144
  %vm2237 = vcmp.ge.f32.partialorder %v2229, 0.0
  %vm2238 = vcmp.ge.f32.partialorder %v2230, 0.0
  %vm2239 = vcmp.ge.f32.partialorder %v2231, 0.0
  %vm2240 = vcmp.ge.f32.partialorder %v2232, 0.0
  %vm2241 = vcmp.ge.f32.partialorder %v2233, 0.0
  %vm2242 = vcmp.ge.f32.partialorder %v2234, 0.0
  %vm2243 = vcmp.ge.f32.partialorder %v2235, 0.0
  %vm2244 = vcmp.ge.f32.partialorder %v2236, 0.0
  %v2245 = vmul.f32 %v2229, 0.2
  %v2246 = vmul.f32 %v2230, 0.2
  %v2247 = vmul.f32 %v2231, 0.2
  %v2248 = vmul.f32 %v2232, 0.2
  %v2249 = vmul.f32 %v2233, 0.2
  %v2250 = vmul.f32 %v2234, 0.2
  %v2251 = vmul.f32 %v2235, 0.2
  %v2252 = vmul.f32 %v2236, 0.2
  %v2253 = vsel %vm2237, %v2229, %v2245
  %v2254 = vsel %vm2238, %v2230, %v2246
  %v2255 = vsel %vm2239, %v2231, %v2247
  %v2256 = vsel %vm2240, %v2232, %v2248
  %v2257 = vsel %vm2241, %v2233, %v2249
  %v2258 = vsel %vm2242, %v2234, %v2250
  %v2259 = vsel %vm2243, %v2235, %v2251
  %v2260 = vsel %vm2244, %v2236, %v2252
  %v2269 = vrot.slane %v2254, 7
  %v2270 = vsel %vm2187, %v2269, %v2253
  %v2271 = vrot.slane %v2255, 6
  %v2272 = vsel %vm2190, %v2271, %v2270
  %v2273 = vrot.slane %v2256, 5
  %v2274 = vsel %vm2193, %v2273, %v2272
  %v2275 = vrot.slane %v2258, 7
  %v2276 = vsel %vm2187, %v2275, %v2257
  %v2277 = vrot.slane %v2259, 6
  %v2278 = vsel %vm2190, %v2277, %v2276
  %v2279 = vrot.slane %v2260, 5
  %v2280 = vsel %vm2193, %v2279, %v2278
  %s2283 = scalar_lea.vmem %s6, 4
  %2284 = vst [vmem:[%s2283] sm:$0xf] %v2274
  %2285 = vst [vmem:[%s2283 + $0x10] sm:$0xf] %v2280
  %v2286 = vld [vmem:[#allocation2 + $0x4] sm:$0x1]
  %v2287 = vld [vmem:[#allocation2 + $0xc] sm:$0x1]
  %v2288 = vld [vmem:[#allocation2 + $0x14] sm:$0x1]
  %v2289 = vld [vmem:[#allocation2 + $0x1c] sm:$0x1]
  %v2290 = vld [vmem:[#allocation2 + $0x24] sm:$0x1]
  %v2291 = vld [vmem:[#allocation2 + $0x2c] sm:$0x1]
  %v2292 = vld [vmem:[#allocation2 + $0x34] sm:$0x1]
  %v2293 = vld [vmem:[#allocation2 + $0x3c] sm:$0x1]
  %v2294 = vld [vmem:[#allocation2 + $0x5] sm:$0x1]
  %v2295 = vld [vmem:[#allocation2 + $0xd] sm:$0x1]
  %v2296 = vld [vmem:[#allocation2 + $0x15] sm:$0x1]
  %v2297 = vld [vmem:[#allocation2 + $0x1d] sm:$0x1]
  %v2298 = vld [vmem:[#allocation2 + $0x25] sm:$0x1]
  %v2299 = vld [vmem:[#allocation2 + $0x2d] sm:$0x1]
  %v2300 = vld [vmem:[#allocation2 + $0x35] sm:$0x1]
  %v2301 = vld [vmem:[#allocation2 + $0x3d] sm:$0x1]
  %v2302 = vmax.f32 %v2286, %v2294
  %v2303 = vmax.f32 %v2287, %v2295
  %v2304 = vmax.f32 %v2288, %v2296
  %v2305 = vmax.f32 %v2289, %v2297
  %v2306 = vmax.f32 %v2290, %v2298
  %v2307 = vmax.f32 %v2291, %v2299
  %v2308 = vmax.f32 %v2292, %v2300
  %v2309 = vmax.f32 %v2293, %v2301
  %v2310 = vadd.f32 %v2302, %v2144
  %v2311 = vadd.f32 %v2303, %v2144
  %v2312 = vadd.f32 %v2304, %v2144
  %v2313 = vadd.f32 %v2305, %v2144
  %v2314 = vadd.f32 %v2306, %v2144
  %v2315 = vadd.f32 %v2307, %v2144
  %v2316 = vadd.f32 %v2308, %v2144
  %v2317 = vadd.f32 %v2309, %v2144
  %vm2318 = vcmp.ge.f32.partialorder %v2310, 0.0
  %vm2319 = vcmp.ge.f32.partialorder %v2311, 0.0
  %vm2320 = vcmp.ge.f32.partialorder %v2312, 0.0
  %vm2321 = vcmp.ge.f32.partialorder %v2313, 0.0
  %vm2322 = vcmp.ge.f32.partialorder %v2314, 0.0
  %vm2323 = vcmp.ge.f32.partialorder %v2315, 0.0
  %vm2324 = vcmp.ge.f32.partialorder %v2316, 0.0
  %vm2325 = vcmp.ge.f32.partialorder %v2317, 0.0
  %v2326 = vmul.f32 %v2310, 0.2
  %v2327 = vmul.f32 %v2311, 0.2
  %v2328 = vmul.f32 %v2312, 0.2
  %v2329 = vmul.f32 %v2313, 0.2
  %v2330 = vmul.f32 %v2314, 0.2
  %v2331 = vmul.f32 %v2315, 0.2
  %v2332 = vmul.f32 %v2316, 0.2
  %v2333 = vmul.f32 %v2317, 0.2
  %v2334 = vsel %vm2318, %v2310, %v2326
  %v2335 = vsel %vm2319, %v2311, %v2327
  %v2336 = vsel %vm2320, %v2312, %v2328
  %v2337 = vsel %vm2321, %v2313, %v2329
  %v2338 = vsel %vm2322, %v2314, %v2330
  %v2339 = vsel %vm2323, %v2315, %v2331
  %v2340 = vsel %vm2324, %v2316, %v2332
  %v2341 = vsel %vm2325, %v2317, %v2333
  %v2350 = vrot.slane %v2335, 7
  %v2351 = vsel %vm2187, %v2350, %v2334
  %v2352 = vrot.slane %v2336, 6
  %v2353 = vsel %vm2190, %v2352, %v2351
  %v2354 = vrot.slane %v2337, 5
  %v2355 = vsel %vm2193, %v2354, %v2353
  %v2356 = vrot.slane %v2339, 7
  %v2357 = vsel %vm2187, %v2356, %v2338
  %v2358 = vrot.slane %v2340, 6
  %v2359 = vsel %vm2190, %v2358, %v2357
  %v2360 = vrot.slane %v2341, 5
  %v2361 = vsel %vm2193, %v2360, %v2359
  %s2364 = scalar_lea.vmem %s6, 8
  %2365 = vst [vmem:[%s2364] sm:$0xf] %v2355
  %2366 = vst [vmem:[%s2364 + $0x10] sm:$0xf] %v2361
  %v2367 = vld [vmem:[#allocation2 + $0x6] sm:$0x1]
  %v2368 = vld [vmem:[#allocation2 + $0xe] sm:$0x1]
  %v2369 = vld [vmem:[#allocation2 + $0x16] sm:$0x1]
  %v2370 = vld [vmem:[#allocation2 + $0x1e] sm:$0x1]
  %v2371 = vld [vmem:[#allocation2 + $0x26] sm:$0x1]
  %v2372 = vld [vmem:[#allocation2 + $0x2e] sm:$0x1]
  %v2373 = vld [vmem:[#allocation2 + $0x36] sm:$0x1]
  %v2374 = vld [vmem:[#allocation2 + $0x3e] sm:$0x1]
  %v2375 = vld [vmem:[#allocation2 + $0x7] sm:$0x1]
  %v2376 = vld [vmem:[#allocation2 + $0xf] sm:$0x1]
  %v2377 = vld [vmem:[#allocation2 + $0x17] sm:$0x1]
  %v2378 = vld [vmem:[#allocation2 + $0x1f] sm:$0x1]
  %v2379 = vld [vmem:[#allocation2 + $0x27] sm:$0x1]
  %v2380 = vld [vmem:[#allocation2 + $0x2f] sm:$0x1]
  %v2381 = vld [vmem:[#allocation2 + $0x37] sm:$0x1]
  %v2382 = vld [vmem:[#allocation2 + $0x3f] sm:$0x1]
  %v2383 = vmax.f32 %v2367, %v2375
  %v2384 = vmax.f32 %v2368, %v2376
  %v2385 = vmax.f32 %v2369, %v2377
  %v2386 = vmax.f32 %v2370, %v2378
  %v2387 = vmax.f32 %v2371, %v2379
  %v2388 = vmax.f32 %v2372, %v2380
  %v2389 = vmax.f32 %v2373, %v2381
  %v2390 = vmax.f32 %v2374, %v2382
  %v2391 = vadd.f32 %v2383, %v2144
  %v2392 = vadd.f32 %v2384, %v2144
  %v2393 = vadd.f32 %v2385, %v2144
  %v2394 = vadd.f32 %v2386, %v2144
  %v2395 = vadd.f32 %v2387, %v2144
  %v2396 = vadd.f32 %v2388, %v2144
  %v2397 = vadd.f32 %v2389, %v2144
  %v2398 = vadd.f32 %v2390, %v2144
  %vm2399 = vcmp.ge.f32.partialorder %v2391, 0.0
  %vm2400 = vcmp.ge.f32.partialorder %v2392, 0.0
  %vm2401 = vcmp.ge.f32.partialorder %v2393, 0.0
  %vm2402 = vcmp.ge.f32.partialorder %v2394, 0.0
  %vm2403 = vcmp.ge.f32.partialorder %v2395, 0.0
  %vm2404 = vcmp.ge.f32.partialorder %v2396, 0.0
  %vm2405 = vcmp.ge.f32.partialorder %v2397, 0.0
  %vm2406 = vcmp.ge.f32.partialorder %v2398, 0.0
  %v2407 = vmul.f32 %v2391, 0.2
  %v2408 = vmul.f32 %v2392, 0.2
  %v2409 = vmul.f32 %v2393, 0.2
  %v2410 = vmul.f32 %v2394, 0.2
  %v2411 = vmul.f32 %v2395, 0.2
  %v2412 = vmul.f32 %v2396, 0.2
  %v2413 = vmul.f32 %v2397, 0.2
  %v2414 = vmul.f32 %v2398, 0.2
  %v2415 = vsel %vm2399, %v2391, %v2407
  %v2416 = vsel %vm2400, %v2392, %v2408
  %v2417 = vsel %vm2401, %v2393, %v2409
  %v2418 = vsel %vm2402, %v2394, %v2410
  %v2419 = vsel %vm2403, %v2395, %v2411
  %v2420 = vsel %vm2404, %v2396, %v2412
  %v2421 = vsel %vm2405, %v2397, %v2413
  %v2422 = vsel %vm2406, %v2398, %v2414
  %v2431 = vrot.slane %v2416, 7
  %v2432 = vsel %vm2187, %v2431, %v2415
  %v2433 = vrot.slane %v2417, 6
  %v2434 = vsel %vm2190, %v2433, %v2432
  %v2435 = vrot.slane %v2418, 5
  %v2436 = vsel %vm2193, %v2435, %v2434
  %v2437 = vrot.slane %v2420, 7
  %v2438 = vsel %vm2187, %v2437, %v2419
  %v2439 = vrot.slane %v2421, 6
  %v2440 = vsel %vm2190, %v2439, %v2438
  %v2441 = vrot.slane %v2422, 5
  %v2442 = vsel %vm2193, %v2441, %v2440
  %s2445 = scalar_lea.vmem %s6, 12
  %2446 = vst [vmem:[%s2445] sm:$0xf] %v2436
  %2447 = vst [vmem:[%s2445 + $0x10] sm:$0xf] %v2442
  // Predicated region
  $region26: #{simple_cnn_forward.4} parent=0 // pred_check
    _
  $region27: #{simple_cnn_forward.4} parent=0 // pred_check_branch
    %2449 = sbr.rel (0) target = $region29
  $region28: #{simple_cnn_forward.4} parent=0 // pred_region
    _
  $region29: #{simple_cnn_forward.4} parent=0 // pred_fallthru
    _
  // Predicated region
  $region30: #{simple_cnn_forward.4} parent=0 // pred_check
    _
  $region31: #{simple_cnn_forward.4} parent=0 // pred_check_branch
    %2451 = sbr.rel (0) target = $region33
  $region32: #{simple_cnn_forward.4} parent=0 // pred_region
    _
  $region33: #{simple_cnn_forward.4} parent=0 // pred_fallthru
    _

</llo_original>
